<compile_context>
chip_gen: v6e
topology: v6e:2x2x1
jax: 0.10.0
libtpu: 0.0.40
codegen_flags: <defaults>
</compile_context>

<pallas_src>
import jax
import jax.numpy as jnp
from jax.experimental import pallas as pl
from jax.experimental.pallas import tpu as pltpu

# ----------------------------- configuration ---------------------------------
NUM_EMB = 32            # num_emb
NUM_LAYERS = 2          # num_layers (module default is 3; kept small)
NUM_HEADS = 2           # num_heads
NUM_OBJECTIVES = 2      # num_objectives
NUM_NODE_DIM = 8        # env_ctx.num_node_dim
NUM_EDGE_DIM = 4        # env_ctx.num_edge_dim
NUM_COND_DIM = 8        # env_ctx.num_cond_dim (last NUM_OBJECTIVES cols = preference weights)
NUM_NEW_NODE_VALUES = 5         # env_ctx.num_new_node_values
NUM_EDGE_ATTR_LOGITS = 6        # env_ctx.num_edge_attr_logits (even)
MASK_VALUE = -10.0              # self.mask_value
LEAKY_SLOPE = 0.01              # nn.LeakyReLU default

F32 = jnp.float32
VMEM = pl.BlockSpec(memory_space=pltpu.MemorySpace.VMEM)


def _pcall(kernel, out_shape, *args):
    """Grid-less pallas_call: every operand is one full VMEM block (tiny shapes).
    # TODO(synk): at production node/edge counts add a row grid with
    # dimension_semantics=("parallel",) (v7x has 2 TensorCores) and re-budget VMEM."""
    multi = isinstance(out_shape, (tuple, list))
    out_specs = tuple(VMEM for _ in out_shape) if multi else VMEM
    return pl.pallas_call(
        kernel,
        out_shape=tuple(out_shape) if multi else out_shape,
        in_specs=[VMEM] * len(args),
        out_specs=out_specs,
    )(*args)


# ----------------------------- Pallas kernels ---------------------------------
def _leaky(y):
    return jnp.where(y > 0, y, LEAKY_SLOPE * y)


def _mlp3_kernel(x_ref, w1_ref, b1_ref, w2_ref, b2_ref, w3_ref, b3_ref, o_ref):
    """gflownet mlp(i, E, E, 2): Linear/LeakyReLU/Linear/LeakyReLU/Linear, fused."""
    h = _leaky(jnp.dot(x_ref[...], w1_ref[...], preferred_element_type=F32) + b1_ref[...])
    h = _leaky(jnp.dot(h, w2_ref[...], preferred_element_type=F32) + b2_ref[...])
    o_ref[...] = jnp.dot(h, w3_ref[...], preferred_element_type=F32) + b3_ref[...]


def _addlin_kernel(a_ref, b_ref, w_ref, bias_ref, o_ref):
    """GENConv update: Linear(agg + o_norm) with the add done in-kernel."""
    o_ref[...] = (jnp.dot(a_ref[...] + b_ref[...], w_ref[...],
                          preferred_element_type=F32) + bias_ref[...])


def _proj_kernel(tin_ref, ae_ref, w_qkvs_ref, b_qkvs_ref, w_e_ref, b_e_ref,
                 qkvs_ref, eh_ref):
    """Fused q/k/v/skip projection (one 4*H*E=256-wide matmul -> lane-dense output)
    plus the TransformerConv edge projection, in one launch."""
    qkvs_ref[...] = (jnp.dot(tin_ref[...], w_qkvs_ref[...],
                             preferred_element_type=F32) + b_qkvs_ref[...])
    eh_ref[...] = (jnp.dot(ae_ref[...], w_e_ref[...],
                           preferred_element_type=F32) + b_e_ref[...])


def _film_kernel(o_ref, t_ref, cb_ref, w_lin_ref, b_lin_ref,
                 w_sc_ref, b_sc_ref, w_sh_ref, b_sh_ref, o_out_ref):
    """attention-output linear + conditional (scale+1)/shift FiLM + residual."""
    l_h = jnp.dot(t_ref[...], w_lin_ref[...], preferred_element_type=F32) + b_lin_ref[...]
    cb = cb_ref[...]
    scale = jnp.dot(cb, w_sc_ref[...], preferred_element_type=F32) + b_sc_ref[...]
    shift = jnp.dot(cb, w_sh_ref[...], preferred_element_type=F32) + b_sh_ref[...]
    o_out_ref[...] = o_ref[...] + l_h * (scale + 1.0) + shift


def _ffn_kernel(o_ref, o2_ref, w1_ref, b1_ref, w2_ref, b2_ref, o_out_ref):
    """ff1 -> LeakyReLU -> ff2 + residual; the (n, 4E) intermediate stays in VMEM."""
    h = _leaky(jnp.dot(o2_ref[...], w1_ref[...], preferred_element_type=F32) + b1_ref[...])
    o_out_ref[...] = o_ref[...] + jnp.dot(h, w2_ref[...],
                                          preferred_element_type=F32) + b2_ref[...]


# ---- in-kernel constant selection matrices (iota compares only; no vector div/rem)
def _iota2(shape, dim):
    return jax.lax.broadcasted_iota(jnp.int32, shape, dim)


def _mod_select(k, ncols, offset=0):
    """(k, ncols) f32 matrix with [j, c] = 1.0 iff (c + offset) % k == j
    (implements torch .repeat(1, ...) column tiling as a matmul)."""
    j = _iota2((k, ncols), 0)
    c = _iota2((k, ncols), 1)
    acc = (c + offset == j)
    for t in range(1, (offset + ncols - 1) // k + 1):
        acc = jnp.logical_or(acc, c + offset == j + t * k)
    return jnp.where(acc, 1.0, 0.0)


def _group_select(nrows, ncols, div, off=0):
    """(nrows, ncols) f32 matrix with [c, i] = 1.0 iff c // div + off == i
    (pair-sum over objectives as a matmul)."""
    c = _iota2((nrows, ncols), 0)
    i = _iota2((nrows, ncols), 1)
    lo = (i - off) * div
    return jnp.where((c >= lo) & (c < lo + div), 1.0, 0.0)


def _heads_kernel(node_ref, graph_ref, nstack_ref,
                  madd_ref, msea_ref, wg_ref, wn_ref, we_ref,
                  w_e2e_ref, b_e2e_ref,
                  w_sea_e_ref, w_sea_n_ref, b_sea_ref,
                  w_add_ref, b_add_ref,
                  w_stop_ref, b_stop_ref,
                  w_rew_ref, b_rew_ref,
                  sr_out_ref, add_out_ref, edge_out_ref):
    no, V, A2 = NUM_OBJECTIVES, NUM_NEW_NODE_VALUES, NUM_EDGE_ATTR_LOGITS
    A = A2 // 2
    Ano = A * no
    Ep = msea_ref.shape[0]                  # padded (multiple of 8) undirected-edge rows

    node = node_ref[...]
    gemb = graph_ref[...]
    nstack = nstack_ref[...]                # (2*Ep, 2E): [node_emb[e_row]; node_emb[e_col]]
    nrow = nstack[:Ep]                      # sublane-aligned slices (Ep % 8 == 0)
    ncol = nstack[Ep:]

    # edge2emb: Linear(2E -> E) on node_emb[e_row] + node_emb[e_col]
    edge_emb = (jnp.dot(nrow + ncol, w_e2e_ref[...], preferred_element_type=F32)
                + b_e2e_ref[...])

    # emb2set_edge_attr on cat([edge_emb, node_emb[row/col]], 1): the concat is folded
    # into row-split weights; the node half runs as ONE stacked matmul (src & dst).
    ee = jnp.dot(edge_emb, w_sea_e_ref[...], preferred_element_type=F32) + b_sea_ref[...]
    sn = jnp.dot(nstack, w_sea_n_ref[...], preferred_element_type=F32)
    q_src = jnp.maximum(ee + sn[:Ep], 0.0)
    q_dst = jnp.maximum(ee + sn[Ep:], 0.0)

    # emb2add_node / emb2stop / emb2reward (ReLU where the reference applies it)
    q_add = jnp.maximum(jnp.dot(node, w_add_ref[...], preferred_element_type=F32)
                        + b_add_ref[...], 0.0)
    q_stop = jnp.maximum(jnp.dot(gemb, w_stop_ref[...], preferred_element_type=F32)
                         + b_stop_ref[...], 0.0)
    r_pred = jnp.dot(gemb, w_rew_ref[...], preferred_element_type=F32) + b_rew_ref[...]

    # GraphActionCategorical action-mask application (mask==0 -> mask_value); the
    # torch .repeat(1, num_objectives) tiling is done in-kernel via iota selection
    # matmuls so only the untiled masks are DMA'd.
    # TODO(synk): GraphActionCategorical is an external class; its exact mask/fill
    # convention is approximated here with the module's mask_value (-10).
    madd_rep = jnp.dot(madd_ref[...], _mod_select(V, V * no), preferred_element_type=F32)
    q_add = q_add * madd_rep + (1.0 - madd_rep) * MASK_VALUE
    msea = msea_ref[...]
    msrc = jnp.dot(msea, _mod_select(A2, Ano), preferred_element_type=F32)
    mdst = jnp.dot(msea, _mod_select(A2, Ano, offset=Ano), preferred_element_type=F32)
    q_src = q_src * msrc + (1.0 - msrc) * MASK_VALUE
    q_dst = q_dst * mdst + (1.0 - mdst) * MASK_VALUE

    # Envelope scalarisation: per-row preference weights tiled in-kernel, masked Qs
    # summed over objectives via pair-sum matmuls, then *100.
    wt_add = jnp.dot(wn_ref[...], _mod_select(no, V * no), preferred_element_type=F32)
    add_out_ref[...] = jnp.dot(q_add * wt_add, _group_select(V * no, V, no),
                               preferred_element_type=F32) * 100.0

    wt_e = jnp.dot(we_ref[...], _mod_select(no, Ano), preferred_element_type=F32)
    edge_out_ref[...] = (jnp.dot(q_src * wt_e, _group_select(Ano, A2, no),
                                 preferred_element_type=F32)
                         + jnp.dot(q_dst * wt_e, _group_select(Ano, A2, no, off=A),
                                   preferred_element_type=F32)) * 100.0

    # stop (mask == 1 in the reference) and r_pred packed into one (B, 2) output.
    sr_out_ref[:, 0:1] = jnp.sum(q_stop * wg_ref[...], axis=1, keepdims=True) * 100.0
    sr_out_ref[:, 1:2] = r_pred


# ------------------------------- JAX glue -------------------------------------
def pallas_mlp3(x, layers):
    (w1, b1), (w2, b2), (w3, b3) = layers
    return _pcall(_mlp3_kernel,
                  jax.ShapeDtypeStruct((x.shape[0], w3.shape[1]), F32),
                  x, w1, b1, w2, b2, w3, b3)


def graph_layernorm(x, batch, num_graphs, eps=1e-5):
    """torch_geometric.nn.LayerNorm(affine=False), graph mode (per-graph mean/var)."""
    ones = jnp.ones((x.shape[0],), F32)
    cnt = jax.ops.segment_sum(ones, batch, num_graphs) * x.shape[1]
    mean = jax.ops.segment_sum(x.sum(axis=1), batch, num_graphs) / cnt
    xc = x - mean[batch][:, None]
    var = jax.ops.segment_sum((xc * xc).sum(axis=1), batch, num_graphs) / cnt
    return xc / jnp.sqrt(var[batch][:, None] + eps)


def segment_softmax(scores, seg, num_seg):
    m = jax.ops.segment_max(scores, seg, num_seg)
    e = jnp.exp(scores - m[seg])
    d = jax.ops.segment_sum(e, seg, num_seg)
    return e / (d[seg] + 1e-16)


def graph_transformer(params, x_feat, edge_index, edge_attr, batch, cond):
    """GraphTransformer backbone (pre-LN, virtual conditioning node per graph).
    # TODO(synk): GENConv / TransformerConv internals follow torch_geometric's
    # equations but are re-implemented from scratch (learnable eps / init details
    # simplified); the message-passing gather/scatter stays in plain JAX."""
    E, H = NUM_EMB, NUM_HEADS
    HE = H * E
    N = x_feat.shape[0]
    B = cond.shape[0]
    x = pallas_mlp3(x_feat, params["x2h"])
    e = pallas_mlp3(edge_attr, params["e2h"])
    c = pallas_mlp3(cond, params["c2h"])

    # Augment each graph with a virtual conditioning node connected to all its nodes.
    u = jnp.arange(N, dtype=jnp.int32)
    v = batch + N
    n_aug = N + B
    loops = jnp.arange(n_aug, dtype=jnp.int32)
    aug_src = jnp.concatenate([edge_index[0], u, v, loops])
    aug_dst = jnp.concatenate([edge_index[1], v, u, loops])
    e_p = jnp.zeros((2 * N, E), F32).at[:, 0].set(1.0)      # bias edge feature
    e_noloop = jnp.concatenate([e, e_p], axis=0)
    dst_noloop = jnp.concatenate([edge_index[1], v, u])
    deg = jax.ops.segment_sum(jnp.ones((dst_noloop.shape[0],), F32), dst_noloop, n_aug)
    loop_attr = jax.ops.segment_sum(e_noloop, dst_noloop, n_aug) / jnp.maximum(deg, 1.0)[:, None]
    aug_e = jnp.concatenate([e_noloop, loop_attr], axis=0)  # add_self_loops(fill="mean")
    aug_batch = jnp.concatenate([batch, jnp.arange(B, dtype=jnp.int32)])

    o = jnp.concatenate([x, c], axis=0)
    c_b = c[aug_batch]                                      # loop-invariant FiLM input
    n_e_aug = aug_src.shape[0]
    inv_sqrt_e = 1.0 / (float(E) ** 0.5)

    for lp in params["layers"]:
        o_norm = graph_layernorm(o, aug_batch, B)
        # GENConv(aggr="add", norm=None, num_layers=1)
        msg = jnp.maximum(o_norm[aug_src] + aug_e, 0.0) + 1e-7
        agg = jax.ops.segment_sum(msg, aug_dst, n_aug)
        agg = _pcall(_addlin_kernel, jax.ShapeDtypeStruct((n_aug, E), F32),
                     agg, o_norm, lp["w_gen"], lp["b_gen"])
        # TransformerConv(2E -> E, heads=H, edge_dim=E): fused q/k/v/skip + edge proj.
        tin = jnp.concatenate([o_norm, agg], axis=1)
        qkvs, eh = _pcall(
            _proj_kernel,
            (jax.ShapeDtypeStruct((n_aug, 4 * HE), F32),
             jax.ShapeDtypeStruct((n_e_aug, HE), F32)),
            tin, aug_e, lp["w_qkvs"], lp["b_qkvs"], lp["w_e"], lp["b_e"])
        q = qkvs[:, :HE].reshape(n_aug, H, E)
        k = qkvs[:, HE:2 * HE].reshape(n_aug, H, E)
        val = qkvs[:, 2 * HE:3 * HE].reshape(n_aug, H, E)
        skip = qkvs[:, 3 * HE:]
        ehh = eh.reshape(n_e_aug, H, E)
        kj = k[aug_src] + ehh
        vj = val[aug_src] + ehh
        score = (q[aug_dst] * kj).sum(axis=-1) * inv_sqrt_e
        alpha = segment_softmax(score, aug_dst, n_aug)
        t = jax.ops.segment_sum(vj * alpha[:, :, None], aug_dst, n_aug).reshape(n_aug, HE)
        t = t + skip
        # attention-output linear + FiLM + residual (one launch)
        o = _pcall(_film_kernel, jax.ShapeDtypeStruct((n_aug, E), F32),
                   o, t, c_b, lp["w_lin"], lp["b_lin"],
                   lp["w_scale"], lp["b_scale"], lp["w_shift"], lp["b_shift"])
        o2 = graph_layernorm(o, aug_batch, B)
        # ff1 -> LeakyReLU -> ff2 + residual (one launch)
        o = _pcall(_ffn_kernel, jax.ShapeDtypeStruct((n_aug, E), F32),
                   o, o2, lp["w_ff1"], lp["b_ff1"], lp["w_ff2"], lp["b_ff2"])

    o_nodes, o_cond = o[:N], o[N:]
    node_embeddings = jnp.concatenate([o_nodes, c[batch]], axis=1)          # (N, 2E)
    cnt = jax.ops.segment_sum(jnp.ones((N,), F32), batch, B)[:, None]
    mean_pool = jax.ops.segment_sum(node_embeddings, batch, B) / cnt
    graph_embeddings = jnp.concatenate([mean_pool, o_cond], axis=1)          # (B, 3E)
    return node_embeddings, graph_embeddings


def envelope_heads(node_emb, graph_emb, e_row, e_col, node_batch, edge_graph,
                   add_node_mask, set_edge_attr_mask, w, hp):
    N, B, Eu = node_emb.shape[0], graph_emb.shape[0], e_row.shape[0]
    V = add_node_mask.shape[1]
    A2 = set_edge_attr_mask.shape[1]

    # Pad the undirected-edge rows to a multiple of 8 so the stacked src/dst matmul
    # splits at a sublane-tile boundary in-kernel; padded rows are sliced off after.
    Eu_p = (Eu + 7) // 8 * 8
    pe = Eu_p - Eu
    nrow = jnp.pad(node_emb[e_row], ((0, pe), (0, 0)))
    ncol = jnp.pad(node_emb[e_col], ((0, pe), (0, 0)))
    nstack = jnp.concatenate([nrow, ncol], axis=0)                          # (2*Eu_p, 2E)
    msea_p = jnp.pad(set_edge_attr_mask, ((0, pe), (0, 0)))
    we_p = jnp.pad(w[edge_graph], ((0, pe), (0, 0)))

    out_shape = (jax.ShapeDtypeStruct((B, 2), F32),          # [stop_logit | r_pred]
                 jax.ShapeDtypeStruct((N, V), F32),
                 jax.ShapeDtypeStruct((Eu_p, A2), F32))
    sr, add_l, edge_l = _pcall(
        _heads_kernel, out_shape,
        node_emb, graph_emb, nstack,
        add_node_mask, msea_p, w, w[node_batch], we_p,
        hp["w_e2e"], hp["b_e2e"],
        hp["w_sea_e"], hp["w_sea_n"], hp["b_sea"],
        hp["w_add"], hp["b_add"],
        hp["w_stop"], hp["b_stop"],
        hp["w_rew"], hp["b_rew"])
    return sr[:, 0:1], add_l, edge_l[:Eu], sr[:, 1:2]


def frag_envelope_ql_forward(params, g, cond):
    """Forward of GraphTransformerFragEnvelopeQL with output_Qs=False.
    # TODO(synk): the GraphActionCategorical wrapper object itself (sampling,
    # log-prob machinery) is external glue and is not reproduced; only its logits."""
    node_emb, graph_emb = graph_transformer(
        params["transf"], g["x"], g["edge_index"], g["edge_attr"], g["batch"], cond)
    e_row = g["edge_index"][0, ::2]
    e_col = g["edge_index"][1, ::2]
    edge_graph = g["batch"][e_row]
    w = cond[:, -NUM_OBJECTIVES:]
    stop_l, add_l, sea_l, r_pred = envelope_heads(
        node_emb, graph_emb, e_row, e_col, g["batch"], edge_graph,
        g["add_node_mask"], g["set_edge_attr_mask"], w, params["heads"])
    return {"stop": stop_l, "add_node": add_l, "set_edge_attr": sea_l, "r_pred": r_pred}


# ----------------------------- parameter init ---------------------------------
def init_linear(key, fan_in, fan_out):
    kw, kb = jax.random.split(key)
    bound = 1.0 / (fan_in ** 0.5)
    w = jax.random.uniform(kw, (fan_in, fan_out), F32, -bound, bound)
    b = jax.random.uniform(kb, (1, fan_out), F32, -bound, bound)   # stored as (1, d)
    return w, b


def init_params(key):
    keys = iter(jax.random.split(key, 256))
    E, H = NUM_EMB, NUM_HEADS
    HE = H * E

    def lin(i, o):
        return init_linear(next(keys), i, o)

    def mlp3(i):   # mlp(i, E, E, 2): three Linear layers
        return [lin(i, E), lin(E, E), lin(E, E)]

    transf = {"x2h": mlp3(NUM_NODE_DIM), "e2h": mlp3(NUM_EDGE_DIM),
              "c2h": mlp3(NUM_COND_DIM), "layers": []}
    for _ in range(NUM_LAYERS):
        lp = {}
        lp["w_gen"], lp["b_gen"] = lin(E, E)
        wq, bq = lin(2 * E, HE)
        wk, bk = lin(2 * E, HE)
        wv, bv = lin(2 * E, HE)
        ws, bs = lin(2 * E, HE)
        # q/k/v/skip fused horizontally into one 4*H*E (=256) wide weight
        lp["w_qkvs"] = jnp.concatenate([wq, wk, wv, ws], axis=1)
        lp["b_qkvs"] = jnp.concatenate([bq, bk, bv, bs], axis=1)
        lp["w_e"], lp["b_e"] = lin(E, HE)
        lp["w_lin"], lp["b_lin"] = lin(HE, E)
        lp["w_ff1"], lp["b_ff1"] = lin(E, 4 * E)
        lp["w_ff2"], lp["b_ff2"] = lin(4 * E, E)
        w_cs, b_cs = lin(E, 2 * E)             # conditional scale/shift Linear(E, 2E)
        lp["w_scale"], lp["b_scale"] = w_cs[:, :E], b_cs[:, :E]
        lp["w_shift"], lp["b_shift"] = w_cs[:, E:], b_cs[:, E:]
        transf["layers"].append(lp)

    no, V, A = NUM_OBJECTIVES, NUM_NEW_NODE_VALUES, NUM_EDGE_ATTR_LOGITS // 2
    heads = {}
    heads["w_e2e"], heads["b_e2e"] = lin(2 * E, E)              # edge2emb
    w_sea, heads["b_sea"] = lin(3 * E, A * no)                  # emb2set_edge_attr
    heads["w_sea_e"], heads["w_sea_n"] = w_sea[:E], w_sea[E:]   # split for folded concat
    heads["w_add"], heads["b_add"] = lin(2 * E, V * no)         # emb2add_node
    heads["w_stop"], heads["b_stop"] = lin(3 * E, no)           # emb2stop
    heads["w_rew"], heads["b_rew"] = lin(3 * E, 1)              # emb2reward
    # TODO(synk): self.logZ is defined in __init__ but never used in forward(); omitted.
    return {"transf": transf, "heads": heads}


# ----------------------------------- main --------------------------------------
if __name__ == "__main__":
    key = jax.random.PRNGKey(0)
    kp, kx, ke, kc, km1, km2 = jax.random.split(key, 6)
    params = init_params(kp)

    # Batch of 2 graphs: graph 0 = 3 nodes / 2 edges, graph 1 = 4 nodes / 4 edges.
    und_edges = [(0, 1), (1, 2), (3, 4), (4, 5), (5, 6), (3, 6)]
    pairs = []
    for a, b in und_edges:
        pairs += [(a, b), (b, a)]                       # both directions, interleaved
    edge_index = jnp.array(pairs, dtype=jnp.int32).T    # (2, 12)
    batch = jnp.array([0, 0, 0, 1, 1, 1, 1], dtype=jnp.int32)
    N, Eu, B = 7, len(und_edges), 2

    x = jax.random.normal(kx, (N, NUM_NODE_DIM), F32)
    ea_half = jax.random.normal(ke, (Eu, NUM_EDGE_DIM), F32)
    edge_attr = jnp.repeat(ea_half, 2, axis=0)          # same attr for both directions
    cond = jax.random.normal(kc, (B, NUM_COND_DIM), F32)
    add_node_mask = jax.random.bernoulli(km1, 0.8, (N, NUM_NEW_NODE_VALUES)).astype(F32)
    set_edge_attr_mask = jax.random.bernoulli(
        km2, 0.8, (Eu, NUM_EDGE_ATTR_LOGITS)).astype(F32)

    g = {"x": x, "edge_index": edge_index, "edge_attr": edge_attr, "batch": batch,
         "add_node_mask": add_node_mask, "set_edge_attr_mask": set_edge_attr_mask}

    out = jax.jit(frag_envelope_ql_forward)(params, g, cond)
    out = jax.block_until_ready(out)

    assert out["stop"].shape == (B, 1)
    assert out["add_node"].shape == (N, NUM_NEW_NODE_VALUES)
    assert out["set_edge_attr"].shape == (Eu, NUM_EDGE_ATTR_LOGITS)
    assert out["r_pred"].shape == (B, 1)
    assert all(bool(jnp.all(jnp.isfinite(v))) for v in out.values())
    print("KERNEL_OK")
</pallas_src>

<mosaic_0001>
module attributes {stable_mosaic.version = 11 : i64} {
  func.func @_mlp3_kernel(%arg0: memref<7x8xf32, #tpu.memory_space<vmem>>, %arg1: memref<8x32xf32, #tpu.memory_space<vmem>>, %arg2: memref<1x32xf32, #tpu.memory_space<vmem>>, %arg3: memref<32x32xf32, #tpu.memory_space<vmem>>, %arg4: memref<1x32xf32, #tpu.memory_space<vmem>>, %arg5: memref<32x32xf32, #tpu.memory_space<vmem>>, %arg6: memref<1x32xf32, #tpu.memory_space<vmem>>, %arg7: memref<7x32xf32, #tpu.memory_space<vmem>>) attributes {dimension_semantics = [], scalar_prefetch = 0 : i64, scratch_operands = 0 : i64, tpu.core_type = #tpu.core_type<tc>} {
    %c0 = arith.constant 0 : index
    %c0_0 = arith.constant 0 : index
    %0 = vector.load %arg0[%c0, %c0_0] : memref<7x8xf32, #tpu.memory_space<vmem>>, vector<7x8xf32>
    %c0_1 = arith.constant 0 : index
    %c0_2 = arith.constant 0 : index
    %1 = vector.load %arg1[%c0_1, %c0_2] : memref<8x32xf32, #tpu.memory_space<vmem>>, vector<8x32xf32>
    %cst = arith.constant dense<0.000000e+00> : vector<7x32xf32>
    %2 = tpu.matmul %0, %1, %cst {dimension_numbers = #tpu.dot_dimension_numbers<[1], [0], [0], [1], [0, 0, 1, 1], [], []>} : vector<7x8xf32>, vector<8x32xf32>, vector<7x32xf32> -> vector<7x32xf32>
    %c0_3 = arith.constant 0 : index
    %c0_4 = arith.constant 0 : index
    %3 = vector.load %arg2[%c0_3, %c0_4] : memref<1x32xf32, #tpu.memory_space<vmem>>, vector<1x32xf32>
    %4 = vector.broadcast %3 : vector<1x32xf32> to vector<7x32xf32>
    %5 = arith.addf %2, %4 : vector<7x32xf32>
    %cst_5 = arith.constant 0.000000e+00 : f32
    %6 = vector.broadcast %cst_5 : f32 to vector<7x32xf32>
    %7 = arith.cmpf ogt, %5, %6 : vector<7x32xf32>
    %cst_6 = arith.constant 0.00999999977 : f32
    %8 = vector.broadcast %cst_6 : f32 to vector<7x32xf32>
    %9 = arith.mulf %8, %5 : vector<7x32xf32>
    %10 = arith.select %7, %5, %9 : vector<7x32xi1>, vector<7x32xf32>
    %c0_7 = arith.constant 0 : index
    %c0_8 = arith.constant 0 : index
    %11 = vector.load %arg3[%c0_7, %c0_8] : memref<32x32xf32, #tpu.memory_space<vmem>>, vector<32x32xf32>
    %cst_9 = arith.constant dense<0.000000e+00> : vector<7x32xf32>
    %12 = tpu.matmul %10, %11, %cst_9 {dimension_numbers = #tpu.dot_dimension_numbers<[1], [0], [0], [1], [0, 0, 1, 1], [], []>} : vector<7x32xf32>, vector<32x32xf32>, vector<7x32xf32> -> vector<7x32xf32>
    %c0_10 = arith.constant 0 : index
    %c0_11 = arith.constant 0 : index
    %13 = vector.load %arg4[%c0_10, %c0_11] : memref<1x32xf32, #tpu.memory_space<vmem>>, vector<1x32xf32>
    %14 = vector.broadcast %13 : vector<1x32xf32> to vector<7x32xf32>
    %15 = arith.addf %12, %14 : vector<7x32xf32>
    %cst_12 = arith.constant 0.000000e+00 : f32
    %16 = vector.broadcast %cst_12 : f32 to vector<7x32xf32>
    %17 = arith.cmpf ogt, %15, %16 : vector<7x32xf32>
    %cst_13 = arith.constant 0.00999999977 : f32
    %18 = vector.broadcast %cst_13 : f32 to vector<7x32xf32>
    %19 = arith.mulf %18, %15 : vector<7x32xf32>
    %20 = arith.select %17, %15, %19 : vector<7x32xi1>, vector<7x32xf32>
    %c0_14 = arith.constant 0 : index
    %c0_15 = arith.constant 0 : index
    %21 = vector.load %arg5[%c0_14, %c0_15] : memref<32x32xf32, #tpu.memory_space<vmem>>, vector<32x32xf32>
    %cst_16 = arith.constant dense<0.000000e+00> : vector<7x32xf32>
    %22 = tpu.matmul %20, %21, %cst_16 {dimension_numbers = #tpu.dot_dimension_numbers<[1], [0], [0], [1], [0, 0, 1, 1], [], []>} : vector<7x32xf32>, vector<32x32xf32>, vector<7x32xf32> -> vector<7x32xf32>
    %c0_17 = arith.constant 0 : index
    %c0_18 = arith.constant 0 : index
    %23 = vector.load %arg6[%c0_17, %c0_18] : memref<1x32xf32, #tpu.memory_space<vmem>>, vector<1x32xf32>
    %24 = vector.broadcast %23 : vector<1x32xf32> to vector<7x32xf32>
    %25 = arith.addf %22, %24 : vector<7x32xf32>
    %c0_19 = arith.constant 0 : index
    %c0_20 = arith.constant 0 : index
    %26 = vector.load %arg7[%c0_19, %c0_20] : memref<7x32xf32, #tpu.memory_space<vmem>>, vector<7x32xf32>
    tpu.vector_store %arg7[%c0_19, %c0_20], %25 {strides = array<i32>} : memref<7x32xf32, #tpu.memory_space<vmem>>, vector<7x32xf32>,
    return
  }
}

module attributes {stable_mosaic.version = 11 : i64} {
  func.func @_mlp3_kernel(%arg0: memref<2x8xf32, #tpu.memory_space<vmem>>, %arg1: memref<8x32xf32, #tpu.memory_space<vmem>>, %arg2: memref<1x32xf32, #tpu.memory_space<vmem>>, %arg3: memref<32x32xf32, #tpu.memory_space<vmem>>, %arg4: memref<1x32xf32, #tpu.memory_space<vmem>>, %arg5: memref<32x32xf32, #tpu.memory_space<vmem>>, %arg6: memref<1x32xf32, #tpu.memory_space<vmem>>, %arg7: memref<2x32xf32, #tpu.memory_space<vmem>>) attributes {dimension_semantics = [], scalar_prefetch = 0 : i64, scratch_operands = 0 : i64, tpu.core_type = #tpu.core_type<tc>} {
    %c0 = arith.constant 0 : index
    %c0_0 = arith.constant 0 : index
    %0 = vector.load %arg0[%c0, %c0_0] : memref<2x8xf32, #tpu.memory_space<vmem>>, vector<2x8xf32>
    %c0_1 = arith.constant 0 : index
    %c0_2 = arith.constant 0 : index
    %1 = vector.load %arg1[%c0_1, %c0_2] : memref<8x32xf32, #tpu.memory_space<vmem>>, vector<8x32xf32>
    %cst = arith.constant dense<0.000000e+00> : vector<2x32xf32>
    %2 = tpu.matmul %0, %1, %cst {dimension_numbers = #tpu.dot_dimension_numbers<[1], [0], [0], [1], [0, 0, 1, 1], [], []>} : vector<2x8xf32>, vector<8x32xf32>, vector<2x32xf32> -> vector<2x32xf32>
    %c0_3 = arith.constant 0 : index
    %c0_4 = arith.constant 0 : index
    %3 = vector.load %arg2[%c0_3, %c0_4] : memref<1x32xf32, #tpu.memory_space<vmem>>, vector<1x32xf32>
    %4 = vector.broadcast %3 : vector<1x32xf32> to vector<2x32xf32>
    %5 = arith.addf %2, %4 : vector<2x32xf32>
    %cst_5 = arith.constant 0.000000e+00 : f32
    %6 = vector.broadcast %cst_5 : f32 to vector<2x32xf32>
    %7 = arith.cmpf ogt, %5, %6 : vector<2x32xf32>
    %cst_6 = arith.constant 0.00999999977 : f32
    %8 = vector.broadcast %cst_6 : f32 to vector<2x32xf32>
    %9 = arith.mulf %8, %5 : vector<2x32xf32>
    %10 = arith.select %7, %5, %9 : vector<2x32xi1>, vector<2x32xf32>
    %c0_7 = arith.constant 0 : index
    %c0_8 = arith.constant 0 : index
    %11 = vector.load %arg3[%c0_7, %c0_8] : memref<32x32xf32, #tpu.memory_space<vmem>>, vector<32x32xf32>
    %cst_9 = arith.constant dense<0.000000e+00> : vector<2x32xf32>
    %12 = tpu.matmul %10, %11, %cst_9 {dimension_numbers = #tpu.dot_dimension_numbers<[1], [0], [0], [1], [0, 0, 1, 1], [], []>} : vector<2x32xf32>, vector<32x32xf32>, vector<2x32xf32> -> vector<2x32xf32>
    %c0_10 = arith.constant 0 : index
    %c0_11 = arith.constant 0 : index
    %13 = vector.load %arg4[%c0_10, %c0_11] : memref<1x32xf32, #tpu.memory_space<vmem>>, vector<1x32xf32>
    %14 = vector.broadcast %13 : vector<1x32xf32> to vector<2x32xf32>
    %15 = arith.addf %12, %14 : vector<2x32xf32>
    %cst_12 = arith.constant 0.000000e+00 : f32
    %16 = vector.broadcast %cst_12 : f32 to vector<2x32xf32>
    %17 = arith.cmpf ogt, %15, %16 : vector<2x32xf32>
    %cst_13 = arith.constant 0.00999999977 : f32
    %18 = vector.broadcast %cst_13 : f32 to vector<2x32xf32>
    %19 = arith.mulf %18, %15 : vector<2x32xf32>
    %20 = arith.select %17, %15, %19 : vector<2x32xi1>, vector<2x32xf32>
    %c0_14 = arith.constant 0 : index
    %c0_15 = arith.constant 0 : index
    %21 = vector.load %arg5[%c0_14, %c0_15] : memref<32x32xf32, #tpu.memory_space<vmem>>, vector<32x32xf32>
    %cst_16 = arith.constant dense<0.000000e+00> : vector<2x32xf32>
    %22 = tpu.matmul %20, %21, %cst_16 {dimension_numbers = #tpu.dot_dimension_numbers<[1], [0], [0], [1], [0, 0, 1, 1], [], []>} : vector<2x32xf32>, vector<32x32xf32>, vector<2x32xf32> -> vector<2x32xf32>
    %c0_17 = arith.constant 0 : index
    %c0_18 = arith.constant 0 : index
    %23 = vector.load %arg6[%c0_17, %c0_18] : memref<1x32xf32, #tpu.memory_space<vmem>>, vector<1x32xf32>
    %24 = vector.broadcast %23 : vector<1x32xf32> to vector<2x32xf32>
    %25 = arith.addf %22, %24 : vector<2x32xf32>
    %c0_19 = arith.constant 0 : index
    %c0_20 = arith.constant 0 : index
    %26 = vector.load %arg7[%c0_19, %c0_20] : memref<2x32xf32, #tpu.memory_space<vmem>>, vector<2x32xf32>
    tpu.vector_store %arg7[%c0_19, %c0_20], %25 {strides = array<i32>} : memref<2x32xf32, #tpu.memory_space<vmem>>, vector<2x32xf32>,
    return
  }
}

module attributes {stable_mosaic.version = 11 : i64} {
  func.func @_mlp3_kernel(%arg0: memref<12x4xf32, #tpu.memory_space<vmem>>, %arg1: memref<4x32xf32, #tpu.memory_space<vmem>>, %arg2: memref<1x32xf32, #tpu.memory_space<vmem>>, %arg3: memref<32x32xf32, #tpu.memory_space<vmem>>, %arg4: memref<1x32xf32, #tpu.memory_space<vmem>>, %arg5: memref<32x32xf32, #tpu.memory_space<vmem>>, %arg6: memref<1x32xf32, #tpu.memory_space<vmem>>, %arg7: memref<12x32xf32, #tpu.memory_space<vmem>>) attributes {dimension_semantics = [], scalar_prefetch = 0 : i64, scratch_operands = 0 : i64, tpu.core_type = #tpu.core_type<tc>} {
    %c0 = arith.constant 0 : index
    %c0_0 = arith.constant 0 : index
    %0 = vector.load %arg0[%c0, %c0_0] : memref<12x4xf32, #tpu.memory_space<vmem>>, vector<12x4xf32>
    %c0_1 = arith.constant 0 : index
    %c0_2 = arith.constant 0 : index
    %1 = vector.load %arg1[%c0_1, %c0_2] : memref<4x32xf32, #tpu.memory_space<vmem>>, vector<4x32xf32>
    %cst = arith.constant dense<0.000000e+00> : vector<12x32xf32>
    %2 = tpu.matmul %0, %1, %cst {dimension_numbers = #tpu.dot_dimension_numbers<[1], [0], [0], [1], [0, 0, 1, 1], [], []>} : vector<12x4xf32>, vector<4x32xf32>, vector<12x32xf32> -> vector<12x32xf32>
    %c0_3 = arith.constant 0 : index
    %c0_4 = arith.constant 0 : index
    %3 = vector.load %arg2[%c0_3, %c0_4] : memref<1x32xf32, #tpu.memory_space<vmem>>, vector<1x32xf32>
    %4 = vector.broadcast %3 : vector<1x32xf32> to vector<12x32xf32>
    %5 = arith.addf %2, %4 : vector<12x32xf32>
    %cst_5 = arith.constant 0.000000e+00 : f32
    %6 = vector.broadcast %cst_5 : f32 to vector<12x32xf32>
    %7 = arith.cmpf ogt, %5, %6 : vector<12x32xf32>
    %cst_6 = arith.constant 0.00999999977 : f32
    %8 = vector.broadcast %cst_6 : f32 to vector<12x32xf32>
    %9 = arith.mulf %8, %5 : vector<12x32xf32>
    %10 = arith.select %7, %5, %9 : vector<12x32xi1>, vector<12x32xf32>
    %c0_7 = arith.constant 0 : index
    %c0_8 = arith.constant 0 : index
    %11 = vector.load %arg3[%c0_7, %c0_8] : memref<32x32xf32, #tpu.memory_space<vmem>>, vector<32x32xf32>
    %cst_9 = arith.constant dense<0.000000e+00> : vector<12x32xf32>
    %12 = tpu.matmul %10, %11, %cst_9 {dimension_numbers = #tpu.dot_dimension_numbers<[1], [0], [0], [1], [0, 0, 1, 1], [], []>} : vector<12x32xf32>, vector<32x32xf32>, vector<12x32xf32> -> vector<12x32xf32>
    %c0_10 = arith.constant 0 : index
    %c0_11 = arith.constant 0 : index
    %13 = vector.load %arg4[%c0_10, %c0_11] : memref<1x32xf32, #tpu.memory_space<vmem>>, vector<1x32xf32>
    %14 = vector.broadcast %13 : vector<1x32xf32> to vector<12x32xf32>
    %15 = arith.addf %12, %14 : vector<12x32xf32>
    %cst_12 = arith.constant 0.000000e+00 : f32
    %16 = vector.broadcast %cst_12 : f32 to vector<12x32xf32>
    %17 = arith.cmpf ogt, %15, %16 : vector<12x32xf32>
    %cst_13 = arith.constant 0.00999999977 : f32
    %18 = vector.broadcast %cst_13 : f32 to vector<12x32xf32>
    %19 = arith.mulf %18, %15 : vector<12x32xf32>
    %20 = arith.select %17, %15, %19 : vector<12x32xi1>, vector<12x32xf32>
    %c0_14 = arith.constant 0 : index
    %c0_15 = arith.constant 0 : index
    %21 = vector.load %arg5[%c0_14, %c0_15] : memref<32x32xf32, #tpu.memory_space<vmem>>, vector<32x32xf32>
    %cst_16 = arith.constant dense<0.000000e+00> : vector<12x32xf32>
    %22 = tpu.matmul %20, %21, %cst_16 {dimension_numbers = #tpu.dot_dimension_numbers<[1], [0], [0], [1], [0, 0, 1, 1], [], []>} : vector<12x32xf32>, vector<32x32xf32>, vector<12x32xf32> -> vector<12x32xf32>
    %c0_17 = arith.constant 0 : index
    %c0_18 = arith.constant 0 : index
    %23 = vector.load %arg6[%c0_17, %c0_18] : memref<1x32xf32, #tpu.memory_space<vmem>>, vector<1x32xf32>
    %24 = vector.broadcast %23 : vector<1x32xf32> to vector<12x32xf32>
    %25 = arith.addf %22, %24 : vector<12x32xf32>
    %c0_19 = arith.constant 0 : index
    %c0_20 = arith.constant 0 : index
    %26 = vector.load %arg7[%c0_19, %c0_20] : memref<12x32xf32, #tpu.memory_space<vmem>>, vector<12x32xf32>
    tpu.vector_store %arg7[%c0_19, %c0_20], %25 {strides = array<i32>} : memref<12x32xf32, #tpu.memory_space<vmem>>, vector<12x32xf32>,
    return
  }
}

module attributes {stable_mosaic.version = 11 : i64} {
  func.func @_addlin_kernel(%arg0: memref<9x32xf32, #tpu.memory_space<vmem>>, %arg1: memref<9x32xf32, #tpu.memory_space<vmem>>, %arg2: memref<32x32xf32, #tpu.memory_space<vmem>>, %arg3: memref<1x32xf32, #tpu.memory_space<vmem>>, %arg4: memref<9x32xf32, #tpu.memory_space<vmem>>) attributes {dimension_semantics = [], scalar_prefetch = 0 : i64, scratch_operands = 0 : i64, tpu.core_type = #tpu.core_type<tc>} {
    %c0 = arith.constant 0 : index
    %c0_0 = arith.constant 0 : index
    %0 = vector.load %arg0[%c0, %c0_0] : memref<9x32xf32, #tpu.memory_space<vmem>>, vector<9x32xf32>
    %c0_1 = arith.constant 0 : index
    %c0_2 = arith.constant 0 : index
    %1 = vector.load %arg1[%c0_1, %c0_2] : memref<9x32xf32, #tpu.memory_space<vmem>>, vector<9x32xf32>
    %2 = arith.addf %0, %1 : vector<9x32xf32>
    %c0_3 = arith.constant 0 : index
    %c0_4 = arith.constant 0 : index
    %3 = vector.load %arg2[%c0_3, %c0_4] : memref<32x32xf32, #tpu.memory_space<vmem>>, vector<32x32xf32>
    %cst = arith.constant dense<0.000000e+00> : vector<9x32xf32>
    %4 = tpu.matmul %2, %3, %cst {dimension_numbers = #tpu.dot_dimension_numbers<[1], [0], [0], [1], [0, 0, 1, 1], [], []>} : vector<9x32xf32>, vector<32x32xf32>, vector<9x32xf32> -> vector<9x32xf32>
    %c0_5 = arith.constant 0 : index
    %c0_6 = arith.constant 0 : index
    %5 = vector.load %arg3[%c0_5, %c0_6] : memref<1x32xf32, #tpu.memory_space<vmem>>, vector<1x32xf32>
    %6 = vector.broadcast %5 : vector<1x32xf32> to vector<9x32xf32>
    %7 = arith.addf %4, %6 : vector<9x32xf32>
    %c0_7 = arith.constant 0 : index
    %c0_8 = arith.constant 0 : index
    %8 = vector.load %arg4[%c0_7, %c0_8] : memref<9x32xf32, #tpu.memory_space<vmem>>, vector<9x32xf32>
    tpu.vector_store %arg4[%c0_7, %c0_8], %7 {strides = array<i32>} : memref<9x32xf32, #tpu.memory_space<vmem>>, vector<9x32xf32>,
    return
  }
}

module attributes {stable_mosaic.version = 11 : i64} {
  func.func @_proj_kernel(%arg0: memref<9x64xf32, #tpu.memory_space<vmem>>, %arg1: memref<35x32xf32, #tpu.memory_space<vmem>>, %arg2: memref<64x256xf32, #tpu.memory_space<vmem>>, %arg3: memref<1x256xf32, #tpu.memory_space<vmem>>, %arg4: memref<32x64xf32, #tpu.memory_space<vmem>>, %arg5: memref<1x64xf32, #tpu.memory_space<vmem>>, %arg6: memref<9x256xf32, #tpu.memory_space<vmem>>, %arg7: memref<35x64xf32, #tpu.memory_space<vmem>>) attributes {dimension_semantics = [], scalar_prefetch = 0 : i64, scratch_operands = 0 : i64, tpu.core_type = #tpu.core_type<tc>} {
    %c0 = arith.constant 0 : index
    %c0_0 = arith.constant 0 : index
    %0 = vector.load %arg0[%c0, %c0_0] : memref<9x64xf32, #tpu.memory_space<vmem>>, vector<9x64xf32>
    %c0_1 = arith.constant 0 : index
    %c0_2 = arith.constant 0 : index
    %1 = vector.load %arg2[%c0_1, %c0_2] : memref<64x256xf32, #tpu.memory_space<vmem>>, vector<64x256xf32>
    %cst = arith.constant dense<0.000000e+00> : vector<9x256xf32>
    %2 = tpu.matmul %0, %1, %cst {dimension_numbers = #tpu.dot_dimension_numbers<[1], [0], [0], [1], [0, 0, 1, 1], [], []>} : vector<9x64xf32>, vector<64x256xf32>, vector<9x256xf32> -> vector<9x256xf32>
    %c0_3 = arith.constant 0 : index
    %c0_4 = arith.constant 0 : index
    %3 = vector.load %arg3[%c0_3, %c0_4] : memref<1x256xf32, #tpu.memory_space<vmem>>, vector<1x256xf32>
    %4 = vector.broadcast %3 : vector<1x256xf32> to vector<9x256xf32>
    %5 = arith.addf %2, %4 : vector<9x256xf32>
    %c0_5 = arith.constant 0 : index
    %c0_6 = arith.constant 0 : index
    %6 = vector.load %arg6[%c0_5, %c0_6] : memref<9x256xf32, #tpu.memory_space<vmem>>, vector<9x256xf32>
    tpu.vector_store %arg6[%c0_5, %c0_6], %5 {strides = array<i32>} : memref<9x256xf32, #tpu.memory_space<vmem>>, vector<9x256xf32>,
    %c0_7 = arith.constant 0 : index
    %c0_8 = arith.constant 0 : index
    %7 = vector.load %arg1[%c0_7, %c0_8] : memref<35x32xf32, #tpu.memory_space<vmem>>, vector<35x32xf32>
    %c0_9 = arith.constant 0 : index
    %c0_10 = arith.constant 0 : index
    %8 = vector.load %arg4[%c0_9, %c0_10] : memref<32x64xf32, #tpu.memory_space<vmem>>, vector<32x64xf32>
    %cst_11 = arith.constant dense<0.000000e+00> : vector<35x64xf32>
    %9 = tpu.matmul %7, %8, %cst_11 {dimension_numbers = #tpu.dot_dimension_numbers<[1], [0], [0], [1], [0, 0, 1, 1], [], []>} : vector<35x32xf32>, vector<32x64xf32>, vector<35x64xf32> -> vector<35x64xf32>
    %c0_12 = arith.constant 0 : index
    %c0_13 = arith.constant 0 : index
    %10 = vector.load %arg5[%c0_12, %c0_13] : memref<1x64xf32, #tpu.memory_space<vmem>>, vector<1x64xf32>
    %11 = vector.broadcast %10 : vector<1x64xf32> to vector<35x64xf32>
    %12 = arith.addf %9, %11 : vector<35x64xf32>
    %c0_14 = arith.constant 0 : index
    %c0_15 = arith.constant 0 : index
    %13 = vector.load %arg7[%c0_14, %c0_15] : memref<35x64xf32, #tpu.memory_space<vmem>>, vector<35x64xf32>
    tpu.vector_store %arg7[%c0_14, %c0_15], %12 {strides = array<i32>} : memref<35x64xf32, #tpu.memory_space<vmem>>, vector<35x64xf32>,
    return
  }
}

module attributes {stable_mosaic.version = 11 : i64} {
  func.func @_film_kernel(%arg0: memref<9x32xf32, #tpu.memory_space<vmem>>, %arg1: memref<9x64xf32, #tpu.memory_space<vmem>>, %arg2: memref<9x32xf32, #tpu.memory_space<vmem>>, %arg3: memref<64x32xf32, #tpu.memory_space<vmem>>, %arg4: memref<1x32xf32, #tpu.memory_space<vmem>>, %arg5: memref<32x32xf32, #tpu.memory_space<vmem>>, %arg6: memref<1x32xf32, #tpu.memory_space<vmem>>, %arg7: memref<32x32xf32, #tpu.memory_space<vmem>>, %arg8: memref<1x32xf32, #tpu.memory_space<vmem>>, %arg9: memref<9x32xf32, #tpu.memory_space<vmem>>) attributes {dimension_semantics = [], scalar_prefetch = 0 : i64, scratch_operands = 0 : i64, tpu.core_type = #tpu.core_type<tc>} {
    %c0 = arith.constant 0 : index
    %c0_0 = arith.constant 0 : index
    %0 = vector.load %arg1[%c0, %c0_0] : memref<9x64xf32, #tpu.memory_space<vmem>>, vector<9x64xf32>
    %c0_1 = arith.constant 0 : index
    %c0_2 = arith.constant 0 : index
    %1 = vector.load %arg3[%c0_1, %c0_2] : memref<64x32xf32, #tpu.memory_space<vmem>>, vector<64x32xf32>
    %cst = arith.constant dense<0.000000e+00> : vector<9x32xf32>
    %2 = tpu.matmul %0, %1, %cst {dimension_numbers = #tpu.dot_dimension_numbers<[1], [0], [0], [1], [0, 0, 1, 1], [], []>} : vector<9x64xf32>, vector<64x32xf32>, vector<9x32xf32> -> vector<9x32xf32>
    %c0_3 = arith.constant 0 : index
    %c0_4 = arith.constant 0 : index
    %3 = vector.load %arg4[%c0_3, %c0_4] : memref<1x32xf32, #tpu.memory_space<vmem>>, vector<1x32xf32>
    %4 = vector.broadcast %3 : vector<1x32xf32> to vector<9x32xf32>
    %5 = arith.addf %2, %4 : vector<9x32xf32>
    %c0_5 = arith.constant 0 : index
    %c0_6 = arith.constant 0 : index
    %6 = vector.load %arg2[%c0_5, %c0_6] : memref<9x32xf32, #tpu.memory_space<vmem>>, vector<9x32xf32>
    %c0_7 = arith.constant 0 : index
    %c0_8 = arith.constant 0 : index
    %7 = vector.load %arg5[%c0_7, %c0_8] : memref<32x32xf32, #tpu.memory_space<vmem>>, vector<32x32xf32>
    %cst_9 = arith.constant dense<0.000000e+00> : vector<9x32xf32>
    %8 = tpu.matmul %6, %7, %cst_9 {dimension_numbers = #tpu.dot_dimension_numbers<[1], [0], [0], [1], [0, 0, 1, 1], [], []>} : vector<9x32xf32>, vector<32x32xf32>, vector<9x32xf32> -> vector<9x32xf32>
    %c0_10 = arith.constant 0 : index
    %c0_11 = arith.constant 0 : index
    %9 = vector.load %arg6[%c0_10, %c0_11] : memref<1x32xf32, #tpu.memory_space<vmem>>, vector<1x32xf32>
    %10 = vector.broadcast %9 : vector<1x32xf32> to vector<9x32xf32>
    %11 = arith.addf %8, %10 : vector<9x32xf32>
    %c0_12 = arith.constant 0 : index
    %c0_13 = arith.constant 0 : index
    %12 = vector.load %arg7[%c0_12, %c0_13] : memref<32x32xf32, #tpu.memory_space<vmem>>, vector<32x32xf32>
    %cst_14 = arith.constant dense<0.000000e+00> : vector<9x32xf32>
    %13 = tpu.matmul %6, %12, %cst_14 {dimension_numbers = #tpu.dot_dimension_numbers<[1], [0], [0], [1], [0, 0, 1, 1], [], []>} : vector<9x32xf32>, vector<32x32xf32>, vector<9x32xf32> -> vector<9x32xf32>
    %c0_15 = arith.constant 0 : index
    %c0_16 = arith.constant 0 : index
    %14 = vector.load %arg8[%c0_15, %c0_16] : memref<1x32xf32, #tpu.memory_space<vmem>>, vector<1x32xf32>
    %15 = vector.broadcast %14 : vector<1x32xf32> to vector<9x32xf32>
    %16 = arith.addf %13, %15 : vector<9x32xf32>
    %c0_17 = arith.constant 0 : index
    %c0_18 = arith.constant 0 : index
    %17 = vector.load %arg0[%c0_17, %c0_18] : memref<9x32xf32, #tpu.memory_space<vmem>>, vector<9x32xf32>
    %cst_19 = arith.constant 1.000000e+00 : f32
    %18 = vector.broadcast %cst_19 : f32 to vector<9x32xf32>
    %19 = arith.addf %11, %18 : vector<9x32xf32>
    %20 = arith.mulf %5, %19 : vector<9x32xf32>
    %21 = arith.addf %17, %20 : vector<9x32xf32>
    %22 = arith.addf %21, %16 : vector<9x32xf32>
    %c0_20 = arith.constant 0 : index
    %c0_21 = arith.constant 0 : index
    %23 = vector.load %arg9[%c0_20, %c0_21] : memref<9x32xf32, #tpu.memory_space<vmem>>, vector<9x32xf32>
    tpu.vector_store %arg9[%c0_20, %c0_21], %22 {strides = array<i32>} : memref<9x32xf32, #tpu.memory_space<vmem>>, vector<9x32xf32>,
    return
  }
}

module attributes {stable_mosaic.version = 11 : i64} {
  func.func @_ffn_kernel(%arg0: memref<9x32xf32, #tpu.memory_space<vmem>>, %arg1: memref<9x32xf32, #tpu.memory_space<vmem>>, %arg2: memref<32x128xf32, #tpu.memory_space<vmem>>, %arg3: memref<1x128xf32, #tpu.memory_space<vmem>>, %arg4: memref<128x32xf32, #tpu.memory_space<vmem>>, %arg5: memref<1x32xf32, #tpu.memory_space<vmem>>, %arg6: memref<9x32xf32, #tpu.memory_space<vmem>>) attributes {dimension_semantics = [], scalar_prefetch = 0 : i64, scratch_operands = 0 : i64, tpu.core_type = #tpu.core_type<tc>} {
    %c0 = arith.constant 0 : index
    %c0_0 = arith.constant 0 : index
    %0 = vector.load %arg1[%c0, %c0_0] : memref<9x32xf32, #tpu.memory_space<vmem>>, vector<9x32xf32>
    %c0_1 = arith.constant 0 : index
    %c0_2 = arith.constant 0 : index
    %1 = vector.load %arg2[%c0_1, %c0_2] : memref<32x128xf32, #tpu.memory_space<vmem>>, vector<32x128xf32>
    %cst = arith.constant dense<0.000000e+00> : vector<9x128xf32>
    %2 = tpu.matmul %0, %1, %cst {dimension_numbers = #tpu.dot_dimension_numbers<[1], [0], [0], [1], [0, 0, 1, 1], [], []>} : vector<9x32xf32>, vector<32x128xf32>, vector<9x128xf32> -> vector<9x128xf32>
    %c0_3 = arith.constant 0 : index
    %c0_4 = arith.constant 0 : index
    %3 = vector.load %arg3[%c0_3, %c0_4] : memref<1x128xf32, #tpu.memory_space<vmem>>, vector<1x128xf32>
    %4 = vector.broadcast %3 : vector<1x128xf32> to vector<9x128xf32>
    %5 = arith.addf %2, %4 : vector<9x128xf32>
    %cst_5 = arith.constant 0.000000e+00 : f32
    %6 = vector.broadcast %cst_5 : f32 to vector<9x128xf32>
    %7 = arith.cmpf ogt, %5, %6 : vector<9x128xf32>
    %cst_6 = arith.constant 0.00999999977 : f32
    %8 = vector.broadcast %cst_6 : f32 to vector<9x128xf32>
    %9 = arith.mulf %8, %5 : vector<9x128xf32>
    %10 = arith.select %7, %5, %9 : vector<9x128xi1>, vector<9x128xf32>
    %c0_7 = arith.constant 0 : index
    %c0_8 = arith.constant 0 : index
    %11 = vector.load %arg0[%c0_7, %c0_8] : memref<9x32xf32, #tpu.memory_space<vmem>>, vector<9x32xf32>
    %c0_9 = arith.constant 0 : index
    %c0_10 = arith.constant 0 : index
    %12 = vector.load %arg4[%c0_9, %c0_10] : memref<128x32xf32, #tpu.memory_space<vmem>>, vector<128x32xf32>
    %cst_11 = arith.constant dense<0.000000e+00> : vector<9x32xf32>
    %13 = tpu.matmul %10, %12, %cst_11 {dimension_numbers = #tpu.dot_dimension_numbers<[1], [0], [0], [1], [0, 0, 1, 1], [], []>} : vector<9x128xf32>, vector<128x32xf32>, vector<9x32xf32> -> vector<9x32xf32>
    %14 = arith.addf %11, %13 : vector<9x32xf32>
    %c0_12 = arith.constant 0 : index
    %c0_13 = arith.constant 0 : index
    %15 = vector.load %arg5[%c0_12, %c0_13] : memref<1x32xf32, #tpu.memory_space<vmem>>, vector<1x32xf32>
    %16 = vector.broadcast %15 : vector<1x32xf32> to vector<9x32xf32>
    %17 = arith.addf %14, %16 : vector<9x32xf32>
    %c0_14 = arith.constant 0 : index
    %c0_15 = arith.constant 0 : index
    %18 = vector.load %arg6[%c0_14, %c0_15] : memref<9x32xf32, #tpu.memory_space<vmem>>, vector<9x32xf32>
    tpu.vector_store %arg6[%c0_14, %c0_15], %17 {strides = array<i32>} : memref<9x32xf32, #tpu.memory_space<vmem>>, vector<9x32xf32>,
    return
  }
}

module attributes {stable_mosaic.version = 11 : i64} {
  func.func @_heads_kernel(%arg0: memref<7x64xf32, #tpu.memory_space<vmem>>, %arg1: memref<2x96xf32, #tpu.memory_space<vmem>>, %arg2: memref<16x64xf32, #tpu.memory_space<vmem>>, %arg3: memref<7x5xf32, #tpu.memory_space<vmem>>, %arg4: memref<8x6xf32, #tpu.memory_space<vmem>>, %arg5: memref<2x2xf32, #tpu.memory_space<vmem>>, %arg6: memref<7x2xf32, #tpu.memory_space<vmem>>, %arg7: memref<8x2xf32, #tpu.memory_space<vmem>>, %arg8: memref<64x32xf32, #tpu.memory_space<vmem>>, %arg9: memref<1x32xf32, #tpu.memory_space<vmem>>, %arg10: memref<32x6xf32, #tpu.memory_space<vmem>>, %arg11: memref<64x6xf32, #tpu.memory_space<vmem>>, %arg12: memref<1x6xf32, #tpu.memory_space<vmem>>, %arg13: memref<64x10xf32, #tpu.memory_space<vmem>>, %arg14: memref<1x10xf32, #tpu.memory_space<vmem>>, %arg15: memref<96x2xf32, #tpu.memory_space<vmem>>, %arg16: memref<1x2xf32, #tpu.memory_space<vmem>>, %arg17: memref<96x1xf32, #tpu.memory_space<vmem>>, %arg18: memref<1x1xf32, #tpu.memory_space<vmem>>, %arg19: memref<2x2xf32, #tpu.memory_space<vmem>>, %arg20: memref<7x5xf32, #tpu.memory_space<vmem>>, %arg21: memref<8x6xf32, #tpu.memory_space<vmem>>) attributes {dimension_semantics = [], scalar_prefetch = 0 : i64, scratch_operands = 0 : i64, tpu.core_type = #tpu.core_type<tc>} {
    %c0 = arith.constant 0 : index
    %c0_0 = arith.constant 0 : index
    %0 = vector.load %arg0[%c0, %c0_0] : memref<7x64xf32, #tpu.memory_space<vmem>>, vector<7x64xf32>
    %c0_1 = arith.constant 0 : index
    %c0_2 = arith.constant 0 : index
    %1 = vector.load %arg1[%c0_1, %c0_2] : memref<2x96xf32, #tpu.memory_space<vmem>>, vector<2x96xf32>
    %c0_3 = arith.constant 0 : index
    %c0_4 = arith.constant 0 : index
    %2 = vector.load %arg2[%c0_3, %c0_4] : memref<16x64xf32, #tpu.memory_space<vmem>>, vector<16x64xf32>
    %3 = vector.extract_strided_slice %2 {offsets = [0, 0], sizes = [8, 64], strides = [1, 1]} : vector<16x64xf32> to vector<8x64xf32>
    %4 = vector.extract_strided_slice %2 {offsets = [8, 0], sizes = [8, 64], strides = [1, 1]} : vector<16x64xf32> to vector<8x64xf32>
    %5 = arith.addf %3, %4 : vector<8x64xf32>
    %c0_5 = arith.constant 0 : index
    %c0_6 = arith.constant 0 : index
    %6 = vector.load %arg8[%c0_5, %c0_6] : memref<64x32xf32, #tpu.memory_space<vmem>>, vector<64x32xf32>
    %cst = arith.constant dense<0.000000e+00> : vector<8x32xf32>
    %7 = tpu.matmul %5, %6, %cst {dimension_numbers = #tpu.dot_dimension_numbers<[1], [0], [0], [1], [0, 0, 1, 1], [], []>} : vector<8x64xf32>, vector<64x32xf32>, vector<8x32xf32> -> vector<8x32xf32>
    %c0_7 = arith.constant 0 : index
    %c0_8 = arith.constant 0 : index
    %8 = vector.load %arg9[%c0_7, %c0_8] : memref<1x32xf32, #tpu.memory_space<vmem>>, vector<1x32xf32>
    %9 = vector.broadcast %8 : vector<1x32xf32> to vector<8x32xf32>
    %10 = arith.addf %7, %9 : vector<8x32xf32>
    %c0_9 = arith.constant 0 : index
    %c0_10 = arith.constant 0 : index
    %11 = vector.load %arg10[%c0_9, %c0_10] : memref<32x6xf32, #tpu.memory_space<vmem>>, vector<32x6xf32>
    %cst_11 = arith.constant dense<0.000000e+00> : vector<8x6xf32>
    %12 = tpu.matmul %10, %11, %cst_11 {dimension_numbers = #tpu.dot_dimension_numbers<[1], [0], [0], [1], [0, 0, 1, 1], [], []>} : vector<8x32xf32>, vector<32x6xf32>, vector<8x6xf32> -> vector<8x6xf32>
    %c0_12 = arith.constant 0 : index
    %c0_13 = arith.constant 0 : index
    %13 = vector.load %arg12[%c0_12, %c0_13] : memref<1x6xf32, #tpu.memory_space<vmem>>, vector<1x6xf32>
    %14 = vector.broadcast %13 : vector<1x6xf32> to vector<8x6xf32>
    %15 = arith.addf %12, %14 : vector<8x6xf32>
    %c0_14 = arith.constant 0 : index
    %c0_15 = arith.constant 0 : index
    %16 = vector.load %arg11[%c0_14, %c0_15] : memref<64x6xf32, #tpu.memory_space<vmem>>, vector<64x6xf32>
    %cst_16 = arith.constant dense<0.000000e+00> : vector<16x6xf32>
    %17 = tpu.matmul %2, %16, %cst_16 {dimension_numbers = #tpu.dot_dimension_numbers<[1], [0], [0], [1], [0, 0, 1, 1], [], []>} : vector<16x64xf32>, vector<64x6xf32>, vector<16x6xf32> -> vector<16x6xf32>
    %18 = vector.extract_strided_slice %17 {offsets = [0, 0], sizes = [8, 6], strides = [1, 1]} : vector<16x6xf32> to vector<8x6xf32>
    %19 = arith.addf %15, %18 : vector<8x6xf32>
    %cst_17 = arith.constant 0.000000e+00 : f32
    %20 = vector.broadcast %cst_17 : f32 to vector<8x6xf32>
    %21 = arith.maximumf %19, %20 : vector<8x6xf32>
    %22 = vector.extract_strided_slice %17 {offsets = [8, 0], sizes = [8, 6], strides = [1, 1]} : vector<16x6xf32> to vector<8x6xf32>
    %23 = arith.addf %15, %22 : vector<8x6xf32>
    %cst_18 = arith.constant 0.000000e+00 : f32
    %24 = vector.broadcast %cst_18 : f32 to vector<8x6xf32>
    %25 = arith.maximumf %23, %24 : vector<8x6xf32>
    %c0_19 = arith.constant 0 : index
    %c0_20 = arith.constant 0 : index
    %26 = vector.load %arg13[%c0_19, %c0_20] : memref<64x10xf32, #tpu.memory_space<vmem>>, vector<64x10xf32>
    %cst_21 = arith.constant dense<0.000000e+00> : vector<7x10xf32>
    %27 = tpu.matmul %0, %26, %cst_21 {dimension_numbers = #tpu.dot_dimension_numbers<[1], [0], [0], [1], [0, 0, 1, 1], [], []>} : vector<7x64xf32>, vector<64x10xf32>, vector<7x10xf32> -> vector<7x10xf32>
    %c0_22 = arith.constant 0 : index
    %c0_23 = arith.constant 0 : index
    %28 = vector.load %arg14[%c0_22, %c0_23] : memref<1x10xf32, #tpu.memory_space<vmem>>, vector<1x10xf32>
    %29 = vector.broadcast %28 : vector<1x10xf32> to vector<7x10xf32>
    %30 = arith.addf %27, %29 : vector<7x10xf32>
    %cst_24 = arith.constant 0.000000e+00 : f32
    %31 = vector.broadcast %cst_24 : f32 to vector<7x10xf32>
    %32 = arith.maximumf %30, %31 : vector<7x10xf32>
    %c0_25 = arith.constant 0 : index
    %c0_26 = arith.constant 0 : index
    %33 = vector.load %arg15[%c0_25, %c0_26] : memref<96x2xf32, #tpu.memory_space<vmem>>, vector<96x2xf32>
    %cst_27 = arith.constant dense<0.000000e+00> : vector<2x2xf32>
    %34 = tpu.matmul %1, %33, %cst_27 {dimension_numbers = #tpu.dot_dimension_numbers<[1], [0], [0], [1], [0, 0, 1, 1], [], []>} : vector<2x96xf32>, vector<96x2xf32>, vector<2x2xf32> -> vector<2x2xf32>
    %c0_28 = arith.constant 0 : index
    %c0_29 = arith.constant 0 : index
    %35 = vector.load %arg16[%c0_28, %c0_29] : memref<1x2xf32, #tpu.memory_space<vmem>>, vector<1x2xf32>
    %36 = vector.broadcast %35 : vector<1x2xf32> to vector<2x2xf32>
    %37 = arith.addf %34, %36 : vector<2x2xf32>
    %cst_30 = arith.constant 0.000000e+00 : f32
    %38 = vector.broadcast %cst_30 : f32 to vector<2x2xf32>
    %39 = arith.maximumf %37, %38 : vector<2x2xf32>
    %c0_31 = arith.constant 0 : index
    %c0_32 = arith.constant 0 : index
    %40 = vector.load %arg17[%c0_31, %c0_32] : memref<96x1xf32, #tpu.memory_space<vmem>>, vector<96x1xf32>
    %cst_33 = arith.constant dense<0.000000e+00> : vector<2x1xf32>
    %41 = tpu.matmul %1, %40, %cst_33 {dimension_numbers = #tpu.dot_dimension_numbers<[1], [0], [0], [1], [0, 0, 1, 1], [], []>} : vector<2x96xf32>, vector<96x1xf32>, vector<2x1xf32> -> vector<2x1xf32>
    %c0_34 = arith.constant 0 : index
    %c0_35 = arith.constant 0 : index
    %42 = vector.load %arg18[%c0_34, %c0_35] : memref<1x1xf32, #tpu.memory_space<vmem>>, vector<1x1xf32>
    %43 = vector.broadcast %42 : vector<1x1xf32> to vector<2x1xf32>
    %44 = arith.addf %41, %43 : vector<2x1xf32>
    %c0_36 = arith.constant 0 : index
    %c0_37 = arith.constant 0 : index
    %45 = vector.load %arg3[%c0_36, %c0_37] : memref<7x5xf32, #tpu.memory_space<vmem>>, vector<7x5xf32>
    %46 = tpu.iota {dimensions = array<i32: 0>} : vector<5x10xi32>
    %47 = tpu.iota {dimensions = array<i32: 1>} : vector<5x10xi32>
    %c0_i32 = arith.constant 0 : i32
    %48 = vector.broadcast %c0_i32 : i32 to vector<5x10xi32>
    %49 = arith.addi %47, %48 : vector<5x10xi32>
    %50 = arith.cmpi eq, %49, %46 : vector<5x10xi32>
    %c0_i32_38 = arith.constant 0 : i32
    %51 = vector.broadcast %c0_i32_38 : i32 to vector<5x10xi32>
    %52 = arith.addi %47, %51 : vector<5x10xi32>
    %c5_i32 = arith.constant 5 : i32
    %53 = vector.broadcast %c5_i32 : i32 to vector<5x10xi32>
    %54 = arith.addi %46, %53 : vector<5x10xi32>
    %55 = arith.cmpi eq, %52, %54 : vector<5x10xi32>
    %56 = arith.ori %50, %55 : vector<5x10xi1>
    %cst_39 = arith.constant 1.000000e+00 : f32
    %cst_40 = arith.constant 0.000000e+00 : f32
    %57 = vector.broadcast %cst_39 : f32 to vector<5x10xf32>
    %58 = vector.broadcast %cst_40 : f32 to vector<5x10xf32>
    %59 = arith.select %56, %57, %58 : vector<5x10xi1>, vector<5x10xf32>
    %cst_41 = arith.constant dense<0.000000e+00> : vector<7x10xf32>
    %60 = tpu.matmul %45, %59, %cst_41 {dimension_numbers = #tpu.dot_dimension_numbers<[1], [0], [0], [1], [0, 0, 1, 1], [], []>} : vector<7x5xf32>, vector<5x10xf32>, vector<7x10xf32> -> vector<7x10xf32>
    %61 = arith.mulf %32, %60 : vector<7x10xf32>
    %cst_42 = arith.constant 1.000000e+00 : f32
    %62 = vector.broadcast %cst_42 : f32 to vector<7x10xf32>
    %63 = arith.subf %62, %60 : vector<7x10xf32>
    %cst_43 = arith.constant -1.000000e+01 : f32
    %64 = vector.broadcast %cst_43 : f32 to vector<7x10xf32>
    %65 = arith.mulf %63, %64 : vector<7x10xf32>
    %66 = arith.addf %61, %65 : vector<7x10xf32>
    %c0_44 = arith.constant 0 : index
    %c0_45 = arith.constant 0 : index
    %67 = vector.load %arg4[%c0_44, %c0_45] : memref<8x6xf32, #tpu.memory_space<vmem>>, vector<8x6xf32>
    %68 = tpu.iota {dimensions = array<i32: 0>} : vector<6x6xi32>
    %69 = tpu.iota {dimensions = array<i32: 1>} : vector<6x6xi32>
    %c0_i32_46 = arith.constant 0 : i32
    %70 = vector.broadcast %c0_i32_46 : i32 to vector<6x6xi32>
    %71 = arith.addi %69, %70 : vector<6x6xi32>
    %72 = arith.cmpi eq, %71, %68 : vector<6x6xi32>
    %cst_47 = arith.constant 1.000000e+00 : f32
    %cst_48 = arith.constant 0.000000e+00 : f32
    %73 = vector.broadcast %cst_47 : f32 to vector<6x6xf32>
    %74 = vector.broadcast %cst_48 : f32 to vector<6x6xf32>
    %75 = arith.select %72, %73, %74 : vector<6x6xi1>, vector<6x6xf32>
    %cst_49 = arith.constant dense<0.000000e+00> : vector<8x6xf32>
    %76 = tpu.matmul %67, %75, %cst_49 {dimension_numbers = #tpu.dot_dimension_numbers<[1], [0], [0], [1], [0, 0, 1, 1], [], []>} : vector<8x6xf32>, vector<6x6xf32>, vector<8x6xf32> -> vector<8x6xf32>
    %77 = tpu.iota {dimensions = array<i32: 0>} : vector<6x6xi32>
    %78 = tpu.iota {dimensions = array<i32: 1>} : vector<6x6xi32>
    %c6_i32 = arith.constant 6 : i32
    %79 = vector.broadcast %c6_i32 : i32 to vector<6x6xi32>
    %80 = arith.addi %78, %79 : vector<6x6xi32>
    %81 = arith.cmpi eq, %80, %77 : vector<6x6xi32>
    %c6_i32_50 = arith.constant 6 : i32
    %82 = vector.broadcast %c6_i32_50 : i32 to vector<6x6xi32>
    %83 = arith.addi %78, %82 : vector<6x6xi32>
    %c6_i32_51 = arith.constant 6 : i32
    %84 = vector.broadcast %c6_i32_51 : i32 to vector<6x6xi32>
    %85 = arith.addi %77, %84 : vector<6x6xi32>
    %86 = arith.cmpi eq, %83, %85 : vector<6x6xi32>
    %87 = arith.ori %81, %86 : vector<6x6xi1>
    %cst_52 = arith.constant 1.000000e+00 : f32
    %cst_53 = arith.constant 0.000000e+00 : f32
    %88 = vector.broadcast %cst_52 : f32 to vector<6x6xf32>
    %89 = vector.broadcast %cst_53 : f32 to vector<6x6xf32>
    %90 = arith.select %87, %88, %89 : vector<6x6xi1>, vector<6x6xf32>
    %cst_54 = arith.constant dense<0.000000e+00> : vector<8x6xf32>
    %91 = tpu.matmul %67, %90, %cst_54 {dimension_numbers = #tpu.dot_dimension_numbers<[1], [0], [0], [1], [0, 0, 1, 1], [], []>} : vector<8x6xf32>, vector<6x6xf32>, vector<8x6xf32> -> vector<8x6xf32>
    %92 = arith.mulf %21, %76 : vector<8x6xf32>
    %cst_55 = arith.constant 1.000000e+00 : f32
    %93 = vector.broadcast %cst_55 : f32 to vector<8x6xf32>
    %94 = arith.subf %93, %76 : vector<8x6xf32>
    %cst_56 = arith.constant -1.000000e+01 : f32
    %95 = vector.broadcast %cst_56 : f32 to vector<8x6xf32>
    %96 = arith.mulf %94, %95 : vector<8x6xf32>
    %97 = arith.addf %92, %96 : vector<8x6xf32>
    %98 = arith.mulf %25, %91 : vector<8x6xf32>
    %cst_57 = arith.constant 1.000000e+00 : f32
    %99 = vector.broadcast %cst_57 : f32 to vector<8x6xf32>
    %100 = arith.subf %99, %91 : vector<8x6xf32>
    %cst_58 = arith.constant -1.000000e+01 : f32
    %101 = vector.broadcast %cst_58 : f32 to vector<8x6xf32>
    %102 = arith.mulf %100, %101 : vector<8x6xf32>
    %103 = arith.addf %98, %102 : vector<8x6xf32>
    %c0_59 = arith.constant 0 : index
    %c0_60 = arith.constant 0 : index
    %104 = vector.load %arg6[%c0_59, %c0_60] : memref<7x2xf32, #tpu.memory_space<vmem>>, vector<7x2xf32>
    %105 = tpu.iota {dimensions = array<i32: 0>} : vector<2x10xi32>
    %106 = tpu.iota {dimensions = array<i32: 1>} : vector<2x10xi32>
    %c0_i32_61 = arith.constant 0 : i32
    %107 = vector.broadcast %c0_i32_61 : i32 to vector<2x10xi32>
    %108 = arith.addi %106, %107 : vector<2x10xi32>
    %109 = arith.cmpi eq, %108, %105 : vector<2x10xi32>
    %c0_i32_62 = arith.constant 0 : i32
    %110 = vector.broadcast %c0_i32_62 : i32 to vector<2x10xi32>
    %111 = arith.addi %106, %110 : vector<2x10xi32>
    %c2_i32 = arith.constant 2 : i32
    %112 = vector.broadcast %c2_i32 : i32 to vector<2x10xi32>
    %113 = arith.addi %105, %112 : vector<2x10xi32>
    %114 = arith.cmpi eq, %111, %113 : vector<2x10xi32>
    %115 = arith.ori %109, %114 : vector<2x10xi1>
    %c0_i32_63 = arith.constant 0 : i32
    %116 = vector.broadcast %c0_i32_63 : i32 to vector<2x10xi32>
    %117 = arith.addi %106, %116 : vector<2x10xi32>
    %c4_i32 = arith.constant 4 : i32
    %118 = vector.broadcast %c4_i32 : i32 to vector<2x10xi32>
    %119 = arith.addi %105, %118 : vector<2x10xi32>
    %120 = arith.cmpi eq, %117, %119 : vector<2x10xi32>
    %121 = arith.ori %115, %120 : vector<2x10xi1>
    %c0_i32_64 = arith.constant 0 : i32
    %122 = vector.broadcast %c0_i32_64 : i32 to vector<2x10xi32>
    %123 = arith.addi %106, %122 : vector<2x10xi32>
    %c6_i32_65 = arith.constant 6 : i32
    %124 = vector.broadcast %c6_i32_65 : i32 to vector<2x10xi32>
    %125 = arith.addi %105, %124 : vector<2x10xi32>
    %126 = arith.cmpi eq, %123, %125 : vector<2x10xi32>
    %127 = arith.ori %121, %126 : vector<2x10xi1>
    %c0_i32_66 = arith.constant 0 : i32
    %128 = vector.broadcast %c0_i32_66 : i32 to vector<2x10xi32>
    %129 = arith.addi %106, %128 : vector<2x10xi32>
    %c8_i32 = arith.constant 8 : i32
    %130 = vector.broadcast %c8_i32 : i32 to vector<2x10xi32>
    %131 = arith.addi %105, %130 : vector<2x10xi32>
    %132 = arith.cmpi eq, %129, %131 : vector<2x10xi32>
    %133 = arith.ori %127, %132 : vector<2x10xi1>
    %cst_67 = arith.constant 1.000000e+00 : f32
    %cst_68 = arith.constant 0.000000e+00 : f32
    %134 = vector.broadcast %cst_67 : f32 to vector<2x10xf32>
    %135 = vector.broadcast %cst_68 : f32 to vector<2x10xf32>
    %136 = arith.select %133, %134, %135 : vector<2x10xi1>, vector<2x10xf32>
    %cst_69 = arith.constant dense<0.000000e+00> : vector<7x10xf32>
    %137 = tpu.matmul %104, %136, %cst_69 {dimension_numbers = #tpu.dot_dimension_numbers<[1], [0], [0], [1], [0, 0, 1, 1], [], []>} : vector<7x2xf32>, vector<2x10xf32>, vector<7x10xf32> -> vector<7x10xf32>
    %138 = arith.mulf %66, %137 : vector<7x10xf32>
    %139 = tpu.iota {dimensions = array<i32: 0>} : vector<10x5xi32>
    %140 = tpu.iota {dimensions = array<i32: 1>} : vector<10x5xi32>
    %c0_i32_70 = arith.constant 0 : i32
    %141 = vector.broadcast %c0_i32_70 : i32 to vector<10x5xi32>
    %142 = arith.subi %140, %141 : vector<10x5xi32>
    %c2_i32_71 = arith.constant 2 : i32
    %143 = vector.broadcast %c2_i32_71 : i32 to vector<10x5xi32>
    %144 = arith.muli %142, %143 : vector<10x5xi32>
    %145 = arith.cmpi sge, %139, %144 : vector<10x5xi32>
    %c2_i32_72 = arith.constant 2 : i32
    %146 = vector.broadcast %c2_i32_72 : i32 to vector<10x5xi32>
    %147 = arith.addi %144, %146 : vector<10x5xi32>
    %148 = arith.cmpi slt, %139, %147 : vector<10x5xi32>
    %149 = arith.andi %145, %148 : vector<10x5xi1>
    %cst_73 = arith.constant 1.000000e+00 : f32
    %cst_74 = arith.constant 0.000000e+00 : f32
    %150 = vector.broadcast %cst_73 : f32 to vector<10x5xf32>
    %151 = vector.broadcast %cst_74 : f32 to vector<10x5xf32>
    %152 = arith.select %149, %150, %151 : vector<10x5xi1>, vector<10x5xf32>
    %cst_75 = arith.constant dense<0.000000e+00> : vector<7x5xf32>
    %153 = tpu.matmul %138, %152, %cst_75 {dimension_numbers = #tpu.dot_dimension_numbers<[1], [0], [0], [1], [0, 0, 1, 1], [], []>} : vector<7x10xf32>, vector<10x5xf32>, vector<7x5xf32> -> vector<7x5xf32>
    %cst_76 = arith.constant 1.000000e+02 : f32
    %154 = vector.broadcast %cst_76 : f32 to vector<7x5xf32>
    %155 = arith.mulf %153, %154 : vector<7x5xf32>
    %c0_77 = arith.constant 0 : index
    %c0_78 = arith.constant 0 : index
    %156 = vector.load %arg20[%c0_77, %c0_78] : memref<7x5xf32, #tpu.memory_space<vmem>>, vector<7x5xf32>
    tpu.vector_store %arg20[%c0_77, %c0_78], %155 {strides = array<i32>} : memref<7x5xf32, #tpu.memory_space<vmem>>, vector<7x5xf32>,
    %c0_79 = arith.constant 0 : index
    %c0_80 = arith.constant 0 : index
    %157 = vector.load %arg7[%c0_79, %c0_80] : memref<8x2xf32, #tpu.memory_space<vmem>>, vector<8x2xf32>
    %158 = tpu.iota {dimensions = array<i32: 0>} : vector<2x6xi32>
    %159 = tpu.iota {dimensions = array<i32: 1>} : vector<2x6xi32>
    %c0_i32_81 = arith.constant 0 : i32
    %160 = vector.broadcast %c0_i32_81 : i32 to vector<2x6xi32>
    %161 = arith.addi %159, %160 : vector<2x6xi32>
    %162 = arith.cmpi eq, %161, %158 : vector<2x6xi32>
    %c0_i32_82 = arith.constant 0 : i32
    %163 = vector.broadcast %c0_i32_82 : i32 to vector<2x6xi32>
    %164 = arith.addi %159, %163 : vector<2x6xi32>
    %c2_i32_83 = arith.constant 2 : i32
    %165 = vector.broadcast %c2_i32_83 : i32 to vector<2x6xi32>
    %166 = arith.addi %158, %165 : vector<2x6xi32>
    %167 = arith.cmpi eq, %164, %166 : vector<2x6xi32>
    %168 = arith.ori %162, %167 : vector<2x6xi1>
    %c0_i32_84 = arith.constant 0 : i32
    %169 = vector.broadcast %c0_i32_84 : i32 to vector<2x6xi32>
    %170 = arith.addi %159, %169 : vector<2x6xi32>
    %c4_i32_85 = arith.constant 4 : i32
    %171 = vector.broadcast %c4_i32_85 : i32 to vector<2x6xi32>
    %172 = arith.addi %158, %171 : vector<2x6xi32>
    %173 = arith.cmpi eq, %170, %172 : vector<2x6xi32>
    %174 = arith.ori %168, %173 : vector<2x6xi1>
    %cst_86 = arith.constant 1.000000e+00 : f32
    %cst_87 = arith.constant 0.000000e+00 : f32
    %175 = vector.broadcast %cst_86 : f32 to vector<2x6xf32>
    %176 = vector.broadcast %cst_87 : f32 to vector<2x6xf32>
    %177 = arith.select %174, %175, %176 : vector<2x6xi1>, vector<2x6xf32>
    %cst_88 = arith.constant dense<0.000000e+00> : vector<8x6xf32>
    %178 = tpu.matmul %157, %177, %cst_88 {dimension_numbers = #tpu.dot_dimension_numbers<[1], [0], [0], [1], [0, 0, 1, 1], [], []>} : vector<8x2xf32>, vector<2x6xf32>, vector<8x6xf32> -> vector<8x6xf32>
    %179 = arith.mulf %97, %178 : vector<8x6xf32>
    %180 = tpu.iota {dimensions = array<i32: 0>} : vector<6x6xi32>
    %181 = tpu.iota {dimensions = array<i32: 1>} : vector<6x6xi32>
    %c0_i32_89 = arith.constant 0 : i32
    %182 = vector.broadcast %c0_i32_89 : i32 to vector<6x6xi32>
    %183 = arith.subi %181, %182 : vector<6x6xi32>
    %c2_i32_90 = arith.constant 2 : i32
    %184 = vector.broadcast %c2_i32_90 : i32 to vector<6x6xi32>
    %185 = arith.muli %183, %184 : vector<6x6xi32>
    %186 = arith.cmpi sge, %180, %185 : vector<6x6xi32>
    %c2_i32_91 = arith.constant 2 : i32
    %187 = vector.broadcast %c2_i32_91 : i32 to vector<6x6xi32>
    %188 = arith.addi %185, %187 : vector<6x6xi32>
    %189 = arith.cmpi slt, %180, %188 : vector<6x6xi32>
    %190 = arith.andi %186, %189 : vector<6x6xi1>
    %cst_92 = arith.constant 1.000000e+00 : f32
    %cst_93 = arith.constant 0.000000e+00 : f32
    %191 = vector.broadcast %cst_92 : f32 to vector<6x6xf32>
    %192 = vector.broadcast %cst_93 : f32 to vector<6x6xf32>
    %193 = arith.select %190, %191, %192 : vector<6x6xi1>, vector<6x6xf32>
    %cst_94 = arith.constant dense<0.000000e+00> : vector<8x6xf32>
    %194 = tpu.matmul %179, %193, %cst_94 {dimension_numbers = #tpu.dot_dimension_numbers<[1], [0], [0], [1], [0, 0, 1, 1], [], []>} : vector<8x6xf32>, vector<6x6xf32>, vector<8x6xf32> -> vector<8x6xf32>
    %195 = arith.mulf %103, %178 : vector<8x6xf32>
    %196 = tpu.iota {dimensions = array<i32: 0>} : vector<6x6xi32>
    %197 = tpu.iota {dimensions = array<i32: 1>} : vector<6x6xi32>
    %c3_i32 = arith.constant 3 : i32
    %198 = vector.broadcast %c3_i32 : i32 to vector<6x6xi32>
    %199 = arith.subi %197, %198 : vector<6x6xi32>
    %c2_i32_95 = arith.constant 2 : i32
    %200 = vector.broadcast %c2_i32_95 : i32 to vector<6x6xi32>
    %201 = arith.muli %199, %200 : vector<6x6xi32>
    %202 = arith.cmpi sge, %196, %201 : vector<6x6xi32>
    %c2_i32_96 = arith.constant 2 : i32
    %203 = vector.broadcast %c2_i32_96 : i32 to vector<6x6xi32>
    %204 = arith.addi %201, %203 : vector<6x6xi32>
    %205 = arith.cmpi slt, %196, %204 : vector<6x6xi32>
    %206 = arith.andi %202, %205 : vector<6x6xi1>
    %cst_97 = arith.constant 1.000000e+00 : f32
    %cst_98 = arith.constant 0.000000e+00 : f32
    %207 = vector.broadcast %cst_97 : f32 to vector<6x6xf32>
    %208 = vector.broadcast %cst_98 : f32 to vector<6x6xf32>
    %209 = arith.select %206, %207, %208 : vector<6x6xi1>, vector<6x6xf32>
    %cst_99 = arith.constant dense<0.000000e+00> : vector<8x6xf32>
    %210 = tpu.matmul %195, %209, %cst_99 {dimension_numbers = #tpu.dot_dimension_numbers<[1], [0], [0], [1], [0, 0, 1, 1], [], []>} : vector<8x6xf32>, vector<6x6xf32>, vector<8x6xf32> -> vector<8x6xf32>
    %211 = arith.addf %194, %210 : vector<8x6xf32>
    %cst_100 = arith.constant 1.000000e+02 : f32
    %212 = vector.broadcast %cst_100 : f32 to vector<8x6xf32>
    %213 = arith.mulf %211, %212 : vector<8x6xf32>
    %c0_101 = arith.constant 0 : index
    %c0_102 = arith.constant 0 : index
    %214 = vector.load %arg21[%c0_101, %c0_102] : memref<8x6xf32, #tpu.memory_space<vmem>>, vector<8x6xf32>
    tpu.vector_store %arg21[%c0_101, %c0_102], %213 {strides = array<i32>} : memref<8x6xf32, #tpu.memory_space<vmem>>, vector<8x6xf32>,
    %c0_103 = arith.constant 0 : index
    %c0_104 = arith.constant 0 : index
    %215 = vector.load %arg5[%c0_103, %c0_104] : memref<2x2xf32, #tpu.memory_space<vmem>>, vector<2x2xf32>
    %216 = arith.mulf %39, %215 : vector<2x2xf32>
    %cst_105 = arith.constant dense<0.000000e+00> : vector<2xf32>
    %217 = vector.multi_reduction <add>, %216, %cst_105 [1] : vector<2x2xf32> to vector<2xf32>
    %218 = vector.shape_cast %217 : vector<2xf32> to vector<2x1xf32>
    %cst_106 = arith.constant 1.000000e+02 : f32
    %219 = vector.broadcast %cst_106 : f32 to vector<2x1xf32>
    %220 = arith.mulf %218, %219 : vector<2x1xf32>
    %c0_107 = arith.constant 0 : index
    %c0_108 = arith.constant 0 : index
    %221 = vector.load %arg19[%c0_107, %c0_108] : memref<2x2xf32, #tpu.memory_space<vmem>>, vector<2x1xf32>
    tpu.vector_store %arg19[%c0_107, %c0_108], %220 {strides = array<i32>} : memref<2x2xf32, #tpu.memory_space<vmem>>, vector<2x1xf32>,
    %c0_109 = arith.constant 0 : index
    %c1 = arith.constant 1 : index
    %222 = vector.load %arg19[%c0_109, %c1] : memref<2x2xf32, #tpu.memory_space<vmem>>, vector<2x1xf32>
    tpu.vector_store %arg19[%c0_109, %c1], %44 {strides = array<i32>} : memref<2x2xf32, #tpu.memory_space<vmem>>, vector<2x1xf32>,
    return
  }
}

</mosaic_0001>

<llo_original>
// kernel: frag_envelope_ql_forward.12
$region0: #{frag_envelope_ql_forward.12}
  #allocation0 [shape = 'u32[]', space=smem, size = 0x4, offset = 0x4, fixed_abs, tag = 'smem constant byte address 0x4 - core index']
  #allocation1 [shape = 'u32[144,128]{1,0:T(1,128)}', space=vmem, size = 0x12000, scoped, tag = 'internal scratch']
  %s0 = inlined_call_operand.vmem [shape: f32[7,8], index: 0, kind: input, shape index: {}]
  %s1 = inlined_call_operand.vmem [shape: f32[8,32], index: 1, kind: input, shape index: {}]
  %s2 = inlined_call_operand.vmem [shape: f32[1,32], index: 2, kind: input, shape index: {}]
  %s3 = inlined_call_operand.vmem [shape: f32[32,32], index: 3, kind: input, shape index: {}]
  %s4 = inlined_call_operand.vmem [shape: f32[1,32], index: 4, kind: input, shape index: {}]
  %s5 = inlined_call_operand.vmem [shape: f32[32,32], index: 5, kind: input, shape index: {}]
  %s6 = inlined_call_operand.vmem [shape: f32[1,32], index: 6, kind: input, shape index: {}]
  %s7 = inlined_call_operand.vmem [shape: f32[7,32], index: 7, kind: output, shape index: {}]
  %s8 = sld [smem:[#allocation0]]
  $region38: #{frag_envelope_ql_forward.12} parent=0
    _
  %s10 = ssub.s32 1, %s8
  %s11 = scalar_select 0, %s10, %s8
  // Predicated region
  $region2: #{frag_envelope_ql_forward.12} parent=0 // pred_check
    _
  $region3: #{frag_envelope_ql_forward.12} parent=0 // pred_check_branch
    %13 = sbr.rel (0) target = $region5
  $region4: #{frag_envelope_ql_forward.12} parent=0 // pred_region
    _
  $region5: #{frag_envelope_ql_forward.12} parent=0 // pred_fallthru
    _
  // Predicated region
  $region6: #{frag_envelope_ql_forward.12} parent=0 // pred_check
    _
  $region7: #{frag_envelope_ql_forward.12} parent=0 // pred_check_branch
    %15 = sbr.rel (0) target = $region9
  $region8: #{frag_envelope_ql_forward.12} parent=0 // pred_region
    _
  $region9: #{frag_envelope_ql_forward.12} parent=0 // pred_fallthru
    _
  // Predicated region
  $region10: #{frag_envelope_ql_forward.12} parent=0 // pred_check
    _
  $region11: #{frag_envelope_ql_forward.12} parent=0 // pred_check_branch
    %17 = sbr.rel (0) target = $region13
  $region12: #{frag_envelope_ql_forward.12} parent=0 // pred_region
    _
  $region13: #{frag_envelope_ql_forward.12} parent=0 // pred_fallthru
    _
  // Predicated region
  $region14: #{frag_envelope_ql_forward.12} parent=0 // pred_check
    _
  $region15: #{frag_envelope_ql_forward.12} parent=0 // pred_check_branch
    %19 = sbr.rel (0) target = $region17
  $region16: #{frag_envelope_ql_forward.12} parent=0 // pred_region
    _
  $region17: #{frag_envelope_ql_forward.12} parent=0 // pred_fallthru
    _
  // Predicated region
  $region18: #{frag_envelope_ql_forward.12} parent=0 // pred_check
    _
  $region19: #{frag_envelope_ql_forward.12} parent=0 // pred_check_branch
    %21 = sbr.rel (0) target = $region21
  $region20: #{frag_envelope_ql_forward.12} parent=0 // pred_region
    _
  $region21: #{frag_envelope_ql_forward.12} parent=0 // pred_fallthru
    _
  // Predicated region
  $region22: #{frag_envelope_ql_forward.12} parent=0 // pred_check
    _
  $region23: #{frag_envelope_ql_forward.12} parent=0 // pred_check_branch
    %23 = sbr.rel (0) target = $region25
  $region24: #{frag_envelope_ql_forward.12} parent=0 // pred_region
    _
  $region25: #{frag_envelope_ql_forward.12} parent=0 // pred_fallthru
    _
  // Predicated region
  $region26: #{frag_envelope_ql_forward.12} parent=0 // pred_check
    _
  $region27: #{frag_envelope_ql_forward.12} parent=0 // pred_check_branch
    %25 = sbr.rel (0) target = $region29
  $region28: #{frag_envelope_ql_forward.12} parent=0 // pred_region
    _
  $region29: #{frag_envelope_ql_forward.12} parent=0 // pred_fallthru
    _
  %v26 = vld [vmem:[%s0] sm:$0x7f]
  %v27 = vld [vmem:[%s1] sm:$0xff]
  %v28 = vld [vmem:[%s2] sm:$0x1]
  %v30 = vlaneseq
  %v31 = vshrl.u32 %v30, 7
  %v32 = vsub.s32 0, %v31
  %v33 = vrot.slane %v28, %v32
  %vm35 = vcmask 64512
  %v37 = vsel %vm35, %v26, 0
  %39 = vmatprep.subr.mxu0 0.0
  %40 = vmatpush1.msra.mxu0 0.0
  %41 = vmatprep.subr.mxu0 0.0
  %42 = vmatpush1.msra.mxu0 0.0
  %43 = vmatprep.subr.mxu0 0.0
  %44 = vmatpush1.msra.mxu0 0.0
  %45 = vmatprep.subr.mxu0 0.0
  %46 = vmatpush1.msra.mxu0 0.0
  %47 = vmatprep.subr.mxu0 0.0
  %48 = vmatpush1.msra.mxu0 0.0
  %49 = vmatprep.subr.mxu0 0.0
  %50 = vmatpush1.msra.mxu0 0.0
  %51 = vmatprep.subr.mxu0 0.0
  %52 = vmatpush1.msra.mxu0 0.0
  %53 = vmatprep.subr.mxu0 0.0
  %54 = vmatpush1.msra.mxu0 0.0
  %55 = vmatprep.subr.mxu0 0.0
  %56 = vmatpush1.msra.mxu0 0.0
  %57 = vmatprep.subr.mxu0 0.0
  %58 = vmatpush1.msra.mxu0 0.0
  %59 = vmatprep.subr.mxu0 0.0
  %60 = vmatpush1.msra.mxu0 0.0
  %61 = vmatprep.subr.mxu0 0.0
  %62 = vmatpush1.msra.mxu0 0.0
  %63 = vmatprep.subr.mxu0 0.0
  %64 = vmatpush1.msra.mxu0 0.0
  %65 = vmatprep.subr.mxu0 0.0
  %66 = vmatpush1.msra.mxu0 0.0
  %67 = vmatprep.subr.mxu0 0.0
  %68 = vmatpush1.msra.mxu0 0.0
  %69 = vmatprep.subr.mxu0 0.0
  %70 = vmatpush1.msra.mxu0 %v27
  %71 = vmatprep.subr.mxu0 0.0
  %72 = vmatpush2.msra.mxu0 0.0
  %73 = vmatprep.subr.mxu0 0.0
  %74 = vmatpush2.msra.mxu0 0.0
  %75 = vmatprep.subr.mxu0 0.0
  %76 = vmatpush2.msra.mxu0 0.0
  %77 = vmatprep.subr.mxu0 0.0
  %78 = vmatpush2.msra.mxu0 0.0
  %79 = vmatprep.subr.mxu0 0.0
  %80 = vmatpush2.msra.mxu0 0.0
  %81 = vmatprep.subr.mxu0 0.0
  %82 = vmatpush2.msra.mxu0 0.0
  %83 = vmatprep.subr.mxu0 0.0
  %84 = vmatpush2.msra.mxu0 0.0
  %85 = vmatprep.subr.mxu0 0.0
  %86 = vmatpush2.msra.mxu0 0.0
  %87 = vmatprep.subr.mxu0 0.0
  %88 = vmatpush2.msra.mxu0 0.0
  %89 = vmatprep.subr.mxu0 0.0
  %90 = vmatpush2.msra.mxu0 0.0
  %91 = vmatprep.subr.mxu0 0.0
  %92 = vmatpush2.msra.mxu0 0.0
  %93 = vmatprep.subr.mxu0 0.0
  %94 = vmatpush2.msra.mxu0 0.0
  %95 = vmatprep.subr.mxu0 0.0
  %96 = vmatpush2.msra.mxu0 0.0
  %97 = vmatprep.subr.mxu0 0.0
  %98 = vmatpush2.msra.mxu0 0.0
  %99 = vmatprep.subr.mxu0 0.0
  %100 = vmatpush2.msra.mxu0 0.0
  %101 = vmatprep.subr.mxu0 0.0
  %102 = vmatpush2.msra.mxu0 0.0
  %103 = vmatprep.mubr.f32.mxu0 0.0
  %104 = vmatmul.mubr.f32.gmra.mxu0 %v37
  %v105 = vpop.f32.mrf.mxu0
  %v106 = vadd.f32 %v33, %v105
  %v107 = vpop.f32.mrf.mxu0
  %108 = vdwg.mxu0
  %vm109 = vcmp.gt.f32.partialorder %v106, 0.0
  %v110 = vmul.f32 %v106, 0.01
  %v111 = vsel %vm109, %v106, %v110
  %v112 = vld [vmem:[%s3] sm:$0xff]
  %v113 = vld [vmem:[%s3 + $0x8] sm:$0xff]
  %v114 = vld [vmem:[%s3 + $0x10] sm:$0xff]
  %v115 = vld [vmem:[%s3 + $0x18] sm:$0xff]
  %v116 = vld [vmem:[%s4] sm:$0x1]
  %v118 = vlaneseq
  %v119 = vshrl.u32 %v118, 7
  %v120 = vsub.s32 0, %v119
  %v121 = vrot.slane %v116, %v120
  %vm123 = vcmask 261120
  %v125 = vsel %vm123, %v111, 0
  %127 = vmatprep.subr.mxu0 0.0
  %128 = vmatpush1.msra.mxu0 0.0
  %129 = vmatprep.subr.mxu0 0.0
  %130 = vmatpush1.msra.mxu0 0.0
  %131 = vmatprep.subr.mxu0 0.0
  %132 = vmatpush1.msra.mxu0 0.0
  %133 = vmatprep.subr.mxu0 0.0
  %134 = vmatpush1.msra.mxu0 0.0
  %135 = vmatprep.subr.mxu0 0.0
  %136 = vmatpush1.msra.mxu0 0.0
  %137 = vmatprep.subr.mxu0 0.0
  %138 = vmatpush1.msra.mxu0 0.0
  %139 = vmatprep.subr.mxu0 0.0
  %140 = vmatpush1.msra.mxu0 0.0
  %141 = vmatprep.subr.mxu0 0.0
  %142 = vmatpush1.msra.mxu0 0.0
  %143 = vmatprep.subr.mxu0 0.0
  %144 = vmatpush1.msra.mxu0 0.0
  %145 = vmatprep.subr.mxu0 0.0
  %146 = vmatpush1.msra.mxu0 0.0
  %147 = vmatprep.subr.mxu0 0.0
  %148 = vmatpush1.msra.mxu0 0.0
  %149 = vmatprep.subr.mxu0 0.0
  %150 = vmatpush1.msra.mxu0 0.0
  %151 = vmatprep.subr.mxu0 0.0
  %152 = vmatpush1.msra.mxu0 %v115
  %153 = vmatprep.subr.mxu0 0.0
  %154 = vmatpush1.msra.mxu0 %v114
  %155 = vmatprep.subr.mxu0 0.0
  %156 = vmatpush1.msra.mxu0 %v113
  %157 = vmatprep.subr.mxu0 0.0
  %158 = vmatpush1.msra.mxu0 %v112
  %159 = vmatprep.subr.mxu0 0.0
  %160 = vmatpush2.msra.mxu0 0.0
  %161 = vmatprep.subr.mxu0 0.0
  %162 = vmatpush2.msra.mxu0 0.0
  %163 = vmatprep.subr.mxu0 0.0
  %164 = vmatpush2.msra.mxu0 0.0
  %165 = vmatprep.subr.mxu0 0.0
  %166 = vmatpush2.msra.mxu0 0.0
  %167 = vmatprep.subr.mxu0 0.0
  %168 = vmatpush2.msra.mxu0 0.0
  %169 = vmatprep.subr.mxu0 0.0
  %170 = vmatpush2.msra.mxu0 0.0
  %171 = vmatprep.subr.mxu0 0.0
  %172 = vmatpush2.msra.mxu0 0.0
  %173 = vmatprep.subr.mxu0 0.0
  %174 = vmatpush2.msra.mxu0 0.0
  %175 = vmatprep.subr.mxu0 0.0
  %176 = vmatpush2.msra.mxu0 0.0
  %177 = vmatprep.subr.mxu0 0.0
  %178 = vmatpush2.msra.mxu0 0.0
  %179 = vmatprep.subr.mxu0 0.0
  %180 = vmatpush2.msra.mxu0 0.0
  %181 = vmatprep.subr.mxu0 0.0
  %182 = vmatpush2.msra.mxu0 0.0
  %183 = vmatprep.subr.mxu0 0.0
  %184 = vmatpush2.msra.mxu0 0.0
  %185 = vmatprep.subr.mxu0 0.0
  %186 = vmatpush2.msra.mxu0 0.0
  %187 = vmatprep.subr.mxu0 0.0
  %188 = vmatpush2.msra.mxu0 0.0
  %189 = vmatprep.subr.mxu0 0.0
  %190 = vmatpush2.msra.mxu0 0.0
  %191 = vmatprep.mubr.f32.mxu0 0.0
  %192 = vmatmul.mubr.f32.gmra.mxu0 %v125
  %v193 = vpop.f32.mrf.mxu0
  %v194 = vadd.f32 %v121, %v193
  %v195 = vpop.f32.mrf.mxu0
  %196 = vdwg.mxu0
  %vm197 = vcmp.gt.f32.partialorder %v194, 0.0
  %v198 = vmul.f32 %v194, 0.01
  %v199 = vsel %vm197, %v194, %v198
  %v200 = vld [vmem:[%s5] sm:$0xff]
  %v201 = vld [vmem:[%s5 + $0x8] sm:$0xff]
  %v202 = vld [vmem:[%s5 + $0x10] sm:$0xff]
  %v203 = vld [vmem:[%s5 + $0x18] sm:$0xff]
  %v204 = vld [vmem:[%s6] sm:$0x1]
  %v206 = vlaneseq
  %v207 = vshrl.u32 %v206, 7
  %v208 = vsub.s32 0, %v207
  %v209 = vrot.slane %v204, %v208
  %v212 = vsel %vm123, %v199, 0
  %214 = vmatprep.subr.mxu0 0.0
  %215 = vmatpush1.msra.mxu0 0.0
  %216 = vmatprep.subr.mxu0 0.0
  %217 = vmatpush1.msra.mxu0 0.0
  %218 = vmatprep.subr.mxu0 0.0
  %219 = vmatpush1.msra.mxu0 0.0
  %220 = vmatprep.subr.mxu0 0.0
  %221 = vmatpush1.msra.mxu0 0.0
  %222 = vmatprep.subr.mxu0 0.0
  %223 = vmatpush1.msra.mxu0 0.0
  %224 = vmatprep.subr.mxu0 0.0
  %225 = vmatpush1.msra.mxu0 0.0
  %226 = vmatprep.subr.mxu0 0.0
  %227 = vmatpush1.msra.mxu0 0.0
  %228 = vmatprep.subr.mxu0 0.0
  %229 = vmatpush1.msra.mxu0 0.0
  %230 = vmatprep.subr.mxu0 0.0
  %231 = vmatpush1.msra.mxu0 0.0
  %232 = vmatprep.subr.mxu0 0.0
  %233 = vmatpush1.msra.mxu0 0.0
  %234 = vmatprep.subr.mxu0 0.0
  %235 = vmatpush1.msra.mxu0 0.0
  %236 = vmatprep.subr.mxu0 0.0
  %237 = vmatpush1.msra.mxu0 0.0
  %238 = vmatprep.subr.mxu0 0.0
  %239 = vmatpush1.msra.mxu0 %v203
  %240 = vmatprep.subr.mxu0 0.0
  %241 = vmatpush1.msra.mxu0 %v202
  %242 = vmatprep.subr.mxu0 0.0
  %243 = vmatpush1.msra.mxu0 %v201
  %244 = vmatprep.subr.mxu0 0.0
  %245 = vmatpush1.msra.mxu0 %v200
  %246 = vmatprep.subr.mxu0 0.0
  %247 = vmatpush2.msra.mxu0 0.0
  %248 = vmatprep.subr.mxu0 0.0
  %249 = vmatpush2.msra.mxu0 0.0
  %250 = vmatprep.subr.mxu0 0.0
  %251 = vmatpush2.msra.mxu0 0.0
  %252 = vmatprep.subr.mxu0 0.0
  %253 = vmatpush2.msra.mxu0 0.0
  %254 = vmatprep.subr.mxu0 0.0
  %255 = vmatpush2.msra.mxu0 0.0
  %256 = vmatprep.subr.mxu0 0.0
  %257 = vmatpush2.msra.mxu0 0.0
  %258 = vmatprep.subr.mxu0 0.0
  %259 = vmatpush2.msra.mxu0 0.0
  %260 = vmatprep.subr.mxu0 0.0
  %261 = vmatpush2.msra.mxu0 0.0
  %262 = vmatprep.subr.mxu0 0.0
  %263 = vmatpush2.msra.mxu0 0.0
  %264 = vmatprep.subr.mxu0 0.0
  %265 = vmatpush2.msra.mxu0 0.0
  %266 = vmatprep.subr.mxu0 0.0
  %267 = vmatpush2.msra.mxu0 0.0
  %268 = vmatprep.subr.mxu0 0.0
  %269 = vmatpush2.msra.mxu0 0.0
  %270 = vmatprep.subr.mxu0 0.0
  %271 = vmatpush2.msra.mxu0 0.0
  %272 = vmatprep.subr.mxu0 0.0
  %273 = vmatpush2.msra.mxu0 0.0
  %274 = vmatprep.subr.mxu0 0.0
  %275 = vmatpush2.msra.mxu0 0.0
  %276 = vmatprep.subr.mxu0 0.0
  %277 = vmatpush2.msra.mxu0 0.0
  %278 = vmatprep.mubr.f32.mxu0 0.0
  %279 = vmatmul.mubr.f32.gmra.mxu0 %v212
  %v280 = vpop.f32.mrf.mxu0
  %v281 = vadd.f32 %v209, %v280
  %v282 = vpop.f32.mrf.mxu0
  %283 = vdwg.mxu0
  %vm284 = vcmask 260096
  %285 = vst.msk [vmem:[%s7] sm:$0x7f] %vm284, %v281
  // Predicated region
  $region30: #{frag_envelope_ql_forward.12} parent=0 // pred_check
    _
  $region31: #{frag_envelope_ql_forward.12} parent=0 // pred_check_branch
    %287 = sbr.rel (0) target = $region33
  $region32: #{frag_envelope_ql_forward.12} parent=0 // pred_region
    _
  $region33: #{frag_envelope_ql_forward.12} parent=0 // pred_fallthru
    _
  // Predicated region
  $region34: #{frag_envelope_ql_forward.12} parent=0 // pred_check
    _
  $region35: #{frag_envelope_ql_forward.12} parent=0 // pred_check_branch
    %289 = sbr.rel (0) target = $region37
  $region36: #{frag_envelope_ql_forward.12} parent=0 // pred_region
    _
  $region37: #{frag_envelope_ql_forward.12} parent=0 // pred_fallthru
    _

// kernel: frag_envelope_ql_forward.14
$region0: #{frag_envelope_ql_forward.14}
  #allocation0 [shape = 'u32[]', space=smem, size = 0x4, offset = 0x4, fixed_abs, tag = 'smem constant byte address 0x4 - core index']
  #allocation1 [shape = 'u32[144,128]{1,0:T(1,128)}', space=vmem, size = 0x12000, scoped, tag = 'internal scratch']
  %s0 = inlined_call_operand.vmem [shape: f32[2,8], index: 0, kind: input, shape index: {}]
  %s1 = inlined_call_operand.vmem [shape: f32[8,32], index: 1, kind: input, shape index: {}]
  %s2 = inlined_call_operand.vmem [shape: f32[1,32], index: 2, kind: input, shape index: {}]
  %s3 = inlined_call_operand.vmem [shape: f32[32,32], index: 3, kind: input, shape index: {}]
  %s4 = inlined_call_operand.vmem [shape: f32[1,32], index: 4, kind: input, shape index: {}]
  %s5 = inlined_call_operand.vmem [shape: f32[32,32], index: 5, kind: input, shape index: {}]
  %s6 = inlined_call_operand.vmem [shape: f32[1,32], index: 6, kind: input, shape index: {}]
  %s7 = inlined_call_operand.vmem [shape: f32[2,32], index: 7, kind: output, shape index: {}]
  %s8 = sld [smem:[#allocation0]]
  $region38: #{frag_envelope_ql_forward.14} parent=0
    _
  %s10 = ssub.s32 1, %s8
  %s11 = scalar_select 0, %s10, %s8
  // Predicated region
  $region2: #{frag_envelope_ql_forward.14} parent=0 // pred_check
    _
  $region3: #{frag_envelope_ql_forward.14} parent=0 // pred_check_branch
    %13 = sbr.rel (0) target = $region5
  $region4: #{frag_envelope_ql_forward.14} parent=0 // pred_region
    _
  $region5: #{frag_envelope_ql_forward.14} parent=0 // pred_fallthru
    _
  // Predicated region
  $region6: #{frag_envelope_ql_forward.14} parent=0 // pred_check
    _
  $region7: #{frag_envelope_ql_forward.14} parent=0 // pred_check_branch
    %15 = sbr.rel (0) target = $region9
  $region8: #{frag_envelope_ql_forward.14} parent=0 // pred_region
    _
  $region9: #{frag_envelope_ql_forward.14} parent=0 // pred_fallthru
    _
  // Predicated region
  $region10: #{frag_envelope_ql_forward.14} parent=0 // pred_check
    _
  $region11: #{frag_envelope_ql_forward.14} parent=0 // pred_check_branch
    %17 = sbr.rel (0) target = $region13
  $region12: #{frag_envelope_ql_forward.14} parent=0 // pred_region
    _
  $region13: #{frag_envelope_ql_forward.14} parent=0 // pred_fallthru
    _
  // Predicated region
  $region14: #{frag_envelope_ql_forward.14} parent=0 // pred_check
    _
  $region15: #{frag_envelope_ql_forward.14} parent=0 // pred_check_branch
    %19 = sbr.rel (0) target = $region17
  $region16: #{frag_envelope_ql_forward.14} parent=0 // pred_region
    _
  $region17: #{frag_envelope_ql_forward.14} parent=0 // pred_fallthru
    _
  // Predicated region
  $region18: #{frag_envelope_ql_forward.14} parent=0 // pred_check
    _
  $region19: #{frag_envelope_ql_forward.14} parent=0 // pred_check_branch
    %21 = sbr.rel (0) target = $region21
  $region20: #{frag_envelope_ql_forward.14} parent=0 // pred_region
    _
  $region21: #{frag_envelope_ql_forward.14} parent=0 // pred_fallthru
    _
  // Predicated region
  $region22: #{frag_envelope_ql_forward.14} parent=0 // pred_check
    _
  $region23: #{frag_envelope_ql_forward.14} parent=0 // pred_check_branch
    %23 = sbr.rel (0) target = $region25
  $region24: #{frag_envelope_ql_forward.14} parent=0 // pred_region
    _
  $region25: #{frag_envelope_ql_forward.14} parent=0 // pred_fallthru
    _
  // Predicated region
  $region26: #{frag_envelope_ql_forward.14} parent=0 // pred_check
    _
  $region27: #{frag_envelope_ql_forward.14} parent=0 // pred_check_branch
    %25 = sbr.rel (0) target = $region29
  $region28: #{frag_envelope_ql_forward.14} parent=0 // pred_region
    _
  $region29: #{frag_envelope_ql_forward.14} parent=0 // pred_fallthru
    _
  %v26 = vld [vmem:[%s0] sm:$0x3]
  %v27 = vld [vmem:[%s1] sm:$0xff]
  %v28 = vld [vmem:[%s2] sm:$0x1]
  %v30 = vlaneseq
  %v31 = vshrl.u32 %v30, 7
  %v32 = vsub.s32 0, %v31
  %v33 = vrot.slane %v28, %v32
  %vm35 = vcmask 64512
  %v37 = vsel %vm35, %v26, 0
  %39 = vmatprep.subr.mxu0 0.0
  %40 = vmatpush1.msra.mxu0 0.0
  %41 = vmatprep.subr.mxu0 0.0
  %42 = vmatpush1.msra.mxu0 0.0
  %43 = vmatprep.subr.mxu0 0.0
  %44 = vmatpush1.msra.mxu0 0.0
  %45 = vmatprep.subr.mxu0 0.0
  %46 = vmatpush1.msra.mxu0 0.0
  %47 = vmatprep.subr.mxu0 0.0
  %48 = vmatpush1.msra.mxu0 0.0
  %49 = vmatprep.subr.mxu0 0.0
  %50 = vmatpush1.msra.mxu0 0.0
  %51 = vmatprep.subr.mxu0 0.0
  %52 = vmatpush1.msra.mxu0 0.0
  %53 = vmatprep.subr.mxu0 0.0
  %54 = vmatpush1.msra.mxu0 0.0
  %55 = vmatprep.subr.mxu0 0.0
  %56 = vmatpush1.msra.mxu0 0.0
  %57 = vmatprep.subr.mxu0 0.0
  %58 = vmatpush1.msra.mxu0 0.0
  %59 = vmatprep.subr.mxu0 0.0
  %60 = vmatpush1.msra.mxu0 0.0
  %61 = vmatprep.subr.mxu0 0.0
  %62 = vmatpush1.msra.mxu0 0.0
  %63 = vmatprep.subr.mxu0 0.0
  %64 = vmatpush1.msra.mxu0 0.0
  %65 = vmatprep.subr.mxu0 0.0
  %66 = vmatpush1.msra.mxu0 0.0
  %67 = vmatprep.subr.mxu0 0.0
  %68 = vmatpush1.msra.mxu0 0.0
  %69 = vmatprep.subr.mxu0 0.0
  %70 = vmatpush1.msra.mxu0 %v27
  %71 = vmatprep.subr.mxu0 0.0
  %72 = vmatpush2.msra.mxu0 0.0
  %73 = vmatprep.subr.mxu0 0.0
  %74 = vmatpush2.msra.mxu0 0.0
  %75 = vmatprep.subr.mxu0 0.0
  %76 = vmatpush2.msra.mxu0 0.0
  %77 = vmatprep.subr.mxu0 0.0
  %78 = vmatpush2.msra.mxu0 0.0
  %79 = vmatprep.subr.mxu0 0.0
  %80 = vmatpush2.msra.mxu0 0.0
  %81 = vmatprep.subr.mxu0 0.0
  %82 = vmatpush2.msra.mxu0 0.0
  %83 = vmatprep.subr.mxu0 0.0
  %84 = vmatpush2.msra.mxu0 0.0
  %85 = vmatprep.subr.mxu0 0.0
  %86 = vmatpush2.msra.mxu0 0.0
  %87 = vmatprep.subr.mxu0 0.0
  %88 = vmatpush2.msra.mxu0 0.0
  %89 = vmatprep.subr.mxu0 0.0
  %90 = vmatpush2.msra.mxu0 0.0
  %91 = vmatprep.subr.mxu0 0.0
  %92 = vmatpush2.msra.mxu0 0.0
  %93 = vmatprep.subr.mxu0 0.0
  %94 = vmatpush2.msra.mxu0 0.0
  %95 = vmatprep.subr.mxu0 0.0
  %96 = vmatpush2.msra.mxu0 0.0
  %97 = vmatprep.subr.mxu0 0.0
  %98 = vmatpush2.msra.mxu0 0.0
  %99 = vmatprep.subr.mxu0 0.0
  %100 = vmatpush2.msra.mxu0 0.0
  %101 = vmatprep.subr.mxu0 0.0
  %102 = vmatpush2.msra.mxu0 0.0
  %103 = vmatprep.mubr.f32.mxu0 0.0
  %104 = vmatmul.mubr.f32.gmra.mxu0 %v37
  %v105 = vpop.f32.mrf.mxu0
  %v106 = vadd.f32 %v33, %v105
  %v107 = vpop.f32.mrf.mxu0
  %108 = vdwg.mxu0
  %vm109 = vcmp.gt.f32.partialorder %v106, 0.0
  %v110 = vmul.f32 %v106, 0.01
  %v111 = vsel %vm109, %v106, %v110
  %v112 = vld [vmem:[%s3] sm:$0xff]
  %v113 = vld [vmem:[%s3 + $0x8] sm:$0xff]
  %v114 = vld [vmem:[%s3 + $0x10] sm:$0xff]
  %v115 = vld [vmem:[%s3 + $0x18] sm:$0xff]
  %v116 = vld [vmem:[%s4] sm:$0x1]
  %v118 = vlaneseq
  %v119 = vshrl.u32 %v118, 7
  %v120 = vsub.s32 0, %v119
  %v121 = vrot.slane %v116, %v120
  %vm123 = vcmask 261120
  %v125 = vsel %vm123, %v111, 0
  %127 = vmatprep.subr.mxu0 0.0
  %128 = vmatpush1.msra.mxu0 0.0
  %129 = vmatprep.subr.mxu0 0.0
  %130 = vmatpush1.msra.mxu0 0.0
  %131 = vmatprep.subr.mxu0 0.0
  %132 = vmatpush1.msra.mxu0 0.0
  %133 = vmatprep.subr.mxu0 0.0
  %134 = vmatpush1.msra.mxu0 0.0
  %135 = vmatprep.subr.mxu0 0.0
  %136 = vmatpush1.msra.mxu0 0.0
  %137 = vmatprep.subr.mxu0 0.0
  %138 = vmatpush1.msra.mxu0 0.0
  %139 = vmatprep.subr.mxu0 0.0
  %140 = vmatpush1.msra.mxu0 0.0
  %141 = vmatprep.subr.mxu0 0.0
  %142 = vmatpush1.msra.mxu0 0.0
  %143 = vmatprep.subr.mxu0 0.0
  %144 = vmatpush1.msra.mxu0 0.0
  %145 = vmatprep.subr.mxu0 0.0
  %146 = vmatpush1.msra.mxu0 0.0
  %147 = vmatprep.subr.mxu0 0.0
  %148 = vmatpush1.msra.mxu0 0.0
  %149 = vmatprep.subr.mxu0 0.0
  %150 = vmatpush1.msra.mxu0 0.0
  %151 = vmatprep.subr.mxu0 0.0
  %152 = vmatpush1.msra.mxu0 %v115
  %153 = vmatprep.subr.mxu0 0.0
  %154 = vmatpush1.msra.mxu0 %v114
  %155 = vmatprep.subr.mxu0 0.0
  %156 = vmatpush1.msra.mxu0 %v113
  %157 = vmatprep.subr.mxu0 0.0
  %158 = vmatpush1.msra.mxu0 %v112
  %159 = vmatprep.subr.mxu0 0.0
  %160 = vmatpush2.msra.mxu0 0.0
  %161 = vmatprep.subr.mxu0 0.0
  %162 = vmatpush2.msra.mxu0 0.0
  %163 = vmatprep.subr.mxu0 0.0
  %164 = vmatpush2.msra.mxu0 0.0
  %165 = vmatprep.subr.mxu0 0.0
  %166 = vmatpush2.msra.mxu0 0.0
  %167 = vmatprep.subr.mxu0 0.0
  %168 = vmatpush2.msra.mxu0 0.0
  %169 = vmatprep.subr.mxu0 0.0
  %170 = vmatpush2.msra.mxu0 0.0
  %171 = vmatprep.subr.mxu0 0.0
  %172 = vmatpush2.msra.mxu0 0.0
  %173 = vmatprep.subr.mxu0 0.0
  %174 = vmatpush2.msra.mxu0 0.0
  %175 = vmatprep.subr.mxu0 0.0
  %176 = vmatpush2.msra.mxu0 0.0
  %177 = vmatprep.subr.mxu0 0.0
  %178 = vmatpush2.msra.mxu0 0.0
  %179 = vmatprep.subr.mxu0 0.0
  %180 = vmatpush2.msra.mxu0 0.0
  %181 = vmatprep.subr.mxu0 0.0
  %182 = vmatpush2.msra.mxu0 0.0
  %183 = vmatprep.subr.mxu0 0.0
  %184 = vmatpush2.msra.mxu0 0.0
  %185 = vmatprep.subr.mxu0 0.0
  %186 = vmatpush2.msra.mxu0 0.0
  %187 = vmatprep.subr.mxu0 0.0
  %188 = vmatpush2.msra.mxu0 0.0
  %189 = vmatprep.subr.mxu0 0.0
  %190 = vmatpush2.msra.mxu0 0.0
  %191 = vmatprep.mubr.f32.mxu0 0.0
  %192 = vmatmul.mubr.f32.gmra.mxu0 %v125
  %v193 = vpop.f32.mrf.mxu0
  %v194 = vadd.f32 %v121, %v193
  %v195 = vpop.f32.mrf.mxu0
  %196 = vdwg.mxu0
  %vm197 = vcmp.gt.f32.partialorder %v194, 0.0
  %v198 = vmul.f32 %v194, 0.01
  %v199 = vsel %vm197, %v194, %v198
  %v200 = vld [vmem:[%s5] sm:$0xff]
  %v201 = vld [vmem:[%s5 + $0x8] sm:$0xff]
  %v202 = vld [vmem:[%s5 + $0x10] sm:$0xff]
  %v203 = vld [vmem:[%s5 + $0x18] sm:$0xff]
  %v204 = vld [vmem:[%s6] sm:$0x1]
  %v206 = vlaneseq
  %v207 = vshrl.u32 %v206, 7
  %v208 = vsub.s32 0, %v207
  %v209 = vrot.slane %v204, %v208
  %v212 = vsel %vm123, %v199, 0
  %214 = vmatprep.subr.mxu0 0.0
  %215 = vmatpush1.msra.mxu0 0.0
  %216 = vmatprep.subr.mxu0 0.0
  %217 = vmatpush1.msra.mxu0 0.0
  %218 = vmatprep.subr.mxu0 0.0
  %219 = vmatpush1.msra.mxu0 0.0
  %220 = vmatprep.subr.mxu0 0.0
  %221 = vmatpush1.msra.mxu0 0.0
  %222 = vmatprep.subr.mxu0 0.0
  %223 = vmatpush1.msra.mxu0 0.0
  %224 = vmatprep.subr.mxu0 0.0
  %225 = vmatpush1.msra.mxu0 0.0
  %226 = vmatprep.subr.mxu0 0.0
  %227 = vmatpush1.msra.mxu0 0.0
  %228 = vmatprep.subr.mxu0 0.0
  %229 = vmatpush1.msra.mxu0 0.0
  %230 = vmatprep.subr.mxu0 0.0
  %231 = vmatpush1.msra.mxu0 0.0
  %232 = vmatprep.subr.mxu0 0.0
  %233 = vmatpush1.msra.mxu0 0.0
  %234 = vmatprep.subr.mxu0 0.0
  %235 = vmatpush1.msra.mxu0 0.0
  %236 = vmatprep.subr.mxu0 0.0
  %237 = vmatpush1.msra.mxu0 0.0
  %238 = vmatprep.subr.mxu0 0.0
  %239 = vmatpush1.msra.mxu0 %v203
  %240 = vmatprep.subr.mxu0 0.0
  %241 = vmatpush1.msra.mxu0 %v202
  %242 = vmatprep.subr.mxu0 0.0
  %243 = vmatpush1.msra.mxu0 %v201
  %244 = vmatprep.subr.mxu0 0.0
  %245 = vmatpush1.msra.mxu0 %v200
  %246 = vmatprep.subr.mxu0 0.0
  %247 = vmatpush2.msra.mxu0 0.0
  %248 = vmatprep.subr.mxu0 0.0
  %249 = vmatpush2.msra.mxu0 0.0
  %250 = vmatprep.subr.mxu0 0.0
  %251 = vmatpush2.msra.mxu0 0.0
  %252 = vmatprep.subr.mxu0 0.0
  %253 = vmatpush2.msra.mxu0 0.0
  %254 = vmatprep.subr.mxu0 0.0
  %255 = vmatpush2.msra.mxu0 0.0
  %256 = vmatprep.subr.mxu0 0.0
  %257 = vmatpush2.msra.mxu0 0.0
  %258 = vmatprep.subr.mxu0 0.0
  %259 = vmatpush2.msra.mxu0 0.0
  %260 = vmatprep.subr.mxu0 0.0
  %261 = vmatpush2.msra.mxu0 0.0
  %262 = vmatprep.subr.mxu0 0.0
  %263 = vmatpush2.msra.mxu0 0.0
  %264 = vmatprep.subr.mxu0 0.0
  %265 = vmatpush2.msra.mxu0 0.0
  %266 = vmatprep.subr.mxu0 0.0
  %267 = vmatpush2.msra.mxu0 0.0
  %268 = vmatprep.subr.mxu0 0.0
  %269 = vmatpush2.msra.mxu0 0.0
  %270 = vmatprep.subr.mxu0 0.0
  %271 = vmatpush2.msra.mxu0 0.0
  %272 = vmatprep.subr.mxu0 0.0
  %273 = vmatpush2.msra.mxu0 0.0
  %274 = vmatprep.subr.mxu0 0.0
  %275 = vmatpush2.msra.mxu0 0.0
  %276 = vmatprep.subr.mxu0 0.0
  %277 = vmatpush2.msra.mxu0 0.0
  %278 = vmatprep.mubr.f32.mxu0 0.0
  %279 = vmatmul.mubr.f32.gmra.mxu0 %v212
  %v280 = vpop.f32.mrf.mxu0
  %v281 = vadd.f32 %v209, %v280
  %v282 = vpop.f32.mrf.mxu0
  %283 = vdwg.mxu0
  %vm284 = vcmask 254976
  %285 = vst.msk [vmem:[%s7] sm:$0x3] %vm284, %v281
  // Predicated region
  $region30: #{frag_envelope_ql_forward.14} parent=0 // pred_check
    _
  $region31: #{frag_envelope_ql_forward.14} parent=0 // pred_check_branch
    %287 = sbr.rel (0) target = $region33
  $region32: #{frag_envelope_ql_forward.14} parent=0 // pred_region
    _
  $region33: #{frag_envelope_ql_forward.14} parent=0 // pred_fallthru
    _
  // Predicated region
  $region34: #{frag_envelope_ql_forward.14} parent=0 // pred_check
    _
  $region35: #{frag_envelope_ql_forward.14} parent=0 // pred_check_branch
    %289 = sbr.rel (0) target = $region37
  $region36: #{frag_envelope_ql_forward.14} parent=0 // pred_region
    _
  $region37: #{frag_envelope_ql_forward.14} parent=0 // pred_fallthru
    _

// kernel: frag_envelope_ql_forward.13
$region0: #{frag_envelope_ql_forward.13}
  #allocation0 [shape = 'u32[]', space=smem, size = 0x4, offset = 0x4, fixed_abs, tag = 'smem constant byte address 0x4 - core index']
  #allocation1 [shape = 'u32[144,128]{1,0:T(1,128)}', space=vmem, size = 0x12000, scoped, tag = 'internal scratch']
  %s0 = inlined_call_operand.vmem [shape: f32[12,4], index: 0, kind: input, shape index: {}]
  %s1 = inlined_call_operand.vmem [shape: f32[4,32], index: 1, kind: input, shape index: {}]
  %s2 = inlined_call_operand.vmem [shape: f32[1,32], index: 2, kind: input, shape index: {}]
  %s3 = inlined_call_operand.vmem [shape: f32[32,32], index: 3, kind: input, shape index: {}]
  %s4 = inlined_call_operand.vmem [shape: f32[1,32], index: 4, kind: input, shape index: {}]
  %s5 = inlined_call_operand.vmem [shape: f32[32,32], index: 5, kind: input, shape index: {}]
  %s6 = inlined_call_operand.vmem [shape: f32[1,32], index: 6, kind: input, shape index: {}]
  %s7 = inlined_call_operand.vmem [shape: f32[12,32], index: 7, kind: output, shape index: {}]
  %s8 = sld [smem:[#allocation0]]
  $region38: #{frag_envelope_ql_forward.13} parent=0
    _
  %s10 = ssub.s32 1, %s8
  %s11 = scalar_select 0, %s10, %s8
  // Predicated region
  $region2: #{frag_envelope_ql_forward.13} parent=0 // pred_check
    _
  $region3: #{frag_envelope_ql_forward.13} parent=0 // pred_check_branch
    %13 = sbr.rel (0) target = $region5
  $region4: #{frag_envelope_ql_forward.13} parent=0 // pred_region
    _
  $region5: #{frag_envelope_ql_forward.13} parent=0 // pred_fallthru
    _
  // Predicated region
  $region6: #{frag_envelope_ql_forward.13} parent=0 // pred_check
    _
  $region7: #{frag_envelope_ql_forward.13} parent=0 // pred_check_branch
    %15 = sbr.rel (0) target = $region9
  $region8: #{frag_envelope_ql_forward.13} parent=0 // pred_region
    _
  $region9: #{frag_envelope_ql_forward.13} parent=0 // pred_fallthru
    _
  // Predicated region
  $region10: #{frag_envelope_ql_forward.13} parent=0 // pred_check
    _
  $region11: #{frag_envelope_ql_forward.13} parent=0 // pred_check_branch
    %17 = sbr.rel (0) target = $region13
  $region12: #{frag_envelope_ql_forward.13} parent=0 // pred_region
    _
  $region13: #{frag_envelope_ql_forward.13} parent=0 // pred_fallthru
    _
  // Predicated region
  $region14: #{frag_envelope_ql_forward.13} parent=0 // pred_check
    _
  $region15: #{frag_envelope_ql_forward.13} parent=0 // pred_check_branch
    %19 = sbr.rel (0) target = $region17
  $region16: #{frag_envelope_ql_forward.13} parent=0 // pred_region
    _
  $region17: #{frag_envelope_ql_forward.13} parent=0 // pred_fallthru
    _
  // Predicated region
  $region18: #{frag_envelope_ql_forward.13} parent=0 // pred_check
    _
  $region19: #{frag_envelope_ql_forward.13} parent=0 // pred_check_branch
    %21 = sbr.rel (0) target = $region21
  $region20: #{frag_envelope_ql_forward.13} parent=0 // pred_region
    _
  $region21: #{frag_envelope_ql_forward.13} parent=0 // pred_fallthru
    _
  // Predicated region
  $region22: #{frag_envelope_ql_forward.13} parent=0 // pred_check
    _
  $region23: #{frag_envelope_ql_forward.13} parent=0 // pred_check_branch
    %23 = sbr.rel (0) target = $region25
  $region24: #{frag_envelope_ql_forward.13} parent=0 // pred_region
    _
  $region25: #{frag_envelope_ql_forward.13} parent=0 // pred_fallthru
    _
  // Predicated region
  $region26: #{frag_envelope_ql_forward.13} parent=0 // pred_check
    _
  $region27: #{frag_envelope_ql_forward.13} parent=0 // pred_check_branch
    %25 = sbr.rel (0) target = $region29
  $region28: #{frag_envelope_ql_forward.13} parent=0 // pred_region
    _
  $region29: #{frag_envelope_ql_forward.13} parent=0 // pred_fallthru
    _
  %v26 = vld [vmem:[%s0] sm:$0xff]
  %v27 = vld [vmem:[%s0 + $0x8] sm:$0xf]
  %v28 = vld [vmem:[%s1] sm:$0xf]
  %v29 = vld [vmem:[%s2] sm:$0x1]
  %v31 = vlaneseq
  %v32 = vshrl.u32 %v31, 7
  %v33 = vsub.s32 0, %v32
  %v34 = vrot.slane %v29, %v33
  %vm36 = vcmask 31744
  %v38 = vsel %vm36, %v26, 0
  %v41 = vsel %vm36, %v27, 0
  %vm43 = vcmask 1043456
  %v45 = vsel %vm43, %v28, 0
  %47 = vmatprep.subr.mxu0 0.0
  %48 = vmatpush1.msra.mxu0 0.0
  %49 = vmatprep.subr.mxu0 0.0
  %50 = vmatpush1.msra.mxu0 0.0
  %51 = vmatprep.subr.mxu0 0.0
  %52 = vmatpush1.msra.mxu0 0.0
  %53 = vmatprep.subr.mxu0 0.0
  %54 = vmatpush1.msra.mxu0 0.0
  %55 = vmatprep.subr.mxu0 0.0
  %56 = vmatpush1.msra.mxu0 0.0
  %57 = vmatprep.subr.mxu0 0.0
  %58 = vmatpush1.msra.mxu0 0.0
  %59 = vmatprep.subr.mxu0 0.0
  %60 = vmatpush1.msra.mxu0 0.0
  %61 = vmatprep.subr.mxu0 0.0
  %62 = vmatpush1.msra.mxu0 0.0
  %63 = vmatprep.subr.mxu0 0.0
  %64 = vmatpush1.msra.mxu0 0.0
  %65 = vmatprep.subr.mxu0 0.0
  %66 = vmatpush1.msra.mxu0 0.0
  %67 = vmatprep.subr.mxu0 0.0
  %68 = vmatpush1.msra.mxu0 0.0
  %69 = vmatprep.subr.mxu0 0.0
  %70 = vmatpush1.msra.mxu0 0.0
  %71 = vmatprep.subr.mxu0 0.0
  %72 = vmatpush1.msra.mxu0 0.0
  %73 = vmatprep.subr.mxu0 0.0
  %74 = vmatpush1.msra.mxu0 0.0
  %75 = vmatprep.subr.mxu0 0.0
  %76 = vmatpush1.msra.mxu0 0.0
  %77 = vmatprep.subr.mxu0 0.0
  %78 = vmatpush1.msra.mxu0 %v45
  %79 = vmatprep.subr.mxu0 0.0
  %80 = vmatpush2.msra.mxu0 0.0
  %81 = vmatprep.subr.mxu0 0.0
  %82 = vmatpush2.msra.mxu0 0.0
  %83 = vmatprep.subr.mxu0 0.0
  %84 = vmatpush2.msra.mxu0 0.0
  %85 = vmatprep.subr.mxu0 0.0
  %86 = vmatpush2.msra.mxu0 0.0
  %87 = vmatprep.subr.mxu0 0.0
  %88 = vmatpush2.msra.mxu0 0.0
  %89 = vmatprep.subr.mxu0 0.0
  %90 = vmatpush2.msra.mxu0 0.0
  %91 = vmatprep.subr.mxu0 0.0
  %92 = vmatpush2.msra.mxu0 0.0
  %93 = vmatprep.subr.mxu0 0.0
  %94 = vmatpush2.msra.mxu0 0.0
  %95 = vmatprep.subr.mxu0 0.0
  %96 = vmatpush2.msra.mxu0 0.0
  %97 = vmatprep.subr.mxu0 0.0
  %98 = vmatpush2.msra.mxu0 0.0
  %99 = vmatprep.subr.mxu0 0.0
  %100 = vmatpush2.msra.mxu0 0.0
  %101 = vmatprep.subr.mxu0 0.0
  %102 = vmatpush2.msra.mxu0 0.0
  %103 = vmatprep.subr.mxu0 0.0
  %104 = vmatpush2.msra.mxu0 0.0
  %105 = vmatprep.subr.mxu0 0.0
  %106 = vmatpush2.msra.mxu0 0.0
  %107 = vmatprep.subr.mxu0 0.0
  %108 = vmatpush2.msra.mxu0 0.0
  %109 = vmatprep.subr.mxu0 0.0
  %110 = vmatpush2.msra.mxu0 0.0
  %111 = vmatprep.mubr.f32.mxu0 0.0
  %112 = vmatmul.mubr.f32.gmra.mxu0 %v38
  %v113 = vpop.f32.mrf.mxu0
  %v114 = vadd.f32 %v34, %v113
  %v115 = vpop.f32.mrf.mxu0
  %116 = vmatprep.mubr.f32.mxu0 0.0
  %117 = vmatmul.mubr.f32.gmra.mxu0 %v41
  %v118 = vpop.f32.mrf.mxu0
  %v119 = vadd.f32 %v34, %v118
  %v120 = vpop.f32.mrf.mxu0
  %121 = vdwg.mxu0
  %vm122 = vcmp.gt.f32.partialorder %v114, 0.0
  %vm123 = vcmp.gt.f32.partialorder %v119, 0.0
  %v124 = vmul.f32 %v114, 0.01
  %v125 = vmul.f32 %v119, 0.01
  %v126 = vsel %vm122, %v114, %v124
  %v127 = vsel %vm123, %v119, %v125
  %v128 = vld [vmem:[%s3] sm:$0xff]
  %v129 = vld [vmem:[%s3 + $0x8] sm:$0xff]
  %v130 = vld [vmem:[%s3 + $0x10] sm:$0xff]
  %v131 = vld [vmem:[%s3 + $0x18] sm:$0xff]
  %v132 = vld [vmem:[%s4] sm:$0x1]
  %v134 = vlaneseq
  %v135 = vshrl.u32 %v134, 7
  %v136 = vsub.s32 0, %v135
  %v137 = vrot.slane %v132, %v136
  %vm139 = vcmask 261120
  %v141 = vsel %vm139, %v126, 0
  %v144 = vsel %vm139, %v127, 0
  %146 = vmatprep.subr.mxu0 0.0
  %147 = vmatpush1.msra.mxu0 0.0
  %148 = vmatprep.subr.mxu0 0.0
  %149 = vmatpush1.msra.mxu0 0.0
  %150 = vmatprep.subr.mxu0 0.0
  %151 = vmatpush1.msra.mxu0 0.0
  %152 = vmatprep.subr.mxu0 0.0
  %153 = vmatpush1.msra.mxu0 0.0
  %154 = vmatprep.subr.mxu0 0.0
  %155 = vmatpush1.msra.mxu0 0.0
  %156 = vmatprep.subr.mxu0 0.0
  %157 = vmatpush1.msra.mxu0 0.0
  %158 = vmatprep.subr.mxu0 0.0
  %159 = vmatpush1.msra.mxu0 0.0
  %160 = vmatprep.subr.mxu0 0.0
  %161 = vmatpush1.msra.mxu0 0.0
  %162 = vmatprep.subr.mxu0 0.0
  %163 = vmatpush1.msra.mxu0 0.0
  %164 = vmatprep.subr.mxu0 0.0
  %165 = vmatpush1.msra.mxu0 0.0
  %166 = vmatprep.subr.mxu0 0.0
  %167 = vmatpush1.msra.mxu0 0.0
  %168 = vmatprep.subr.mxu0 0.0
  %169 = vmatpush1.msra.mxu0 0.0
  %170 = vmatprep.subr.mxu0 0.0
  %171 = vmatpush1.msra.mxu0 %v131
  %172 = vmatprep.subr.mxu0 0.0
  %173 = vmatpush1.msra.mxu0 %v130
  %174 = vmatprep.subr.mxu0 0.0
  %175 = vmatpush1.msra.mxu0 %v129
  %176 = vmatprep.subr.mxu0 0.0
  %177 = vmatpush1.msra.mxu0 %v128
  %178 = vmatprep.subr.mxu0 0.0
  %179 = vmatpush2.msra.mxu0 0.0
  %180 = vmatprep.subr.mxu0 0.0
  %181 = vmatpush2.msra.mxu0 0.0
  %182 = vmatprep.subr.mxu0 0.0
  %183 = vmatpush2.msra.mxu0 0.0
  %184 = vmatprep.subr.mxu0 0.0
  %185 = vmatpush2.msra.mxu0 0.0
  %186 = vmatprep.subr.mxu0 0.0
  %187 = vmatpush2.msra.mxu0 0.0
  %188 = vmatprep.subr.mxu0 0.0
  %189 = vmatpush2.msra.mxu0 0.0
  %190 = vmatprep.subr.mxu0 0.0
  %191 = vmatpush2.msra.mxu0 0.0
  %192 = vmatprep.subr.mxu0 0.0
  %193 = vmatpush2.msra.mxu0 0.0
  %194 = vmatprep.subr.mxu0 0.0
  %195 = vmatpush2.msra.mxu0 0.0
  %196 = vmatprep.subr.mxu0 0.0
  %197 = vmatpush2.msra.mxu0 0.0
  %198 = vmatprep.subr.mxu0 0.0
  %199 = vmatpush2.msra.mxu0 0.0
  %200 = vmatprep.subr.mxu0 0.0
  %201 = vmatpush2.msra.mxu0 0.0
  %202 = vmatprep.subr.mxu0 0.0
  %203 = vmatpush2.msra.mxu0 0.0
  %204 = vmatprep.subr.mxu0 0.0
  %205 = vmatpush2.msra.mxu0 0.0
  %206 = vmatprep.subr.mxu0 0.0
  %207 = vmatpush2.msra.mxu0 0.0
  %208 = vmatprep.subr.mxu0 0.0
  %209 = vmatpush2.msra.mxu0 0.0
  %210 = vmatprep.mubr.f32.mxu0 0.0
  %211 = vmatmul.mubr.f32.gmra.mxu0 %v141
  %v212 = vpop.f32.mrf.mxu0
  %v213 = vadd.f32 %v137, %v212
  %v214 = vpop.f32.mrf.mxu0
  %215 = vmatprep.mubr.f32.mxu0 0.0
  %216 = vmatmul.mubr.f32.gmra.mxu0 %v144
  %v217 = vpop.f32.mrf.mxu0
  %v218 = vadd.f32 %v137, %v217
  %v219 = vpop.f32.mrf.mxu0
  %220 = vdwg.mxu0
  %vm221 = vcmp.gt.f32.partialorder %v213, 0.0
  %vm222 = vcmp.gt.f32.partialorder %v218, 0.0
  %v223 = vmul.f32 %v213, 0.01
  %v224 = vmul.f32 %v218, 0.01
  %v225 = vsel %vm221, %v213, %v223
  %v226 = vsel %vm222, %v218, %v224
  %v227 = vld [vmem:[%s5] sm:$0xff]
  %v228 = vld [vmem:[%s5 + $0x8] sm:$0xff]
  %v229 = vld [vmem:[%s5 + $0x10] sm:$0xff]
  %v230 = vld [vmem:[%s5 + $0x18] sm:$0xff]
  %v231 = vld [vmem:[%s6] sm:$0x1]
  %v233 = vlaneseq
  %v234 = vshrl.u32 %v233, 7
  %v235 = vsub.s32 0, %v234
  %v236 = vrot.slane %v231, %v235
  %v239 = vsel %vm139, %v225, 0
  %v242 = vsel %vm139, %v226, 0
  %244 = vmatprep.subr.mxu0 0.0
  %245 = vmatpush1.msra.mxu0 0.0
  %246 = vmatprep.subr.mxu0 0.0
  %247 = vmatpush1.msra.mxu0 0.0
  %248 = vmatprep.subr.mxu0 0.0
  %249 = vmatpush1.msra.mxu0 0.0
  %250 = vmatprep.subr.mxu0 0.0
  %251 = vmatpush1.msra.mxu0 0.0
  %252 = vmatprep.subr.mxu0 0.0
  %253 = vmatpush1.msra.mxu0 0.0
  %254 = vmatprep.subr.mxu0 0.0
  %255 = vmatpush1.msra.mxu0 0.0
  %256 = vmatprep.subr.mxu0 0.0
  %257 = vmatpush1.msra.mxu0 0.0
  %258 = vmatprep.subr.mxu0 0.0
  %259 = vmatpush1.msra.mxu0 0.0
  %260 = vmatprep.subr.mxu0 0.0
  %261 = vmatpush1.msra.mxu0 0.0
  %262 = vmatprep.subr.mxu0 0.0
  %263 = vmatpush1.msra.mxu0 0.0
  %264 = vmatprep.subr.mxu0 0.0
  %265 = vmatpush1.msra.mxu0 0.0
  %266 = vmatprep.subr.mxu0 0.0
  %267 = vmatpush1.msra.mxu0 0.0
  %268 = vmatprep.subr.mxu0 0.0
  %269 = vmatpush1.msra.mxu0 %v230
  %270 = vmatprep.subr.mxu0 0.0
  %271 = vmatpush1.msra.mxu0 %v229
  %272 = vmatprep.subr.mxu0 0.0
  %273 = vmatpush1.msra.mxu0 %v228
  %274 = vmatprep.subr.mxu0 0.0
  %275 = vmatpush1.msra.mxu0 %v227
  %276 = vmatprep.subr.mxu0 0.0
  %277 = vmatpush2.msra.mxu0 0.0
  %278 = vmatprep.subr.mxu0 0.0
  %279 = vmatpush2.msra.mxu0 0.0
  %280 = vmatprep.subr.mxu0 0.0
  %281 = vmatpush2.msra.mxu0 0.0
  %282 = vmatprep.subr.mxu0 0.0
  %283 = vmatpush2.msra.mxu0 0.0
  %284 = vmatprep.subr.mxu0 0.0
  %285 = vmatpush2.msra.mxu0 0.0
  %286 = vmatprep.subr.mxu0 0.0
  %287 = vmatpush2.msra.mxu0 0.0
  %288 = vmatprep.subr.mxu0 0.0
  %289 = vmatpush2.msra.mxu0 0.0
  %290 = vmatprep.subr.mxu0 0.0
  %291 = vmatpush2.msra.mxu0 0.0
  %292 = vmatprep.subr.mxu0 0.0
  %293 = vmatpush2.msra.mxu0 0.0
  %294 = vmatprep.subr.mxu0 0.0
  %295 = vmatpush2.msra.mxu0 0.0
  %296 = vmatprep.subr.mxu0 0.0
  %297 = vmatpush2.msra.mxu0 0.0
  %298 = vmatprep.subr.mxu0 0.0
  %299 = vmatpush2.msra.mxu0 0.0
  %300 = vmatprep.subr.mxu0 0.0
  %301 = vmatpush2.msra.mxu0 0.0
  %302 = vmatprep.subr.mxu0 0.0
  %303 = vmatpush2.msra.mxu0 0.0
  %304 = vmatprep.subr.mxu0 0.0
  %305 = vmatpush2.msra.mxu0 0.0
  %306 = vmatprep.subr.mxu0 0.0
  %307 = vmatpush2.msra.mxu0 0.0
  %308 = vmatprep.mubr.f32.mxu0 0.0
  %309 = vmatmul.mubr.f32.gmra.mxu0 %v239
  %v310 = vpop.f32.mrf.mxu0
  %v311 = vadd.f32 %v236, %v310
  %v312 = vpop.f32.mrf.mxu0
  %313 = vmatprep.mubr.f32.mxu0 0.0
  %314 = vmatmul.mubr.f32.gmra.mxu0 %v242
  %v315 = vpop.f32.mrf.mxu0
  %v316 = vadd.f32 %v236, %v315
  %v317 = vpop.f32.mrf.mxu0
  %318 = vdwg.mxu0
  %319 = vst.msk [vmem:[%s7] sm:$0xff] %vm139, %v311
  %vm320 = vcmask 257024
  %321 = vst.msk [vmem:[%s7 + $0x8] sm:$0xf] %vm320, %v316
  // Predicated region
  $region30: #{frag_envelope_ql_forward.13} parent=0 // pred_check
    _
  $region31: #{frag_envelope_ql_forward.13} parent=0 // pred_check_branch
    %323 = sbr.rel (0) target = $region33
  $region32: #{frag_envelope_ql_forward.13} parent=0 // pred_region
    _
  $region33: #{frag_envelope_ql_forward.13} parent=0 // pred_fallthru
    _
  // Predicated region
  $region34: #{frag_envelope_ql_forward.13} parent=0 // pred_check
    _
  $region35: #{frag_envelope_ql_forward.13} parent=0 // pred_check_branch
    %325 = sbr.rel (0) target = $region37
  $region36: #{frag_envelope_ql_forward.13} parent=0 // pred_region
    _
  $region37: #{frag_envelope_ql_forward.13} parent=0 // pred_fallthru
    _

// kernel: frag_envelope_ql_forward.15
$region0: #{frag_envelope_ql_forward.15}
  #allocation0 [shape = 'u32[]', space=smem, size = 0x4, offset = 0x4, fixed_abs, tag = 'smem constant byte address 0x4 - core index']
  #allocation1 [shape = 'u32[144,128]{1,0:T(1,128)}', space=vmem, size = 0x12000, scoped, tag = 'internal scratch']
  %s0 = inlined_call_operand.vmem [shape: f32[9,32], index: 0, kind: input, shape index: {}]
  %s1 = inlined_call_operand.vmem [shape: f32[9,32], index: 1, kind: input, shape index: {}]
  %s2 = inlined_call_operand.vmem [shape: f32[32,32], index: 2, kind: input, shape index: {}]
  %s3 = inlined_call_operand.vmem [shape: f32[1,32], index: 3, kind: input, shape index: {}]
  %s4 = inlined_call_operand.vmem [shape: f32[9,32], index: 4, kind: output, shape index: {}]
  %s5 = sld [smem:[#allocation0]]
  $region26: #{frag_envelope_ql_forward.15} parent=0
    _
  %s7 = ssub.s32 1, %s5
  %s8 = scalar_select 0, %s7, %s5
  // Predicated region
  $region2: #{frag_envelope_ql_forward.15} parent=0 // pred_check
    _
  $region3: #{frag_envelope_ql_forward.15} parent=0 // pred_check_branch
    %10 = sbr.rel (0) target = $region5
  $region4: #{frag_envelope_ql_forward.15} parent=0 // pred_region
    _
  $region5: #{frag_envelope_ql_forward.15} parent=0 // pred_fallthru
    _
  // Predicated region
  $region6: #{frag_envelope_ql_forward.15} parent=0 // pred_check
    _
  $region7: #{frag_envelope_ql_forward.15} parent=0 // pred_check_branch
    %12 = sbr.rel (0) target = $region9
  $region8: #{frag_envelope_ql_forward.15} parent=0 // pred_region
    _
  $region9: #{frag_envelope_ql_forward.15} parent=0 // pred_fallthru
    _
  // Predicated region
  $region10: #{frag_envelope_ql_forward.15} parent=0 // pred_check
    _
  $region11: #{frag_envelope_ql_forward.15} parent=0 // pred_check_branch
    %14 = sbr.rel (0) target = $region13
  $region12: #{frag_envelope_ql_forward.15} parent=0 // pred_region
    _
  $region13: #{frag_envelope_ql_forward.15} parent=0 // pred_fallthru
    _
  // Predicated region
  $region14: #{frag_envelope_ql_forward.15} parent=0 // pred_check
    _
  $region15: #{frag_envelope_ql_forward.15} parent=0 // pred_check_branch
    %16 = sbr.rel (0) target = $region17
  $region16: #{frag_envelope_ql_forward.15} parent=0 // pred_region
    _
  $region17: #{frag_envelope_ql_forward.15} parent=0 // pred_fallthru
    _
  %v17 = vld [vmem:[%s0] sm:$0xff]
  %v18 = vld [vmem:[%s0 + $0x8] sm:$0x1]
  %v19 = vld [vmem:[%s1] sm:$0xff]
  %v20 = vld [vmem:[%s1 + $0x8] sm:$0x1]
  %v21 = vadd.f32 %v17, %v19
  %v22 = vadd.f32 %v18, %v20
  %v23 = vld [vmem:[%s2] sm:$0xff]
  %v24 = vld [vmem:[%s2 + $0x8] sm:$0xff]
  %v25 = vld [vmem:[%s2 + $0x10] sm:$0xff]
  %v26 = vld [vmem:[%s2 + $0x18] sm:$0xff]
  %v27 = vld [vmem:[%s3] sm:$0x1]
  %v29 = vlaneseq
  %v30 = vshrl.u32 %v29, 7
  %v31 = vsub.s32 0, %v30
  %v32 = vrot.slane %v27, %v31
  %vm34 = vcmask 261120
  %v36 = vsel %vm34, %v21, 0
  %v39 = vsel %vm34, %v22, 0
  %41 = vmatprep.subr.mxu0 0.0
  %42 = vmatpush1.msra.mxu0 0.0
  %43 = vmatprep.subr.mxu0 0.0
  %44 = vmatpush1.msra.mxu0 0.0
  %45 = vmatprep.subr.mxu0 0.0
  %46 = vmatpush1.msra.mxu0 0.0
  %47 = vmatprep.subr.mxu0 0.0
  %48 = vmatpush1.msra.mxu0 0.0
  %49 = vmatprep.subr.mxu0 0.0
  %50 = vmatpush1.msra.mxu0 0.0
  %51 = vmatprep.subr.mxu0 0.0
  %52 = vmatpush1.msra.mxu0 0.0
  %53 = vmatprep.subr.mxu0 0.0
  %54 = vmatpush1.msra.mxu0 0.0
  %55 = vmatprep.subr.mxu0 0.0
  %56 = vmatpush1.msra.mxu0 0.0
  %57 = vmatprep.subr.mxu0 0.0
  %58 = vmatpush1.msra.mxu0 0.0
  %59 = vmatprep.subr.mxu0 0.0
  %60 = vmatpush1.msra.mxu0 0.0
  %61 = vmatprep.subr.mxu0 0.0
  %62 = vmatpush1.msra.mxu0 0.0
  %63 = vmatprep.subr.mxu0 0.0
  %64 = vmatpush1.msra.mxu0 0.0
  %65 = vmatprep.subr.mxu0 0.0
  %66 = vmatpush1.msra.mxu0 %v26
  %67 = vmatprep.subr.mxu0 0.0
  %68 = vmatpush1.msra.mxu0 %v25
  %69 = vmatprep.subr.mxu0 0.0
  %70 = vmatpush1.msra.mxu0 %v24
  %71 = vmatprep.subr.mxu0 0.0
  %72 = vmatpush1.msra.mxu0 %v23
  %73 = vmatprep.subr.mxu0 0.0
  %74 = vmatpush2.msra.mxu0 0.0
  %75 = vmatprep.subr.mxu0 0.0
  %76 = vmatpush2.msra.mxu0 0.0
  %77 = vmatprep.subr.mxu0 0.0
  %78 = vmatpush2.msra.mxu0 0.0
  %79 = vmatprep.subr.mxu0 0.0
  %80 = vmatpush2.msra.mxu0 0.0
  %81 = vmatprep.subr.mxu0 0.0
  %82 = vmatpush2.msra.mxu0 0.0
  %83 = vmatprep.subr.mxu0 0.0
  %84 = vmatpush2.msra.mxu0 0.0
  %85 = vmatprep.subr.mxu0 0.0
  %86 = vmatpush2.msra.mxu0 0.0
  %87 = vmatprep.subr.mxu0 0.0
  %88 = vmatpush2.msra.mxu0 0.0
  %89 = vmatprep.subr.mxu0 0.0
  %90 = vmatpush2.msra.mxu0 0.0
  %91 = vmatprep.subr.mxu0 0.0
  %92 = vmatpush2.msra.mxu0 0.0
  %93 = vmatprep.subr.mxu0 0.0
  %94 = vmatpush2.msra.mxu0 0.0
  %95 = vmatprep.subr.mxu0 0.0
  %96 = vmatpush2.msra.mxu0 0.0
  %97 = vmatprep.subr.mxu0 0.0
  %98 = vmatpush2.msra.mxu0 0.0
  %99 = vmatprep.subr.mxu0 0.0
  %100 = vmatpush2.msra.mxu0 0.0
  %101 = vmatprep.subr.mxu0 0.0
  %102 = vmatpush2.msra.mxu0 0.0
  %103 = vmatprep.subr.mxu0 0.0
  %104 = vmatpush2.msra.mxu0 0.0
  %105 = vmatprep.mubr.f32.mxu0 0.0
  %106 = vmatmul.mubr.f32.gmra.mxu0 %v36
  %v107 = vpop.f32.mrf.mxu0
  %v108 = vadd.f32 %v32, %v107
  %v109 = vpop.f32.mrf.mxu0
  %110 = vmatprep.mubr.f32.mxu0 0.0
  %111 = vmatmul.mubr.f32.gmra.mxu0 %v39
  %v112 = vpop.f32.mrf.mxu0
  %v113 = vadd.f32 %v32, %v112
  %v114 = vpop.f32.mrf.mxu0
  %115 = vdwg.mxu0
  %116 = vst.msk [vmem:[%s4] sm:$0xff] %vm34, %v108
  %vm117 = vcmask 253952
  %118 = vst.msk [vmem:[%s4 + $0x8] sm:$0x1] %vm117, %v113
  // Predicated region
  $region18: #{frag_envelope_ql_forward.15} parent=0 // pred_check
    _
  $region19: #{frag_envelope_ql_forward.15} parent=0 // pred_check_branch
    %120 = sbr.rel (0) target = $region21
  $region20: #{frag_envelope_ql_forward.15} parent=0 // pred_region
    _
  $region21: #{frag_envelope_ql_forward.15} parent=0 // pred_fallthru
    _
  // Predicated region
  $region22: #{frag_envelope_ql_forward.15} parent=0 // pred_check
    _
  $region23: #{frag_envelope_ql_forward.15} parent=0 // pred_check_branch
    %122 = sbr.rel (0) target = $region25
  $region24: #{frag_envelope_ql_forward.15} parent=0 // pred_region
    _
  $region25: #{frag_envelope_ql_forward.15} parent=0 // pred_fallthru
    _

// kernel: frag_envelope_ql_forward.16
$region0: #{frag_envelope_ql_forward.16}
  #allocation0 [shape = 'u32[]', space=smem, size = 0x4, offset = 0x4, fixed_abs, tag = 'smem constant byte address 0x4 - core index']
  #allocation1 [shape = 'u32[144,128]{1,0:T(1,128)}', space=vmem, size = 0x12000, scoped, tag = 'internal scratch']
  %s0 = inlined_call_operand.vmem [shape: f32[9,64], index: 0, kind: input, shape index: {}]
  %s1 = inlined_call_operand.vmem [shape: f32[35,32], index: 1, kind: input, shape index: {}]
  %s2 = inlined_call_operand.vmem [shape: f32[64,256], index: 2, kind: input, shape index: {}]
  %s3 = inlined_call_operand.vmem [shape: f32[1,256], index: 3, kind: input, shape index: {}]
  %s4 = inlined_call_operand.vmem [shape: f32[32,64], index: 4, kind: input, shape index: {}]
  %s5 = inlined_call_operand.vmem [shape: f32[1,64], index: 5, kind: input, shape index: {}]
  %s6 = inlined_call_operand.vmem [shape: f32[9,256], index: 6, kind: output, shape index: {0}]
  %s7 = inlined_call_operand.vmem [shape: f32[35,64], index: 7, kind: output, shape index: {1}]
  %8 = xla_tuple %s6, %s7
  %s9 = sld [smem:[#allocation0]]
  $region42: #{frag_envelope_ql_forward.16} parent=0
    _
  %s11 = ssub.s32 1, %s9
  %s12 = scalar_select 0, %s11, %s9
  // Predicated region
  $region2: #{frag_envelope_ql_forward.16} parent=0 // pred_check
    _
  $region3: #{frag_envelope_ql_forward.16} parent=0 // pred_check_branch
    %14 = sbr.rel (0) target = $region5
  $region4: #{frag_envelope_ql_forward.16} parent=0 // pred_region
    _
  $region5: #{frag_envelope_ql_forward.16} parent=0 // pred_fallthru
    _
  // Predicated region
  $region6: #{frag_envelope_ql_forward.16} parent=0 // pred_check
    _
  $region7: #{frag_envelope_ql_forward.16} parent=0 // pred_check_branch
    %16 = sbr.rel (0) target = $region9
  $region8: #{frag_envelope_ql_forward.16} parent=0 // pred_region
    _
  $region9: #{frag_envelope_ql_forward.16} parent=0 // pred_fallthru
    _
  // Predicated region
  $region10: #{frag_envelope_ql_forward.16} parent=0 // pred_check
    _
  $region11: #{frag_envelope_ql_forward.16} parent=0 // pred_check_branch
    %18 = sbr.rel (0) target = $region13
  $region12: #{frag_envelope_ql_forward.16} parent=0 // pred_region
    _
  $region13: #{frag_envelope_ql_forward.16} parent=0 // pred_fallthru
    _
  // Predicated region
  $region14: #{frag_envelope_ql_forward.16} parent=0 // pred_check
    _
  $region15: #{frag_envelope_ql_forward.16} parent=0 // pred_check_branch
    %20 = sbr.rel (0) target = $region17
  $region16: #{frag_envelope_ql_forward.16} parent=0 // pred_region
    _
  $region17: #{frag_envelope_ql_forward.16} parent=0 // pred_fallthru
    _
  // Predicated region
  $region18: #{frag_envelope_ql_forward.16} parent=0 // pred_check
    _
  $region19: #{frag_envelope_ql_forward.16} parent=0 // pred_check_branch
    %22 = sbr.rel (0) target = $region21
  $region20: #{frag_envelope_ql_forward.16} parent=0 // pred_region
    _
  $region21: #{frag_envelope_ql_forward.16} parent=0 // pred_fallthru
    _
  // Predicated region
  $region22: #{frag_envelope_ql_forward.16} parent=0 // pred_check
    _
  $region23: #{frag_envelope_ql_forward.16} parent=0 // pred_check_branch
    %24 = sbr.rel (0) target = $region25
  $region24: #{frag_envelope_ql_forward.16} parent=0 // pred_region
    _
  $region25: #{frag_envelope_ql_forward.16} parent=0 // pred_fallthru
    _
  %v25 = vld [vmem:[%s0] sm:$0xff]
  %v26 = vld [vmem:[%s0 + $0x8] sm:$0x1]
  %v27 = vld [vmem:[%s2] sm:$0xff]
  %v28 = vld [vmem:[%s2 + $0x8] sm:$0xff]
  %v29 = vld [vmem:[%s2 + $0x10] sm:$0xff]
  %v30 = vld [vmem:[%s2 + $0x18] sm:$0xff]
  %v31 = vld [vmem:[%s2 + $0x20] sm:$0xff]
  %v32 = vld [vmem:[%s2 + $0x28] sm:$0xff]
  %v33 = vld [vmem:[%s2 + $0x30] sm:$0xff]
  %v34 = vld [vmem:[%s2 + $0x38] sm:$0xff]
  %v35 = vld [vmem:[%s2 + $0x40] sm:$0xff]
  %v36 = vld [vmem:[%s2 + $0x48] sm:$0xff]
  %v37 = vld [vmem:[%s2 + $0x50] sm:$0xff]
  %v38 = vld [vmem:[%s2 + $0x58] sm:$0xff]
  %v39 = vld [vmem:[%s2 + $0x60] sm:$0xff]
  %v40 = vld [vmem:[%s2 + $0x68] sm:$0xff]
  %v41 = vld [vmem:[%s2 + $0x70] sm:$0xff]
  %v42 = vld [vmem:[%s2 + $0x78] sm:$0xff]
  %v43 = vld [vmem:[%s3] sm:$0x3]
  %v45 = vlaneseq
  %v46 = vshrl.u32 %v45, 7
  %v47 = vsub.s32 0, %v46
  %v48 = vrot.slane %v43, %v47
  %v49 = vlaneseq
  %v50 = vshrl.u32 %v49, 7
  %v51 = vsub.s32 1, %v50
  %v52 = vrot.slane %v43, %v51
  %vm55 = vcmask 523264
  %v57 = vsel %vm55, %v25, 0
  %v60 = vsel %vm55, %v26, 0
  %62 = vmatprep.subr.mxu0 0.0
  %63 = vmatpush1.msra.mxu0 0.0
  %64 = vmatprep.subr.mxu0 0.0
  %65 = vmatpush1.msra.mxu0 0.0
  %66 = vmatprep.subr.mxu0 0.0
  %67 = vmatpush1.msra.mxu0 0.0
  %68 = vmatprep.subr.mxu0 0.0
  %69 = vmatpush1.msra.mxu0 0.0
  %70 = vmatprep.subr.mxu0 0.0
  %71 = vmatpush1.msra.mxu0 0.0
  %72 = vmatprep.subr.mxu0 0.0
  %73 = vmatpush1.msra.mxu0 0.0
  %74 = vmatprep.subr.mxu0 0.0
  %75 = vmatpush1.msra.mxu0 0.0
  %76 = vmatprep.subr.mxu0 0.0
  %77 = vmatpush1.msra.mxu0 0.0
  %78 = vmatprep.subr.mxu0 %v42
  %79 = vmatpush1.msra.mxu0 %v41
  %80 = vmatprep.subr.mxu0 %v40
  %81 = vmatpush1.msra.mxu0 %v39
  %82 = vmatprep.subr.mxu0 %v38
  %83 = vmatpush1.msra.mxu0 %v37
  %84 = vmatprep.subr.mxu0 %v36
  %85 = vmatpush1.msra.mxu0 %v35
  %86 = vmatprep.subr.mxu0 %v34
  %87 = vmatpush1.msra.mxu0 %v33
  %88 = vmatprep.subr.mxu0 %v32
  %89 = vmatpush1.msra.mxu0 %v31
  %90 = vmatprep.subr.mxu0 %v30
  %91 = vmatpush1.msra.mxu0 %v29
  %92 = vmatprep.subr.mxu0 %v28
  %93 = vmatpush1.msra.mxu0 %v27
  %94 = vmatprep.subr.mxu0 0.0
  %95 = vmatpush2.msra.mxu0 0.0
  %96 = vmatprep.subr.mxu0 0.0
  %97 = vmatpush2.msra.mxu0 0.0
  %98 = vmatprep.subr.mxu0 0.0
  %99 = vmatpush2.msra.mxu0 0.0
  %100 = vmatprep.subr.mxu0 0.0
  %101 = vmatpush2.msra.mxu0 0.0
  %102 = vmatprep.subr.mxu0 0.0
  %103 = vmatpush2.msra.mxu0 0.0
  %104 = vmatprep.subr.mxu0 0.0
  %105 = vmatpush2.msra.mxu0 0.0
  %106 = vmatprep.subr.mxu0 0.0
  %107 = vmatpush2.msra.mxu0 0.0
  %108 = vmatprep.subr.mxu0 0.0
  %109 = vmatpush2.msra.mxu0 0.0
  %110 = vmatprep.subr.mxu0 0.0
  %111 = vmatpush2.msra.mxu0 0.0
  %112 = vmatprep.subr.mxu0 0.0
  %113 = vmatpush2.msra.mxu0 0.0
  %114 = vmatprep.subr.mxu0 0.0
  %115 = vmatpush2.msra.mxu0 0.0
  %116 = vmatprep.subr.mxu0 0.0
  %117 = vmatpush2.msra.mxu0 0.0
  %118 = vmatprep.subr.mxu0 0.0
  %119 = vmatpush2.msra.mxu0 0.0
  %120 = vmatprep.subr.mxu0 0.0
  %121 = vmatpush2.msra.mxu0 0.0
  %122 = vmatprep.subr.mxu0 0.0
  %123 = vmatpush2.msra.mxu0 0.0
  %124 = vmatprep.subr.mxu0 0.0
  %125 = vmatpush2.msra.mxu0 0.0
  %126 = vmatprep.mubr.f32.mxu0 0.0
  %127 = vmatmul.mubr.f32.gmra.mxu0 %v57
  %v128 = vpop.f32.mrf.mxu0
  %v129 = vadd.f32 %v48, %v128
  %v130 = vpop.f32.mrf.mxu0
  %v131 = vadd.f32 %v52, %v130
  %132 = vmatprep.mubr.f32.mxu0 0.0
  %133 = vmatmul.mubr.f32.gmra.mxu0 %v60
  %v134 = vpop.f32.mrf.mxu0
  %v135 = vadd.f32 %v48, %v134
  %v136 = vpop.f32.mrf.mxu0
  %v137 = vadd.f32 %v52, %v136
  %138 = vdwg.mxu0
  %139 = vst [vmem:[%s6] sm:$0xff] %v129
  %140 = vst [vmem:[%s6 + $0x8] sm:$0xff] %v131
  %141 = vst [vmem:[%s6 + $0x10] sm:$0x1] %v135
  %142 = vst [vmem:[%s6 + $0x18] sm:$0x1] %v137
  %v143 = vld [vmem:[%s1] sm:$0xff]
  %v144 = vld [vmem:[%s1 + $0x8] sm:$0xff]
  %v145 = vld [vmem:[%s1 + $0x10] sm:$0xff]
  %v146 = vld [vmem:[%s1 + $0x18] sm:$0xff]
  %v147 = vld [vmem:[%s1 + $0x20] sm:$0x7]
  %v148 = vld [vmem:[%s4] sm:$0xff]
  %v149 = vld [vmem:[%s4 + $0x8] sm:$0xff]
  %v150 = vld [vmem:[%s4 + $0x10] sm:$0xff]
  %v151 = vld [vmem:[%s4 + $0x18] sm:$0xff]
  %v152 = vld [vmem:[%s5] sm:$0x1]
  %v154 = vlaneseq
  %v155 = vshrl.u32 %v154, 7
  %v156 = vsub.s32 0, %v155
  %v157 = vrot.slane %v152, %v156
  %vm159 = vcmask 261120
  %v161 = vsel %vm159, %v143, 0
  %v164 = vsel %vm159, %v144, 0
  %v167 = vsel %vm159, %v145, 0
  %v170 = vsel %vm159, %v146, 0
  %v173 = vsel %vm159, %v147, 0
  %175 = vmatprep.subr.mxu0 0.0
  %176 = vmatpush1.msra.mxu0 0.0
  %177 = vmatprep.subr.mxu0 0.0
  %178 = vmatpush1.msra.mxu0 0.0
  %179 = vmatprep.subr.mxu0 0.0
  %180 = vmatpush1.msra.mxu0 0.0
  %181 = vmatprep.subr.mxu0 0.0
  %182 = vmatpush1.msra.mxu0 0.0
  %183 = vmatprep.subr.mxu0 0.0
  %184 = vmatpush1.msra.mxu0 0.0
  %185 = vmatprep.subr.mxu0 0.0
  %186 = vmatpush1.msra.mxu0 0.0
  %187 = vmatprep.subr.mxu0 0.0
  %188 = vmatpush1.msra.mxu0 0.0
  %189 = vmatprep.subr.mxu0 0.0
  %190 = vmatpush1.msra.mxu0 0.0
  %191 = vmatprep.subr.mxu0 0.0
  %192 = vmatpush1.msra.mxu0 0.0
  %193 = vmatprep.subr.mxu0 0.0
  %194 = vmatpush1.msra.mxu0 0.0
  %195 = vmatprep.subr.mxu0 0.0
  %196 = vmatpush1.msra.mxu0 0.0
  %197 = vmatprep.subr.mxu0 0.0
  %198 = vmatpush1.msra.mxu0 0.0
  %199 = vmatprep.subr.mxu0 0.0
  %200 = vmatpush1.msra.mxu0 %v151
  %201 = vmatprep.subr.mxu0 0.0
  %202 = vmatpush1.msra.mxu0 %v150
  %203 = vmatprep.subr.mxu0 0.0
  %204 = vmatpush1.msra.mxu0 %v149
  %205 = vmatprep.subr.mxu0 0.0
  %206 = vmatpush1.msra.mxu0 %v148
  %207 = vmatprep.subr.mxu0 0.0
  %208 = vmatpush2.msra.mxu0 0.0
  %209 = vmatprep.subr.mxu0 0.0
  %210 = vmatpush2.msra.mxu0 0.0
  %211 = vmatprep.subr.mxu0 0.0
  %212 = vmatpush2.msra.mxu0 0.0
  %213 = vmatprep.subr.mxu0 0.0
  %214 = vmatpush2.msra.mxu0 0.0
  %215 = vmatprep.subr.mxu0 0.0
  %216 = vmatpush2.msra.mxu0 0.0
  %217 = vmatprep.subr.mxu0 0.0
  %218 = vmatpush2.msra.mxu0 0.0
  %219 = vmatprep.subr.mxu0 0.0
  %220 = vmatpush2.msra.mxu0 0.0
  %221 = vmatprep.subr.mxu0 0.0
  %222 = vmatpush2.msra.mxu0 0.0
  %223 = vmatprep.subr.mxu0 0.0
  %224 = vmatpush2.msra.mxu0 0.0
  %225 = vmatprep.subr.mxu0 0.0
  %226 = vmatpush2.msra.mxu0 0.0
  %227 = vmatprep.subr.mxu0 0.0
  %228 = vmatpush2.msra.mxu0 0.0
  %229 = vmatprep.subr.mxu0 0.0
  %230 = vmatpush2.msra.mxu0 0.0
  %231 = vmatprep.subr.mxu0 0.0
  %232 = vmatpush2.msra.mxu0 0.0
  %233 = vmatprep.subr.mxu0 0.0
  %234 = vmatpush2.msra.mxu0 0.0
  %235 = vmatprep.subr.mxu0 0.0
  %236 = vmatpush2.msra.mxu0 0.0
  %237 = vmatprep.subr.mxu0 0.0
  %238 = vmatpush2.msra.mxu0 0.0
  %239 = vmatprep.mubr.f32.mxu0 0.0
  %240 = vmatmul.mubr.f32.gmra.mxu0 %v161
  %v241 = vpop.f32.mrf.mxu0
  %v242 = vadd.f32 %v157, %v241
  %v243 = vpop.f32.mrf.mxu0
  %244 = vmatprep.mubr.f32.mxu0 0.0
  %245 = vmatmul.mubr.f32.gmra.mxu0 %v164
  %v246 = vpop.f32.mrf.mxu0
  %v247 = vadd.f32 %v157, %v246
  %v248 = vpop.f32.mrf.mxu0
  %249 = vmatprep.mubr.f32.mxu0 0.0
  %250 = vmatmul.mubr.f32.gmra.mxu0 %v167
  %v251 = vpop.f32.mrf.mxu0
  %v252 = vadd.f32 %v157, %v251
  %v253 = vpop.f32.mrf.mxu0
  %254 = vmatprep.mubr.f32.mxu0 0.0
  %255 = vmatmul.mubr.f32.gmra.mxu0 %v170
  %v256 = vpop.f32.mrf.mxu0
  %v257 = vadd.f32 %v157, %v256
  %v258 = vpop.f32.mrf.mxu0
  %259 = vmatprep.mubr.f32.mxu0 0.0
  %260 = vmatmul.mubr.f32.gmra.mxu0 %v173
  %v261 = vpop.f32.mrf.mxu0
  %v262 = vadd.f32 %v157, %v261
  %v263 = vpop.f32.mrf.mxu0
  %264 = vdwg.mxu0
  %265 = vst.msk [vmem:[%s7] sm:$0xff] %vm55, %v242
  %266 = vst.msk [vmem:[%s7 + $0x8] sm:$0xff] %vm55, %v247
  %267 = vst.msk [vmem:[%s7 + $0x10] sm:$0xff] %vm55, %v252
  %268 = vst.msk [vmem:[%s7 + $0x18] sm:$0xff] %vm55, %v257
  %vm269 = vcmask 518144
  %270 = vst.msk [vmem:[%s7 + $0x20] sm:$0x7] %vm269, %v262
  // Predicated region
  $region26: #{frag_envelope_ql_forward.16} parent=0 // pred_check
    _
  $region27: #{frag_envelope_ql_forward.16} parent=0 // pred_check_branch
    %272 = sbr.rel (0) target = $region29
  $region28: #{frag_envelope_ql_forward.16} parent=0 // pred_region
    _
  $region29: #{frag_envelope_ql_forward.16} parent=0 // pred_fallthru
    _
  // Predicated region
  $region30: #{frag_envelope_ql_forward.16} parent=0 // pred_check
    _
  $region31: #{frag_envelope_ql_forward.16} parent=0 // pred_check_branch
    %274 = sbr.rel (0) target = $region33
  $region32: #{frag_envelope_ql_forward.16} parent=0 // pred_region
    _
  $region33: #{frag_envelope_ql_forward.16} parent=0 // pred_fallthru
    _
  // Predicated region
  $region34: #{frag_envelope_ql_forward.16} parent=0 // pred_check
    _
  $region35: #{frag_envelope_ql_forward.16} parent=0 // pred_check_branch
    %276 = sbr.rel (0) target = $region37
  $region36: #{frag_envelope_ql_forward.16} parent=0 // pred_region
    _
  $region37: #{frag_envelope_ql_forward.16} parent=0 // pred_fallthru
    _
  // Predicated region
  $region38: #{frag_envelope_ql_forward.16} parent=0 // pred_check
    _
  $region39: #{frag_envelope_ql_forward.16} parent=0 // pred_check_branch
    %278 = sbr.rel (0) target = $region41
  $region40: #{frag_envelope_ql_forward.16} parent=0 // pred_region
    _
  $region41: #{frag_envelope_ql_forward.16} parent=0 // pred_fallthru
    _

// kernel: frag_envelope_ql_forward.17
$region0: #{frag_envelope_ql_forward.17}
  #allocation0 [shape = 'u32[]', space=smem, size = 0x4, offset = 0x4, fixed_abs, tag = 'smem constant byte address 0x4 - core index']
  #allocation1 [shape = 'u32[144,128]{1,0:T(1,128)}', space=vmem, size = 0x12000, scoped, tag = 'internal scratch']
  %s0 = inlined_call_operand.vmem [shape: f32[9,32], index: 0, kind: input, shape index: {}]
  %s1 = inlined_call_operand.vmem [shape: f32[9,64], index: 1, kind: input, shape index: {}]
  %s2 = inlined_call_operand.vmem [shape: f32[9,32], index: 2, kind: input, shape index: {}]
  %s3 = inlined_call_operand.vmem [shape: f32[64,32], index: 3, kind: input, shape index: {}]
  %s4 = inlined_call_operand.vmem [shape: f32[1,32], index: 4, kind: input, shape index: {}]
  %s5 = inlined_call_operand.vmem [shape: f32[32,32], index: 5, kind: input, shape index: {}]
  %s6 = inlined_call_operand.vmem [shape: f32[1,32], index: 6, kind: input, shape index: {}]
  %s7 = inlined_call_operand.vmem [shape: f32[32,32], index: 7, kind: input, shape index: {}]
  %s8 = inlined_call_operand.vmem [shape: f32[1,32], index: 8, kind: input, shape index: {}]
  %s9 = inlined_call_operand.vmem [shape: f32[9,32], index: 9, kind: output, shape index: {}]
  %s10 = sld [smem:[#allocation0]]
  $region46: #{frag_envelope_ql_forward.17} parent=0
    _
  %s12 = ssub.s32 1, %s10
  %s13 = scalar_select 0, %s12, %s10
  // Predicated region
  $region2: #{frag_envelope_ql_forward.17} parent=0 // pred_check
    _
  $region3: #{frag_envelope_ql_forward.17} parent=0 // pred_check_branch
    %15 = sbr.rel (0) target = $region5
  $region4: #{frag_envelope_ql_forward.17} parent=0 // pred_region
    _
  $region5: #{frag_envelope_ql_forward.17} parent=0 // pred_fallthru
    _
  // Predicated region
  $region6: #{frag_envelope_ql_forward.17} parent=0 // pred_check
    _
  $region7: #{frag_envelope_ql_forward.17} parent=0 // pred_check_branch
    %17 = sbr.rel (0) target = $region9
  $region8: #{frag_envelope_ql_forward.17} parent=0 // pred_region
    _
  $region9: #{frag_envelope_ql_forward.17} parent=0 // pred_fallthru
    _
  // Predicated region
  $region10: #{frag_envelope_ql_forward.17} parent=0 // pred_check
    _
  $region11: #{frag_envelope_ql_forward.17} parent=0 // pred_check_branch
    %19 = sbr.rel (0) target = $region13
  $region12: #{frag_envelope_ql_forward.17} parent=0 // pred_region
    _
  $region13: #{frag_envelope_ql_forward.17} parent=0 // pred_fallthru
    _
  // Predicated region
  $region14: #{frag_envelope_ql_forward.17} parent=0 // pred_check
    _
  $region15: #{frag_envelope_ql_forward.17} parent=0 // pred_check_branch
    %21 = sbr.rel (0) target = $region17
  $region16: #{frag_envelope_ql_forward.17} parent=0 // pred_region
    _
  $region17: #{frag_envelope_ql_forward.17} parent=0 // pred_fallthru
    _
  // Predicated region
  $region18: #{frag_envelope_ql_forward.17} parent=0 // pred_check
    _
  $region19: #{frag_envelope_ql_forward.17} parent=0 // pred_check_branch
    %23 = sbr.rel (0) target = $region21
  $region20: #{frag_envelope_ql_forward.17} parent=0 // pred_region
    _
  $region21: #{frag_envelope_ql_forward.17} parent=0 // pred_fallthru
    _
  // Predicated region
  $region22: #{frag_envelope_ql_forward.17} parent=0 // pred_check
    _
  $region23: #{frag_envelope_ql_forward.17} parent=0 // pred_check_branch
    %25 = sbr.rel (0) target = $region25
  $region24: #{frag_envelope_ql_forward.17} parent=0 // pred_region
    _
  $region25: #{frag_envelope_ql_forward.17} parent=0 // pred_fallthru
    _
  // Predicated region
  $region26: #{frag_envelope_ql_forward.17} parent=0 // pred_check
    _
  $region27: #{frag_envelope_ql_forward.17} parent=0 // pred_check_branch
    %27 = sbr.rel (0) target = $region29
  $region28: #{frag_envelope_ql_forward.17} parent=0 // pred_region
    _
  $region29: #{frag_envelope_ql_forward.17} parent=0 // pred_fallthru
    _
  // Predicated region
  $region30: #{frag_envelope_ql_forward.17} parent=0 // pred_check
    _
  $region31: #{frag_envelope_ql_forward.17} parent=0 // pred_check_branch
    %29 = sbr.rel (0) target = $region33
  $region32: #{frag_envelope_ql_forward.17} parent=0 // pred_region
    _
  $region33: #{frag_envelope_ql_forward.17} parent=0 // pred_fallthru
    _
  // Predicated region
  $region34: #{frag_envelope_ql_forward.17} parent=0 // pred_check
    _
  $region35: #{frag_envelope_ql_forward.17} parent=0 // pred_check_branch
    %31 = sbr.rel (0) target = $region37
  $region36: #{frag_envelope_ql_forward.17} parent=0 // pred_region
    _
  $region37: #{frag_envelope_ql_forward.17} parent=0 // pred_fallthru
    _
  %v32 = vld [vmem:[%s1] sm:$0xff]
  %v33 = vld [vmem:[%s1 + $0x8] sm:$0x1]
  %v34 = vld [vmem:[%s3] sm:$0xff]
  %v35 = vld [vmem:[%s3 + $0x8] sm:$0xff]
  %v36 = vld [vmem:[%s3 + $0x10] sm:$0xff]
  %v37 = vld [vmem:[%s3 + $0x18] sm:$0xff]
  %v38 = vld [vmem:[%s3 + $0x20] sm:$0xff]
  %v39 = vld [vmem:[%s3 + $0x28] sm:$0xff]
  %v40 = vld [vmem:[%s3 + $0x30] sm:$0xff]
  %v41 = vld [vmem:[%s3 + $0x38] sm:$0xff]
  %v42 = vld [vmem:[%s4] sm:$0x1]
  %v44 = vlaneseq
  %v45 = vshrl.u32 %v44, 7
  %v46 = vsub.s32 0, %v45
  %v47 = vrot.slane %v42, %v46
  %vm49 = vcmask 523264
  %v51 = vsel %vm49, %v32, 0
  %v54 = vsel %vm49, %v33, 0
  %56 = vmatprep.subr.mxu0 0.0
  %57 = vmatpush1.msra.mxu0 0.0
  %58 = vmatprep.subr.mxu0 0.0
  %59 = vmatpush1.msra.mxu0 0.0
  %60 = vmatprep.subr.mxu0 0.0
  %61 = vmatpush1.msra.mxu0 0.0
  %62 = vmatprep.subr.mxu0 0.0
  %63 = vmatpush1.msra.mxu0 0.0
  %64 = vmatprep.subr.mxu0 0.0
  %65 = vmatpush1.msra.mxu0 0.0
  %66 = vmatprep.subr.mxu0 0.0
  %67 = vmatpush1.msra.mxu0 0.0
  %68 = vmatprep.subr.mxu0 0.0
  %69 = vmatpush1.msra.mxu0 0.0
  %70 = vmatprep.subr.mxu0 0.0
  %71 = vmatpush1.msra.mxu0 0.0
  %72 = vmatprep.subr.mxu0 0.0
  %73 = vmatpush1.msra.mxu0 %v41
  %74 = vmatprep.subr.mxu0 0.0
  %75 = vmatpush1.msra.mxu0 %v40
  %76 = vmatprep.subr.mxu0 0.0
  %77 = vmatpush1.msra.mxu0 %v39
  %78 = vmatprep.subr.mxu0 0.0
  %79 = vmatpush1.msra.mxu0 %v38
  %80 = vmatprep.subr.mxu0 0.0
  %81 = vmatpush1.msra.mxu0 %v37
  %82 = vmatprep.subr.mxu0 0.0
  %83 = vmatpush1.msra.mxu0 %v36
  %84 = vmatprep.subr.mxu0 0.0
  %85 = vmatpush1.msra.mxu0 %v35
  %86 = vmatprep.subr.mxu0 0.0
  %87 = vmatpush1.msra.mxu0 %v34
  %88 = vmatprep.subr.mxu0 0.0
  %89 = vmatpush2.msra.mxu0 0.0
  %90 = vmatprep.subr.mxu0 0.0
  %91 = vmatpush2.msra.mxu0 0.0
  %92 = vmatprep.subr.mxu0 0.0
  %93 = vmatpush2.msra.mxu0 0.0
  %94 = vmatprep.subr.mxu0 0.0
  %95 = vmatpush2.msra.mxu0 0.0
  %96 = vmatprep.subr.mxu0 0.0
  %97 = vmatpush2.msra.mxu0 0.0
  %98 = vmatprep.subr.mxu0 0.0
  %99 = vmatpush2.msra.mxu0 0.0
  %100 = vmatprep.subr.mxu0 0.0
  %101 = vmatpush2.msra.mxu0 0.0
  %102 = vmatprep.subr.mxu0 0.0
  %103 = vmatpush2.msra.mxu0 0.0
  %104 = vmatprep.subr.mxu0 0.0
  %105 = vmatpush2.msra.mxu0 0.0
  %106 = vmatprep.subr.mxu0 0.0
  %107 = vmatpush2.msra.mxu0 0.0
  %108 = vmatprep.subr.mxu0 0.0
  %109 = vmatpush2.msra.mxu0 0.0
  %110 = vmatprep.subr.mxu0 0.0
  %111 = vmatpush2.msra.mxu0 0.0
  %112 = vmatprep.subr.mxu0 0.0
  %113 = vmatpush2.msra.mxu0 0.0
  %114 = vmatprep.subr.mxu0 0.0
  %115 = vmatpush2.msra.mxu0 0.0
  %116 = vmatprep.subr.mxu0 0.0
  %117 = vmatpush2.msra.mxu0 0.0
  %118 = vmatprep.subr.mxu0 0.0
  %119 = vmatpush2.msra.mxu0 0.0
  %120 = vmatprep.mubr.f32.mxu0 0.0
  %121 = vmatmul.mubr.f32.gmra.mxu0 %v51
  %v122 = vpop.f32.mrf.mxu0
  %v123 = vadd.f32 %v47, %v122
  %v124 = vpop.f32.mrf.mxu0
  %125 = vmatprep.mubr.f32.mxu0 0.0
  %126 = vmatmul.mubr.f32.gmra.mxu0 %v54
  %v127 = vpop.f32.mrf.mxu0
  %v128 = vadd.f32 %v47, %v127
  %v129 = vpop.f32.mrf.mxu0
  %130 = vdwg.mxu0
  %v131 = vld [vmem:[%s2] sm:$0xff]
  %v132 = vld [vmem:[%s2 + $0x8] sm:$0x1]
  %v133 = vld [vmem:[%s5] sm:$0xff]
  %v134 = vld [vmem:[%s5 + $0x8] sm:$0xff]
  %v135 = vld [vmem:[%s5 + $0x10] sm:$0xff]
  %v136 = vld [vmem:[%s5 + $0x18] sm:$0xff]
  %v137 = vld [vmem:[%s6] sm:$0x1]
  %v139 = vlaneseq
  %v140 = vshrl.u32 %v139, 7
  %v141 = vsub.s32 0, %v140
  %v142 = vrot.slane %v137, %v141
  %vm144 = vcmask 261120
  %v146 = vsel %vm144, %v131, 0
  %v149 = vsel %vm144, %v132, 0
  %151 = vmatprep.subr.mxu0 0.0
  %152 = vmatpush1.msra.mxu0 0.0
  %153 = vmatprep.subr.mxu0 0.0
  %154 = vmatpush1.msra.mxu0 0.0
  %155 = vmatprep.subr.mxu0 0.0
  %156 = vmatpush1.msra.mxu0 0.0
  %157 = vmatprep.subr.mxu0 0.0
  %158 = vmatpush1.msra.mxu0 0.0
  %159 = vmatprep.subr.mxu0 0.0
  %160 = vmatpush1.msra.mxu0 0.0
  %161 = vmatprep.subr.mxu0 0.0
  %162 = vmatpush1.msra.mxu0 0.0
  %163 = vmatprep.subr.mxu0 0.0
  %164 = vmatpush1.msra.mxu0 0.0
  %165 = vmatprep.subr.mxu0 0.0
  %166 = vmatpush1.msra.mxu0 0.0
  %167 = vmatprep.subr.mxu0 0.0
  %168 = vmatpush1.msra.mxu0 0.0
  %169 = vmatprep.subr.mxu0 0.0
  %170 = vmatpush1.msra.mxu0 0.0
  %171 = vmatprep.subr.mxu0 0.0
  %172 = vmatpush1.msra.mxu0 0.0
  %173 = vmatprep.subr.mxu0 0.0
  %174 = vmatpush1.msra.mxu0 0.0
  %175 = vmatprep.subr.mxu0 0.0
  %176 = vmatpush1.msra.mxu0 %v136
  %177 = vmatprep.subr.mxu0 0.0
  %178 = vmatpush1.msra.mxu0 %v135
  %179 = vmatprep.subr.mxu0 0.0
  %180 = vmatpush1.msra.mxu0 %v134
  %181 = vmatprep.subr.mxu0 0.0
  %182 = vmatpush1.msra.mxu0 %v133
  %183 = vmatprep.subr.mxu0 0.0
  %184 = vmatpush2.msra.mxu0 0.0
  %185 = vmatprep.subr.mxu0 0.0
  %186 = vmatpush2.msra.mxu0 0.0
  %187 = vmatprep.subr.mxu0 0.0
  %188 = vmatpush2.msra.mxu0 0.0
  %189 = vmatprep.subr.mxu0 0.0
  %190 = vmatpush2.msra.mxu0 0.0
  %191 = vmatprep.subr.mxu0 0.0
  %192 = vmatpush2.msra.mxu0 0.0
  %193 = vmatprep.subr.mxu0 0.0
  %194 = vmatpush2.msra.mxu0 0.0
  %195 = vmatprep.subr.mxu0 0.0
  %196 = vmatpush2.msra.mxu0 0.0
  %197 = vmatprep.subr.mxu0 0.0
  %198 = vmatpush2.msra.mxu0 0.0
  %199 = vmatprep.subr.mxu0 0.0
  %200 = vmatpush2.msra.mxu0 0.0
  %201 = vmatprep.subr.mxu0 0.0
  %202 = vmatpush2.msra.mxu0 0.0
  %203 = vmatprep.subr.mxu0 0.0
  %204 = vmatpush2.msra.mxu0 0.0
  %205 = vmatprep.subr.mxu0 0.0
  %206 = vmatpush2.msra.mxu0 0.0
  %207 = vmatprep.subr.mxu0 0.0
  %208 = vmatpush2.msra.mxu0 0.0
  %209 = vmatprep.subr.mxu0 0.0
  %210 = vmatpush2.msra.mxu0 0.0
  %211 = vmatprep.subr.mxu0 0.0
  %212 = vmatpush2.msra.mxu0 0.0
  %213 = vmatprep.subr.mxu0 0.0
  %214 = vmatpush2.msra.mxu0 0.0
  %215 = vmatprep.mubr.f32.mxu0 0.0
  %216 = vmatmul.mubr.f32.gmra.mxu0 %v146
  %v217 = vpop.f32.mrf.mxu0
  %v218 = vadd.f32 %v142, %v217
  %v219 = vpop.f32.mrf.mxu0
  %220 = vmatprep.mubr.f32.mxu0 0.0
  %221 = vmatmul.mubr.f32.gmra.mxu0 %v149
  %v222 = vpop.f32.mrf.mxu0
  %v223 = vadd.f32 %v142, %v222
  %v224 = vpop.f32.mrf.mxu0
  %225 = vdwg.mxu0
  %v226 = vld [vmem:[%s7] sm:$0xff]
  %v227 = vld [vmem:[%s7 + $0x8] sm:$0xff]
  %v228 = vld [vmem:[%s7 + $0x10] sm:$0xff]
  %v229 = vld [vmem:[%s7 + $0x18] sm:$0xff]
  %v230 = vld [vmem:[%s8] sm:$0x1]
  %v232 = vlaneseq
  %v233 = vshrl.u32 %v232, 7
  %v234 = vsub.s32 0, %v233
  %v235 = vrot.slane %v230, %v234
  %237 = vmatprep.subr.mxu0 0.0
  %238 = vmatpush1.msra.mxu0 0.0
  %239 = vmatprep.subr.mxu0 0.0
  %240 = vmatpush1.msra.mxu0 0.0
  %241 = vmatprep.subr.mxu0 0.0
  %242 = vmatpush1.msra.mxu0 0.0
  %243 = vmatprep.subr.mxu0 0.0
  %244 = vmatpush1.msra.mxu0 0.0
  %245 = vmatprep.subr.mxu0 0.0
  %246 = vmatpush1.msra.mxu0 0.0
  %247 = vmatprep.subr.mxu0 0.0
  %248 = vmatpush1.msra.mxu0 0.0
  %249 = vmatprep.subr.mxu0 0.0
  %250 = vmatpush1.msra.mxu0 0.0
  %251 = vmatprep.subr.mxu0 0.0
  %252 = vmatpush1.msra.mxu0 0.0
  %253 = vmatprep.subr.mxu0 0.0
  %254 = vmatpush1.msra.mxu0 0.0
  %255 = vmatprep.subr.mxu0 0.0
  %256 = vmatpush1.msra.mxu0 0.0
  %257 = vmatprep.subr.mxu0 0.0
  %258 = vmatpush1.msra.mxu0 0.0
  %259 = vmatprep.subr.mxu0 0.0
  %260 = vmatpush1.msra.mxu0 0.0
  %261 = vmatprep.subr.mxu0 0.0
  %262 = vmatpush1.msra.mxu0 %v229
  %263 = vmatprep.subr.mxu0 0.0
  %264 = vmatpush1.msra.mxu0 %v228
  %265 = vmatprep.subr.mxu0 0.0
  %266 = vmatpush1.msra.mxu0 %v227
  %267 = vmatprep.subr.mxu0 0.0
  %268 = vmatpush1.msra.mxu0 %v226
  %269 = vmatprep.subr.mxu0 0.0
  %270 = vmatpush2.msra.mxu0 0.0
  %271 = vmatprep.subr.mxu0 0.0
  %272 = vmatpush2.msra.mxu0 0.0
  %273 = vmatprep.subr.mxu0 0.0
  %274 = vmatpush2.msra.mxu0 0.0
  %275 = vmatprep.subr.mxu0 0.0
  %276 = vmatpush2.msra.mxu0 0.0
  %277 = vmatprep.subr.mxu0 0.0
  %278 = vmatpush2.msra.mxu0 0.0
  %279 = vmatprep.subr.mxu0 0.0
  %280 = vmatpush2.msra.mxu0 0.0
  %281 = vmatprep.subr.mxu0 0.0
  %282 = vmatpush2.msra.mxu0 0.0
  %283 = vmatprep.subr.mxu0 0.0
  %284 = vmatpush2.msra.mxu0 0.0
  %285 = vmatprep.subr.mxu0 0.0
  %286 = vmatpush2.msra.mxu0 0.0
  %287 = vmatprep.subr.mxu0 0.0
  %288 = vmatpush2.msra.mxu0 0.0
  %289 = vmatprep.subr.mxu0 0.0
  %290 = vmatpush2.msra.mxu0 0.0
  %291 = vmatprep.subr.mxu0 0.0
  %292 = vmatpush2.msra.mxu0 0.0
  %293 = vmatprep.subr.mxu0 0.0
  %294 = vmatpush2.msra.mxu0 0.0
  %295 = vmatprep.subr.mxu0 0.0
  %296 = vmatpush2.msra.mxu0 0.0
  %297 = vmatprep.subr.mxu0 0.0
  %298 = vmatpush2.msra.mxu0 0.0
  %299 = vmatprep.subr.mxu0 0.0
  %300 = vmatpush2.msra.mxu0 0.0
  %301 = vmatprep.mubr.f32.mxu0 0.0
  %302 = vmatmul.mubr.f32.gmra.mxu0 %v146
  %v303 = vpop.f32.mrf.mxu0
  %v304 = vadd.f32 %v235, %v303
  %v305 = vpop.f32.mrf.mxu0
  %306 = vmatprep.mubr.f32.mxu0 0.0
  %307 = vmatmul.mubr.f32.gmra.mxu0 %v149
  %v308 = vpop.f32.mrf.mxu0
  %v309 = vadd.f32 %v235, %v308
  %v310 = vpop.f32.mrf.mxu0
  %311 = vdwg.mxu0
  %v312 = vld [vmem:[%s0] sm:$0xff]
  %v313 = vld [vmem:[%s0 + $0x8] sm:$0x1]
  %v314 = vadd.f32 %v218, 1.0
  %v315 = vadd.f32 %v223, 1.0
  %v316 = vmul.f32 %v123, %v314
  %v317 = vmul.f32 %v128, %v315
  %v318 = vadd.f32 %v312, %v316
  %v319 = vadd.f32 %v313, %v317
  %v320 = vadd.f32 %v318, %v304
  %v321 = vadd.f32 %v319, %v309
  %322 = vst.msk [vmem:[%s9] sm:$0xff] %vm144, %v320
  %vm323 = vcmask 253952
  %324 = vst.msk [vmem:[%s9 + $0x8] sm:$0x1] %vm323, %v321
  // Predicated region
  $region38: #{frag_envelope_ql_forward.17} parent=0 // pred_check
    _
  $region39: #{frag_envelope_ql_forward.17} parent=0 // pred_check_branch
    %326 = sbr.rel (0) target = $region41
  $region40: #{frag_envelope_ql_forward.17} parent=0 // pred_region
    _
  $region41: #{frag_envelope_ql_forward.17} parent=0 // pred_fallthru
    _
  // Predicated region
  $region42: #{frag_envelope_ql_forward.17} parent=0 // pred_check
    _
  $region43: #{frag_envelope_ql_forward.17} parent=0 // pred_check_branch
    %328 = sbr.rel (0) target = $region45
  $region44: #{frag_envelope_ql_forward.17} parent=0 // pred_region
    _
  $region45: #{frag_envelope_ql_forward.17} parent=0 // pred_fallthru
    _

// kernel: frag_envelope_ql_forward.18
$region0: #{frag_envelope_ql_forward.18}
  #allocation0 [shape = 'u32[]', space=smem, size = 0x4, offset = 0x4, fixed_abs, tag = 'smem constant byte address 0x4 - core index']
  #allocation1 [shape = 'u32[144,128]{1,0:T(1,128)}', space=vmem, size = 0x12000, scoped, tag = 'internal scratch']
  %s0 = inlined_call_operand.vmem [shape: f32[9,32], index: 0, kind: input, shape index: {}]
  %s1 = inlined_call_operand.vmem [shape: f32[9,32], index: 1, kind: input, shape index: {}]
  %s2 = inlined_call_operand.vmem [shape: f32[32,128], index: 2, kind: input, shape index: {}]
  %s3 = inlined_call_operand.vmem [shape: f32[1,128], index: 3, kind: input, shape index: {}]
  %s4 = inlined_call_operand.vmem [shape: f32[128,32], index: 4, kind: input, shape index: {}]
  %s5 = inlined_call_operand.vmem [shape: f32[1,32], index: 5, kind: input, shape index: {}]
  %s6 = inlined_call_operand.vmem [shape: f32[9,32], index: 6, kind: output, shape index: {}]
  %s7 = sld [smem:[#allocation0]]
  $region34: #{frag_envelope_ql_forward.18} parent=0
    _
  %s9 = ssub.s32 1, %s7
  %s10 = scalar_select 0, %s9, %s7
  // Predicated region
  $region2: #{frag_envelope_ql_forward.18} parent=0 // pred_check
    _
  $region3: #{frag_envelope_ql_forward.18} parent=0 // pred_check_branch
    %12 = sbr.rel (0) target = $region5
  $region4: #{frag_envelope_ql_forward.18} parent=0 // pred_region
    _
  $region5: #{frag_envelope_ql_forward.18} parent=0 // pred_fallthru
    _
  // Predicated region
  $region6: #{frag_envelope_ql_forward.18} parent=0 // pred_check
    _
  $region7: #{frag_envelope_ql_forward.18} parent=0 // pred_check_branch
    %14 = sbr.rel (0) target = $region9
  $region8: #{frag_envelope_ql_forward.18} parent=0 // pred_region
    _
  $region9: #{frag_envelope_ql_forward.18} parent=0 // pred_fallthru
    _
  // Predicated region
  $region10: #{frag_envelope_ql_forward.18} parent=0 // pred_check
    _
  $region11: #{frag_envelope_ql_forward.18} parent=0 // pred_check_branch
    %16 = sbr.rel (0) target = $region13
  $region12: #{frag_envelope_ql_forward.18} parent=0 // pred_region
    _
  $region13: #{frag_envelope_ql_forward.18} parent=0 // pred_fallthru
    _
  // Predicated region
  $region14: #{frag_envelope_ql_forward.18} parent=0 // pred_check
    _
  $region15: #{frag_envelope_ql_forward.18} parent=0 // pred_check_branch
    %18 = sbr.rel (0) target = $region17
  $region16: #{frag_envelope_ql_forward.18} parent=0 // pred_region
    _
  $region17: #{frag_envelope_ql_forward.18} parent=0 // pred_fallthru
    _
  // Predicated region
  $region18: #{frag_envelope_ql_forward.18} parent=0 // pred_check
    _
  $region19: #{frag_envelope_ql_forward.18} parent=0 // pred_check_branch
    %20 = sbr.rel (0) target = $region21
  $region20: #{frag_envelope_ql_forward.18} parent=0 // pred_region
    _
  $region21: #{frag_envelope_ql_forward.18} parent=0 // pred_fallthru
    _
  // Predicated region
  $region22: #{frag_envelope_ql_forward.18} parent=0 // pred_check
    _
  $region23: #{frag_envelope_ql_forward.18} parent=0 // pred_check_branch
    %22 = sbr.rel (0) target = $region25
  $region24: #{frag_envelope_ql_forward.18} parent=0 // pred_region
    _
  $region25: #{frag_envelope_ql_forward.18} parent=0 // pred_fallthru
    _
  %v23 = vld [vmem:[%s1] sm:$0xff]
  %v24 = vld [vmem:[%s1 + $0x8] sm:$0x1]
  %v25 = vld [vmem:[%s2] sm:$0xff]
  %v26 = vld [vmem:[%s2 + $0x8] sm:$0xff]
  %v27 = vld [vmem:[%s2 + $0x10] sm:$0xff]
  %v28 = vld [vmem:[%s2 + $0x18] sm:$0xff]
  %v29 = vld [vmem:[%s3] sm:$0x1]
  %v31 = vlaneseq
  %v32 = vshrl.u32 %v31, 7
  %v33 = vsub.s32 0, %v32
  %v34 = vrot.slane %v29, %v33
  %vm36 = vcmask 261120
  %v38 = vsel %vm36, %v23, 0
  %v41 = vsel %vm36, %v24, 0
  %43 = vmatprep.subr.mxu0 0.0
  %44 = vmatpush1.msra.mxu0 0.0
  %45 = vmatprep.subr.mxu0 0.0
  %46 = vmatpush1.msra.mxu0 0.0
  %47 = vmatprep.subr.mxu0 0.0
  %48 = vmatpush1.msra.mxu0 0.0
  %49 = vmatprep.subr.mxu0 0.0
  %50 = vmatpush1.msra.mxu0 0.0
  %51 = vmatprep.subr.mxu0 0.0
  %52 = vmatpush1.msra.mxu0 0.0
  %53 = vmatprep.subr.mxu0 0.0
  %54 = vmatpush1.msra.mxu0 0.0
  %55 = vmatprep.subr.mxu0 0.0
  %56 = vmatpush1.msra.mxu0 0.0
  %57 = vmatprep.subr.mxu0 0.0
  %58 = vmatpush1.msra.mxu0 0.0
  %59 = vmatprep.subr.mxu0 0.0
  %60 = vmatpush1.msra.mxu0 0.0
  %61 = vmatprep.subr.mxu0 0.0
  %62 = vmatpush1.msra.mxu0 0.0
  %63 = vmatprep.subr.mxu0 0.0
  %64 = vmatpush1.msra.mxu0 0.0
  %65 = vmatprep.subr.mxu0 0.0
  %66 = vmatpush1.msra.mxu0 0.0
  %67 = vmatprep.subr.mxu0 0.0
  %68 = vmatpush1.msra.mxu0 %v28
  %69 = vmatprep.subr.mxu0 0.0
  %70 = vmatpush1.msra.mxu0 %v27
  %71 = vmatprep.subr.mxu0 0.0
  %72 = vmatpush1.msra.mxu0 %v26
  %73 = vmatprep.subr.mxu0 0.0
  %74 = vmatpush1.msra.mxu0 %v25
  %75 = vmatprep.subr.mxu0 0.0
  %76 = vmatpush2.msra.mxu0 0.0
  %77 = vmatprep.subr.mxu0 0.0
  %78 = vmatpush2.msra.mxu0 0.0
  %79 = vmatprep.subr.mxu0 0.0
  %80 = vmatpush2.msra.mxu0 0.0
  %81 = vmatprep.subr.mxu0 0.0
  %82 = vmatpush2.msra.mxu0 0.0
  %83 = vmatprep.subr.mxu0 0.0
  %84 = vmatpush2.msra.mxu0 0.0
  %85 = vmatprep.subr.mxu0 0.0
  %86 = vmatpush2.msra.mxu0 0.0
  %87 = vmatprep.subr.mxu0 0.0
  %88 = vmatpush2.msra.mxu0 0.0
  %89 = vmatprep.subr.mxu0 0.0
  %90 = vmatpush2.msra.mxu0 0.0
  %91 = vmatprep.subr.mxu0 0.0
  %92 = vmatpush2.msra.mxu0 0.0
  %93 = vmatprep.subr.mxu0 0.0
  %94 = vmatpush2.msra.mxu0 0.0
  %95 = vmatprep.subr.mxu0 0.0
  %96 = vmatpush2.msra.mxu0 0.0
  %97 = vmatprep.subr.mxu0 0.0
  %98 = vmatpush2.msra.mxu0 0.0
  %99 = vmatprep.subr.mxu0 0.0
  %100 = vmatpush2.msra.mxu0 0.0
  %101 = vmatprep.subr.mxu0 0.0
  %102 = vmatpush2.msra.mxu0 0.0
  %103 = vmatprep.subr.mxu0 0.0
  %104 = vmatpush2.msra.mxu0 0.0
  %105 = vmatprep.subr.mxu0 0.0
  %106 = vmatpush2.msra.mxu0 0.0
  %107 = vmatprep.mubr.f32.mxu0 0.0
  %108 = vmatmul.mubr.f32.gmra.mxu0 %v38
  %v109 = vpop.f32.mrf.mxu0
  %v110 = vadd.f32 %v34, %v109
  %v111 = vpop.f32.mrf.mxu0
  %112 = vmatprep.mubr.f32.mxu0 0.0
  %113 = vmatmul.mubr.f32.gmra.mxu0 %v41
  %v114 = vpop.f32.mrf.mxu0
  %v115 = vadd.f32 %v34, %v114
  %v116 = vpop.f32.mrf.mxu0
  %117 = vdwg.mxu0
  %vm118 = vcmp.gt.f32.partialorder %v110, 0.0
  %vm119 = vcmp.gt.f32.partialorder %v115, 0.0
  %v120 = vmul.f32 %v110, 0.01
  %v121 = vmul.f32 %v115, 0.01
  %v122 = vsel %vm118, %v110, %v120
  %v123 = vsel %vm119, %v115, %v121
  %v124 = vld [vmem:[%s0] sm:$0xff]
  %v125 = vld [vmem:[%s0 + $0x8] sm:$0x1]
  %v126 = vld [vmem:[%s4] sm:$0xff]
  %v127 = vld [vmem:[%s4 + $0x8] sm:$0xff]
  %v128 = vld [vmem:[%s4 + $0x10] sm:$0xff]
  %v129 = vld [vmem:[%s4 + $0x18] sm:$0xff]
  %v130 = vld [vmem:[%s4 + $0x20] sm:$0xff]
  %v131 = vld [vmem:[%s4 + $0x28] sm:$0xff]
  %v132 = vld [vmem:[%s4 + $0x30] sm:$0xff]
  %v133 = vld [vmem:[%s4 + $0x38] sm:$0xff]
  %v134 = vld [vmem:[%s4 + $0x40] sm:$0xff]
  %v135 = vld [vmem:[%s4 + $0x48] sm:$0xff]
  %v136 = vld [vmem:[%s4 + $0x50] sm:$0xff]
  %v137 = vld [vmem:[%s4 + $0x58] sm:$0xff]
  %v138 = vld [vmem:[%s4 + $0x60] sm:$0xff]
  %v139 = vld [vmem:[%s4 + $0x68] sm:$0xff]
  %v140 = vld [vmem:[%s4 + $0x70] sm:$0xff]
  %v141 = vld [vmem:[%s4 + $0x78] sm:$0xff]
  %142 = vmatprep.subr.mxu0 0.0
  %143 = vmatpush1.msra.mxu0 %v141
  %144 = vmatprep.subr.mxu0 0.0
  %145 = vmatpush1.msra.mxu0 %v140
  %146 = vmatprep.subr.mxu0 0.0
  %147 = vmatpush1.msra.mxu0 %v139
  %148 = vmatprep.subr.mxu0 0.0
  %149 = vmatpush1.msra.mxu0 %v138
  %150 = vmatprep.subr.mxu0 0.0
  %151 = vmatpush1.msra.mxu0 %v137
  %152 = vmatprep.subr.mxu0 0.0
  %153 = vmatpush1.msra.mxu0 %v136
  %154 = vmatprep.subr.mxu0 0.0
  %155 = vmatpush1.msra.mxu0 %v135
  %156 = vmatprep.subr.mxu0 0.0
  %157 = vmatpush1.msra.mxu0 %v134
  %158 = vmatprep.subr.mxu0 0.0
  %159 = vmatpush1.msra.mxu0 %v133
  %160 = vmatprep.subr.mxu0 0.0
  %161 = vmatpush1.msra.mxu0 %v132
  %162 = vmatprep.subr.mxu0 0.0
  %163 = vmatpush1.msra.mxu0 %v131
  %164 = vmatprep.subr.mxu0 0.0
  %165 = vmatpush1.msra.mxu0 %v130
  %166 = vmatprep.subr.mxu0 0.0
  %167 = vmatpush1.msra.mxu0 %v129
  %168 = vmatprep.subr.mxu0 0.0
  %169 = vmatpush1.msra.mxu0 %v128
  %170 = vmatprep.subr.mxu0 0.0
  %171 = vmatpush1.msra.mxu0 %v127
  %172 = vmatprep.subr.mxu0 0.0
  %173 = vmatpush1.msra.mxu0 %v126
  %174 = vmatprep.subr.mxu0 0.0
  %175 = vmatpush2.msra.mxu0 0.0
  %176 = vmatprep.subr.mxu0 0.0
  %177 = vmatpush2.msra.mxu0 0.0
  %178 = vmatprep.subr.mxu0 0.0
  %179 = vmatpush2.msra.mxu0 0.0
  %180 = vmatprep.subr.mxu0 0.0
  %181 = vmatpush2.msra.mxu0 0.0
  %182 = vmatprep.subr.mxu0 0.0
  %183 = vmatpush2.msra.mxu0 0.0
  %184 = vmatprep.subr.mxu0 0.0
  %185 = vmatpush2.msra.mxu0 0.0
  %186 = vmatprep.subr.mxu0 0.0
  %187 = vmatpush2.msra.mxu0 0.0
  %188 = vmatprep.subr.mxu0 0.0
  %189 = vmatpush2.msra.mxu0 0.0
  %190 = vmatprep.subr.mxu0 0.0
  %191 = vmatpush2.msra.mxu0 0.0
  %192 = vmatprep.subr.mxu0 0.0
  %193 = vmatpush2.msra.mxu0 0.0
  %194 = vmatprep.subr.mxu0 0.0
  %195 = vmatpush2.msra.mxu0 0.0
  %196 = vmatprep.subr.mxu0 0.0
  %197 = vmatpush2.msra.mxu0 0.0
  %198 = vmatprep.subr.mxu0 0.0
  %199 = vmatpush2.msra.mxu0 0.0
  %200 = vmatprep.subr.mxu0 0.0
  %201 = vmatpush2.msra.mxu0 0.0
  %202 = vmatprep.subr.mxu0 0.0
  %203 = vmatpush2.msra.mxu0 0.0
  %204 = vmatprep.subr.mxu0 0.0
  %205 = vmatpush2.msra.mxu0 0.0
  %206 = vmatprep.mubr.f32.mxu0 0.0
  %207 = vmatmul.mubr.f32.gmra.mxu0 %v122
  %v208 = vpop.f32.mrf.mxu0
  %v209 = vadd.f32 0.0, %v208
  %v210 = vpop.f32.mrf.mxu0
  %211 = vmatprep.mubr.f32.mxu0 0.0
  %212 = vmatmul.mubr.f32.gmra.mxu0 %v123
  %v213 = vpop.f32.mrf.mxu0
  %v214 = vadd.f32 0.0, %v213
  %v215 = vpop.f32.mrf.mxu0
  %216 = vdwg.mxu0
  %v217 = vadd.f32 %v124, %v209
  %v218 = vadd.f32 %v125, %v214
  %v219 = vld [vmem:[%s5] sm:$0x1]
  %v221 = vlaneseq
  %v222 = vshrl.u32 %v221, 7
  %v223 = vsub.s32 0, %v222
  %v224 = vrot.slane %v219, %v223
  %v226 = vadd.f32 %v217, %v224
  %v227 = vadd.f32 %v218, %v224
  %228 = vst.msk [vmem:[%s6] sm:$0xff] %vm36, %v226
  %vm229 = vcmask 253952
  %230 = vst.msk [vmem:[%s6 + $0x8] sm:$0x1] %vm229, %v227
  // Predicated region
  $region26: #{frag_envelope_ql_forward.18} parent=0 // pred_check
    _
  $region27: #{frag_envelope_ql_forward.18} parent=0 // pred_check_branch
    %232 = sbr.rel (0) target = $region29
  $region28: #{frag_envelope_ql_forward.18} parent=0 // pred_region
    _
  $region29: #{frag_envelope_ql_forward.18} parent=0 // pred_fallthru
    _
  // Predicated region
  $region30: #{frag_envelope_ql_forward.18} parent=0 // pred_check
    _
  $region31: #{frag_envelope_ql_forward.18} parent=0 // pred_check_branch
    %234 = sbr.rel (0) target = $region33
  $region32: #{frag_envelope_ql_forward.18} parent=0 // pred_region
    _
  $region33: #{frag_envelope_ql_forward.18} parent=0 // pred_fallthru
    _

// kernel: frag_envelope_ql_forward.23
$region0: #{frag_envelope_ql_forward.23}
  #allocation0 [shape = 'u32[]', space=smem, size = 0x4, offset = 0x4, fixed_abs, tag = 'smem constant byte address 0x4 - core index']
  #allocation1 [shape = 'u32[144,128]{1,0:T(1,128)}', space=vmem, size = 0x12000, scoped, tag = 'internal scratch']
  #allocation2 [shape = 'f32[1,1]{1,0:T(1,128)S(1)}', space=vmem, size = 0x200, scoped, tag = 'scoped memory for frag_envelope_ql_forward.23']
  %s0 = inlined_call_operand.vmem [shape: f32[7,64], index: 0, kind: input, shape index: {}]
  %s1 = inlined_call_operand.vmem [shape: f32[2,96], index: 1, kind: input, shape index: {}]
  %s2 = inlined_call_operand.vmem [shape: f32[16,64], index: 2, kind: input, shape index: {}]
  %s3 = inlined_call_operand.vmem [shape: f32[7,5], index: 3, kind: input, shape index: {}]
  %s4 = inlined_call_operand.vmem [shape: f32[8,6], index: 4, kind: input, shape index: {}]
  %s5 = inlined_call_operand.vmem [shape: f32[2,2], index: 5, kind: input, shape index: {}]
  %s6 = inlined_call_operand.vmem [shape: f32[7,2], index: 6, kind: input, shape index: {}]
  %s7 = inlined_call_operand.vmem [shape: f32[8,2], index: 7, kind: input, shape index: {}]
  %s8 = inlined_call_operand.vmem [shape: f32[64,32], index: 8, kind: input, shape index: {}]
  %s9 = inlined_call_operand.vmem [shape: f32[1,32], index: 9, kind: input, shape index: {}]
  %s10 = inlined_call_operand.vmem [shape: f32[32,6], index: 10, kind: input, shape index: {}]
  %s11 = inlined_call_operand.vmem [shape: f32[64,6], index: 11, kind: input, shape index: {}]
  %s12 = inlined_call_operand.vmem [shape: f32[1,6], index: 12, kind: input, shape index: {}]
  %s13 = inlined_call_operand.vmem [shape: f32[64,10], index: 13, kind: input, shape index: {}]
  %s14 = inlined_call_operand.vmem [shape: f32[1,10], index: 14, kind: input, shape index: {}]
  %s15 = inlined_call_operand.vmem [shape: f32[96,2], index: 15, kind: input, shape index: {}]
  %s16 = inlined_call_operand.vmem [shape: f32[1,2], index: 16, kind: input, shape index: {}]
  %s17 = inlined_call_operand.vmem [shape: f32[96,1], index: 17, kind: input, shape index: {}]
  %s18 = inlined_call_operand.<no memory space> [shape: f32[1,1], index: 18, kind: input, shape index: {}]
  %s19 = inlined_call_operand.vmem [shape: f32[2,2], index: 19, kind: output, shape index: {0}]
  %s20 = inlined_call_operand.hbm [shape: f32[7,5], index: 20, kind: output, shape index: {1}]
  %s21 = inlined_call_operand.hbm [shape: f32[8,6], index: 21, kind: output, shape index: {2}]
  %22 = xla_tuple %s19, %s20, %s21
  %s23 = sld [smem:[#allocation0]]
  $region102: #{frag_envelope_ql_forward.23} parent=0
    _
  %s25 = ssub.s32 1, %s23
  %s26 = scalar_select 0, %s25, %s23
  %v27 = vstv %s18
  %28 = vst [vmem:[#allocation2] sm:$0x1] %v27
  $region1: #{frag_envelope_ql_forward.23} parent=0
    #allocation3 [shape = 'u8[4096]{0}', space=vmem, size = 0x1000, scoped, tag = 'output window, operand 1, single buffered']
    #allocation4 [shape = 's32[1]{0}', space=sflag, size = 0x4, scoped, tag = 'scoped memory for frag_envelope_ql_forward.23']
    #allocation5 [shape = 'u8[4096]{0}', space=vmem, size = 0x1000, scoped, tag = 'output window, operand 2, single buffered']
    #allocation6 [shape = 's32[1]{0}', space=sflag, size = 0x4, scoped, tag = 'scoped memory for frag_envelope_ql_forward.23']
    %29 = vsyncpa [#allocation4], 0
    %30 = vsyncpa [#allocation6], 0
    // Predicated region
    $region2: #{frag_envelope_ql_forward.23} parent=1 // pred_check
      _
    $region3: #{frag_envelope_ql_forward.23} parent=1 // pred_check_branch
      %32 = sbr.rel (0) target = $region5
    $region4: #{frag_envelope_ql_forward.23} parent=1 // pred_region
      _
    $region5: #{frag_envelope_ql_forward.23} parent=1 // pred_fallthru
      _
    // Predicated region
    $region6: #{frag_envelope_ql_forward.23} parent=1 // pred_check
      _
    $region7: #{frag_envelope_ql_forward.23} parent=1 // pred_check_branch
      %34 = sbr.rel (0) target = $region9
    $region8: #{frag_envelope_ql_forward.23} parent=1 // pred_region
      _
    $region9: #{frag_envelope_ql_forward.23} parent=1 // pred_fallthru
      _
    // Predicated region
    $region10: #{frag_envelope_ql_forward.23} parent=1 // pred_check
      _
    $region11: #{frag_envelope_ql_forward.23} parent=1 // pred_check_branch
      %36 = sbr.rel (0) target = $region13
    $region12: #{frag_envelope_ql_forward.23} parent=1 // pred_region
      _
    $region13: #{frag_envelope_ql_forward.23} parent=1 // pred_fallthru
      _
    // Predicated region
    $region14: #{frag_envelope_ql_forward.23} parent=1 // pred_check
      _
    $region15: #{frag_envelope_ql_forward.23} parent=1 // pred_check_branch
      %38 = sbr.rel (0) target = $region17
    $region16: #{frag_envelope_ql_forward.23} parent=1 // pred_region
      _
    $region17: #{frag_envelope_ql_forward.23} parent=1 // pred_fallthru
      _
    // Predicated region
    $region18: #{frag_envelope_ql_forward.23} parent=1 // pred_check
      _
    $region19: #{frag_envelope_ql_forward.23} parent=1 // pred_check_branch
      %40 = sbr.rel (0) target = $region21
    $region20: #{frag_envelope_ql_forward.23} parent=1 // pred_region
      _
    $region21: #{frag_envelope_ql_forward.23} parent=1 // pred_fallthru
      _
    // Predicated region
    $region22: #{frag_envelope_ql_forward.23} parent=1 // pred_check
      _
    $region23: #{frag_envelope_ql_forward.23} parent=1 // pred_check_branch
      %42 = sbr.rel (0) target = $region25
    $region24: #{frag_envelope_ql_forward.23} parent=1 // pred_region
      _
    $region25: #{frag_envelope_ql_forward.23} parent=1 // pred_fallthru
      _
    // Predicated region
    $region26: #{frag_envelope_ql_forward.23} parent=1 // pred_check
      _
    $region27: #{frag_envelope_ql_forward.23} parent=1 // pred_check_branch
      %44 = sbr.rel (0) target = $region29
    $region28: #{frag_envelope_ql_forward.23} parent=1 // pred_region
      _
    $region29: #{frag_envelope_ql_forward.23} parent=1 // pred_fallthru
      _
    // Predicated region
    $region30: #{frag_envelope_ql_forward.23} parent=1 // pred_check
      _
    $region31: #{frag_envelope_ql_forward.23} parent=1 // pred_check_branch
      %46 = sbr.rel (0) target = $region33
    $region32: #{frag_envelope_ql_forward.23} parent=1 // pred_region
      _
    $region33: #{frag_envelope_ql_forward.23} parent=1 // pred_fallthru
      _
    // Predicated region
    $region34: #{frag_envelope_ql_forward.23} parent=1 // pred_check
      _
    $region35: #{frag_envelope_ql_forward.23} parent=1 // pred_check_branch
      %48 = sbr.rel (0) target = $region37
    $region36: #{frag_envelope_ql_forward.23} parent=1 // pred_region
      _
    $region37: #{frag_envelope_ql_forward.23} parent=1 // pred_fallthru
      _
    // Predicated region
    $region38: #{frag_envelope_ql_forward.23} parent=1 // pred_check
      _
    $region39: #{frag_envelope_ql_forward.23} parent=1 // pred_check_branch
      %50 = sbr.rel (0) target = $region41
    $region40: #{frag_envelope_ql_forward.23} parent=1 // pred_region
      _
    $region41: #{frag_envelope_ql_forward.23} parent=1 // pred_fallthru
      _
    // Predicated region
    $region42: #{frag_envelope_ql_forward.23} parent=1 // pred_check
      _
    $region43: #{frag_envelope_ql_forward.23} parent=1 // pred_check_branch
      %52 = sbr.rel (0) target = $region45
    $region44: #{frag_envelope_ql_forward.23} parent=1 // pred_region
      _
    $region45: #{frag_envelope_ql_forward.23} parent=1 // pred_fallthru
      _
    // Predicated region
    $region46: #{frag_envelope_ql_forward.23} parent=1 // pred_check
      _
    $region47: #{frag_envelope_ql_forward.23} parent=1 // pred_check_branch
      %54 = sbr.rel (0) target = $region49
    $region48: #{frag_envelope_ql_forward.23} parent=1 // pred_region
      _
    $region49: #{frag_envelope_ql_forward.23} parent=1 // pred_fallthru
      _
    // Predicated region
    $region50: #{frag_envelope_ql_forward.23} parent=1 // pred_check
      _
    $region51: #{frag_envelope_ql_forward.23} parent=1 // pred_check_branch
      %56 = sbr.rel (0) target = $region53
    $region52: #{frag_envelope_ql_forward.23} parent=1 // pred_region
      _
    $region53: #{frag_envelope_ql_forward.23} parent=1 // pred_fallthru
      _
    // Predicated region
    $region54: #{frag_envelope_ql_forward.23} parent=1 // pred_check
      _
    $region55: #{frag_envelope_ql_forward.23} parent=1 // pred_check_branch
      %58 = sbr.rel (0) target = $region57
    $region56: #{frag_envelope_ql_forward.23} parent=1 // pred_region
      _
    $region57: #{frag_envelope_ql_forward.23} parent=1 // pred_fallthru
      _
    // Predicated region
    $region58: #{frag_envelope_ql_forward.23} parent=1 // pred_check
      _
    $region59: #{frag_envelope_ql_forward.23} parent=1 // pred_check_branch
      %60 = sbr.rel (0) target = $region61
    $region60: #{frag_envelope_ql_forward.23} parent=1 // pred_region
      _
    $region61: #{frag_envelope_ql_forward.23} parent=1 // pred_fallthru
      _
    // Predicated region
    $region62: #{frag_envelope_ql_forward.23} parent=1 // pred_check
      _
    $region63: #{frag_envelope_ql_forward.23} parent=1 // pred_check_branch
      %62 = sbr.rel (0) target = $region65
    $region64: #{frag_envelope_ql_forward.23} parent=1 // pred_region
      _
    $region65: #{frag_envelope_ql_forward.23} parent=1 // pred_fallthru
      _
    // Predicated region
    $region66: #{frag_envelope_ql_forward.23} parent=1 // pred_check
      _
    $region67: #{frag_envelope_ql_forward.23} parent=1 // pred_check_branch
      %64 = sbr.rel (0) target = $region69
    $region68: #{frag_envelope_ql_forward.23} parent=1 // pred_region
      _
    $region69: #{frag_envelope_ql_forward.23} parent=1 // pred_fallthru
      _
    // Predicated region
    $region70: #{frag_envelope_ql_forward.23} parent=1 // pred_check
      _
    $region71: #{frag_envelope_ql_forward.23} parent=1 // pred_check_branch
      %66 = sbr.rel (0) target = $region73
    $region72: #{frag_envelope_ql_forward.23} parent=1 // pred_region
      _
    $region73: #{frag_envelope_ql_forward.23} parent=1 // pred_fallthru
      _
    // Predicated region
    $region74: #{frag_envelope_ql_forward.23} parent=1 // pred_check
      _
    $region75: #{frag_envelope_ql_forward.23} parent=1 // pred_check_branch
      %68 = sbr.rel (0) target = $region77
    $region76: #{frag_envelope_ql_forward.23} parent=1 // pred_region
      _
    $region77: #{frag_envelope_ql_forward.23} parent=1 // pred_fallthru
      _
    %v69 = vld [vmem:[%s0] sm:$0x7f]
    %v70 = vld [vmem:[%s1] sm:$0x3]
    %v71 = vld [vmem:[%s2] sm:$0xff]
    %v72 = vld [vmem:[%s2 + $0x8] sm:$0xff]
    %v73 = vadd.f32 %v71, %v72
    %v74 = vld [vmem:[%s8] sm:$0xff]
    %v75 = vld [vmem:[%s8 + $0x8] sm:$0xff]
    %v76 = vld [vmem:[%s8 + $0x10] sm:$0xff]
    %v77 = vld [vmem:[%s8 + $0x18] sm:$0xff]
    %v78 = vld [vmem:[%s8 + $0x20] sm:$0xff]
    %v79 = vld [vmem:[%s8 + $0x28] sm:$0xff]
    %v80 = vld [vmem:[%s8 + $0x30] sm:$0xff]
    %v81 = vld [vmem:[%s8 + $0x38] sm:$0xff]
    %v82 = vld [vmem:[%s9] sm:$0x1]
    %v84 = vlaneseq
    %v85 = vshrl.u32 %v84, 7
    %v86 = vsub.s32 0, %v85
    %v87 = vrot.slane %v82, %v86
    %vm89 = vcmask 523264
    %v91 = vsel %vm89, %v73, 0
    %93 = vmatprep.subr.mxu0 0.0
    %94 = vmatpush1.msra.mxu0 0.0
    %95 = vmatprep.subr.mxu0 0.0
    %96 = vmatpush1.msra.mxu0 0.0
    %97 = vmatprep.subr.mxu0 0.0
    %98 = vmatpush1.msra.mxu0 0.0
    %99 = vmatprep.subr.mxu0 0.0
    %100 = vmatpush1.msra.mxu0 0.0
    %101 = vmatprep.subr.mxu0 0.0
    %102 = vmatpush1.msra.mxu0 0.0
    %103 = vmatprep.subr.mxu0 0.0
    %104 = vmatpush1.msra.mxu0 0.0
    %105 = vmatprep.subr.mxu0 0.0
    %106 = vmatpush1.msra.mxu0 0.0
    %107 = vmatprep.subr.mxu0 0.0
    %108 = vmatpush1.msra.mxu0 0.0
    %109 = vmatprep.subr.mxu0 0.0
    %110 = vmatpush1.msra.mxu0 %v81
    %111 = vmatprep.subr.mxu0 0.0
    %112 = vmatpush1.msra.mxu0 %v80
    %113 = vmatprep.subr.mxu0 0.0
    %114 = vmatpush1.msra.mxu0 %v79
    %115 = vmatprep.subr.mxu0 0.0
    %116 = vmatpush1.msra.mxu0 %v78
    %117 = vmatprep.subr.mxu0 0.0
    %118 = vmatpush1.msra.mxu0 %v77
    %119 = vmatprep.subr.mxu0 0.0
    %120 = vmatpush1.msra.mxu0 %v76
    %121 = vmatprep.subr.mxu0 0.0
    %122 = vmatpush1.msra.mxu0 %v75
    %123 = vmatprep.subr.mxu0 0.0
    %124 = vmatpush1.msra.mxu0 %v74
    %125 = vmatprep.subr.mxu0 0.0
    %126 = vmatpush2.msra.mxu0 0.0
    %127 = vmatprep.subr.mxu0 0.0
    %128 = vmatpush2.msra.mxu0 0.0
    %129 = vmatprep.subr.mxu0 0.0
    %130 = vmatpush2.msra.mxu0 0.0
    %131 = vmatprep.subr.mxu0 0.0
    %132 = vmatpush2.msra.mxu0 0.0
    %133 = vmatprep.subr.mxu0 0.0
    %134 = vmatpush2.msra.mxu0 0.0
    %135 = vmatprep.subr.mxu0 0.0
    %136 = vmatpush2.msra.mxu0 0.0
    %137 = vmatprep.subr.mxu0 0.0
    %138 = vmatpush2.msra.mxu0 0.0
    %139 = vmatprep.subr.mxu0 0.0
    %140 = vmatpush2.msra.mxu0 0.0
    %141 = vmatprep.subr.mxu0 0.0
    %142 = vmatpush2.msra.mxu0 0.0
    %143 = vmatprep.subr.mxu0 0.0
    %144 = vmatpush2.msra.mxu0 0.0
    %145 = vmatprep.subr.mxu0 0.0
    %146 = vmatpush2.msra.mxu0 0.0
    %147 = vmatprep.subr.mxu0 0.0
    %148 = vmatpush2.msra.mxu0 0.0
    %149 = vmatprep.subr.mxu0 0.0
    %150 = vmatpush2.msra.mxu0 0.0
    %151 = vmatprep.subr.mxu0 0.0
    %152 = vmatpush2.msra.mxu0 0.0
    %153 = vmatprep.subr.mxu0 0.0
    %154 = vmatpush2.msra.mxu0 0.0
    %155 = vmatprep.subr.mxu0 0.0
    %156 = vmatpush2.msra.mxu0 0.0
    %157 = vmatprep.mubr.f32.mxu0 0.0
    %158 = vmatmul.mubr.f32.gmra.mxu0 %v91
    %v159 = vpop.f32.mrf.mxu0
    %v160 = vadd.f32 %v87, %v159
    %v161 = vpop.f32.mrf.mxu0
    %162 = vdwg.mxu0
    %v163 = vld [vmem:[%s10] sm:$0xff]
    %v164 = vld [vmem:[%s10 + $0x8] sm:$0xff]
    %v165 = vld [vmem:[%s10 + $0x10] sm:$0xff]
    %v166 = vld [vmem:[%s10 + $0x18] sm:$0xff]
    %v167 = vld [vmem:[%s12] sm:$0x1]
    %v169 = vlaneseq
    %v170 = vshrl.u32 %v169, 7
    %v171 = vsub.s32 0, %v170
    %v172 = vrot.slane %v167, %v171
    %vm174 = vcmask 261120
    %v176 = vsel %vm174, %v160, 0
    %178 = vmatprep.subr.mxu0 0.0
    %179 = vmatpush1.msra.mxu0 0.0
    %180 = vmatprep.subr.mxu0 0.0
    %181 = vmatpush1.msra.mxu0 0.0
    %182 = vmatprep.subr.mxu0 0.0
    %183 = vmatpush1.msra.mxu0 0.0
    %184 = vmatprep.subr.mxu0 0.0
    %185 = vmatpush1.msra.mxu0 0.0
    %186 = vmatprep.subr.mxu0 0.0
    %187 = vmatpush1.msra.mxu0 0.0
    %188 = vmatprep.subr.mxu0 0.0
    %189 = vmatpush1.msra.mxu0 0.0
    %190 = vmatprep.subr.mxu0 0.0
    %191 = vmatpush1.msra.mxu0 0.0
    %192 = vmatprep.subr.mxu0 0.0
    %193 = vmatpush1.msra.mxu0 0.0
    %194 = vmatprep.subr.mxu0 0.0
    %195 = vmatpush1.msra.mxu0 0.0
    %196 = vmatprep.subr.mxu0 0.0
    %197 = vmatpush1.msra.mxu0 0.0
    %198 = vmatprep.subr.mxu0 0.0
    %199 = vmatpush1.msra.mxu0 0.0
    %200 = vmatprep.subr.mxu0 0.0
    %201 = vmatpush1.msra.mxu0 0.0
    %202 = vmatprep.subr.mxu0 0.0
    %203 = vmatpush1.msra.mxu0 %v166
    %204 = vmatprep.subr.mxu0 0.0
    %205 = vmatpush1.msra.mxu0 %v165
    %206 = vmatprep.subr.mxu0 0.0
    %207 = vmatpush1.msra.mxu0 %v164
    %208 = vmatprep.subr.mxu0 0.0
    %209 = vmatpush1.msra.mxu0 %v163
    %210 = vmatprep.subr.mxu0 0.0
    %211 = vmatpush2.msra.mxu0 0.0
    %212 = vmatprep.subr.mxu0 0.0
    %213 = vmatpush2.msra.mxu0 0.0
    %214 = vmatprep.subr.mxu0 0.0
    %215 = vmatpush2.msra.mxu0 0.0
    %216 = vmatprep.subr.mxu0 0.0
    %217 = vmatpush2.msra.mxu0 0.0
    %218 = vmatprep.subr.mxu0 0.0
    %219 = vmatpush2.msra.mxu0 0.0
    %220 = vmatprep.subr.mxu0 0.0
    %221 = vmatpush2.msra.mxu0 0.0
    %222 = vmatprep.subr.mxu0 0.0
    %223 = vmatpush2.msra.mxu0 0.0
    %224 = vmatprep.subr.mxu0 0.0
    %225 = vmatpush2.msra.mxu0 0.0
    %226 = vmatprep.subr.mxu0 0.0
    %227 = vmatpush2.msra.mxu0 0.0
    %228 = vmatprep.subr.mxu0 0.0
    %229 = vmatpush2.msra.mxu0 0.0
    %230 = vmatprep.subr.mxu0 0.0
    %231 = vmatpush2.msra.mxu0 0.0
    %232 = vmatprep.subr.mxu0 0.0
    %233 = vmatpush2.msra.mxu0 0.0
    %234 = vmatprep.subr.mxu0 0.0
    %235 = vmatpush2.msra.mxu0 0.0
    %236 = vmatprep.subr.mxu0 0.0
    %237 = vmatpush2.msra.mxu0 0.0
    %238 = vmatprep.subr.mxu0 0.0
    %239 = vmatpush2.msra.mxu0 0.0
    %240 = vmatprep.subr.mxu0 0.0
    %241 = vmatpush2.msra.mxu0 0.0
    %242 = vmatprep.mubr.f32.mxu0 0.0
    %243 = vmatmul.mubr.f32.gmra.mxu0 %v176
    %v244 = vpop.f32.mrf.mxu0
    %v245 = vadd.f32 %v172, %v244
    %v246 = vpop.f32.mrf.mxu0
    %247 = vdwg.mxu0
    %v248 = vld [vmem:[%s11] sm:$0xff]
    %v249 = vld [vmem:[%s11 + $0x8] sm:$0xff]
    %v250 = vld [vmem:[%s11 + $0x10] sm:$0xff]
    %v251 = vld [vmem:[%s11 + $0x18] sm:$0xff]
    %v252 = vld [vmem:[%s11 + $0x20] sm:$0xff]
    %v253 = vld [vmem:[%s11 + $0x28] sm:$0xff]
    %v254 = vld [vmem:[%s11 + $0x30] sm:$0xff]
    %v255 = vld [vmem:[%s11 + $0x38] sm:$0xff]
    %v257 = vsel %vm89, %v71, 0
    %v260 = vsel %vm89, %v72, 0
    %262 = vmatprep.subr.mxu0 0.0
    %263 = vmatpush1.msra.mxu0 0.0
    %264 = vmatprep.subr.mxu0 0.0
    %265 = vmatpush1.msra.mxu0 0.0
    %266 = vmatprep.subr.mxu0 0.0
    %267 = vmatpush1.msra.mxu0 0.0
    %268 = vmatprep.subr.mxu0 0.0
    %269 = vmatpush1.msra.mxu0 0.0
    %270 = vmatprep.subr.mxu0 0.0
    %271 = vmatpush1.msra.mxu0 0.0
    %272 = vmatprep.subr.mxu0 0.0
    %273 = vmatpush1.msra.mxu0 0.0
    %274 = vmatprep.subr.mxu0 0.0
    %275 = vmatpush1.msra.mxu0 0.0
    %276 = vmatprep.subr.mxu0 0.0
    %277 = vmatpush1.msra.mxu0 0.0
    %278 = vmatprep.subr.mxu0 0.0
    %279 = vmatpush1.msra.mxu0 %v255
    %280 = vmatprep.subr.mxu0 0.0
    %281 = vmatpush1.msra.mxu0 %v254
    %282 = vmatprep.subr.mxu0 0.0
    %283 = vmatpush1.msra.mxu0 %v253
    %284 = vmatprep.subr.mxu0 0.0
    %285 = vmatpush1.msra.mxu0 %v252
    %286 = vmatprep.subr.mxu0 0.0
    %287 = vmatpush1.msra.mxu0 %v251
    %288 = vmatprep.subr.mxu0 0.0
    %289 = vmatpush1.msra.mxu0 %v250
    %290 = vmatprep.subr.mxu0 0.0
    %291 = vmatpush1.msra.mxu0 %v249
    %292 = vmatprep.subr.mxu0 0.0
    %293 = vmatpush1.msra.mxu0 %v248
    %294 = vmatprep.subr.mxu0 0.0
    %295 = vmatpush2.msra.mxu0 0.0
    %296 = vmatprep.subr.mxu0 0.0
    %297 = vmatpush2.msra.mxu0 0.0
    %298 = vmatprep.subr.mxu0 0.0
    %299 = vmatpush2.msra.mxu0 0.0
    %300 = vmatprep.subr.mxu0 0.0
    %301 = vmatpush2.msra.mxu0 0.0
    %302 = vmatprep.subr.mxu0 0.0
    %303 = vmatpush2.msra.mxu0 0.0
    %304 = vmatprep.subr.mxu0 0.0
    %305 = vmatpush2.msra.mxu0 0.0
    %306 = vmatprep.subr.mxu0 0.0
    %307 = vmatpush2.msra.mxu0 0.0
    %308 = vmatprep.subr.mxu0 0.0
    %309 = vmatpush2.msra.mxu0 0.0
    %310 = vmatprep.subr.mxu0 0.0
    %311 = vmatpush2.msra.mxu0 0.0
    %312 = vmatprep.subr.mxu0 0.0
    %313 = vmatpush2.msra.mxu0 0.0
    %314 = vmatprep.subr.mxu0 0.0
    %315 = vmatpush2.msra.mxu0 0.0
    %316 = vmatprep.subr.mxu0 0.0
    %317 = vmatpush2.msra.mxu0 0.0
    %318 = vmatprep.subr.mxu0 0.0
    %319 = vmatpush2.msra.mxu0 0.0
    %320 = vmatprep.subr.mxu0 0.0
    %321 = vmatpush2.msra.mxu0 0.0
    %322 = vmatprep.subr.mxu0 0.0
    %323 = vmatpush2.msra.mxu0 0.0
    %324 = vmatprep.subr.mxu0 0.0
    %325 = vmatpush2.msra.mxu0 0.0
    %326 = vmatprep.mubr.f32.mxu0 0.0
    %327 = vmatmul.mubr.f32.gmra.mxu0 %v257
    %v328 = vpop.f32.mrf.mxu0
    %v329 = vadd.f32 0.0, %v328
    %v330 = vpop.f32.mrf.mxu0
    %331 = vmatprep.mubr.f32.mxu0 0.0
    %332 = vmatmul.mubr.f32.gmra.mxu0 %v260
    %v333 = vpop.f32.mrf.mxu0
    %v334 = vadd.f32 0.0, %v333
    %v335 = vpop.f32.mrf.mxu0
    %336 = vdwg.mxu0
    %v337 = vadd.f32 %v245, %v329
    %v338 = vmax.f32 %v337, 0.0
    %v339 = vadd.f32 %v245, %v334
    %v340 = vmax.f32 %v339, 0.0
    %v341 = vld [vmem:[%s13] sm:$0xff]
    %v342 = vld [vmem:[%s13 + $0x8] sm:$0xff]
    %v343 = vld [vmem:[%s13 + $0x10] sm:$0xff]
    %v344 = vld [vmem:[%s13 + $0x18] sm:$0xff]
    %v345 = vld [vmem:[%s13 + $0x20] sm:$0xff]
    %v346 = vld [vmem:[%s13 + $0x28] sm:$0xff]
    %v347 = vld [vmem:[%s13 + $0x30] sm:$0xff]
    %v348 = vld [vmem:[%s13 + $0x38] sm:$0xff]
    %v349 = vld [vmem:[%s14] sm:$0x1]
    %v351 = vlaneseq
    %v352 = vshrl.u32 %v351, 7
    %v353 = vsub.s32 0, %v352
    %v354 = vrot.slane %v349, %v353
    %v357 = vsel %vm89, %v69, 0
    %359 = vmatprep.subr.mxu0 0.0
    %360 = vmatpush1.msra.mxu0 0.0
    %361 = vmatprep.subr.mxu0 0.0
    %362 = vmatpush1.msra.mxu0 0.0
    %363 = vmatprep.subr.mxu0 0.0
    %364 = vmatpush1.msra.mxu0 0.0
    %365 = vmatprep.subr.mxu0 0.0
    %366 = vmatpush1.msra.mxu0 0.0
    %367 = vmatprep.subr.mxu0 0.0
    %368 = vmatpush1.msra.mxu0 0.0
    %369 = vmatprep.subr.mxu0 0.0
    %370 = vmatpush1.msra.mxu0 0.0
    %371 = vmatprep.subr.mxu0 0.0
    %372 = vmatpush1.msra.mxu0 0.0
    %373 = vmatprep.subr.mxu0 0.0
    %374 = vmatpush1.msra.mxu0 0.0
    %375 = vmatprep.subr.mxu0 0.0
    %376 = vmatpush1.msra.mxu0 %v348
    %377 = vmatprep.subr.mxu0 0.0
    %378 = vmatpush1.msra.mxu0 %v347
    %379 = vmatprep.subr.mxu0 0.0
    %380 = vmatpush1.msra.mxu0 %v346
    %381 = vmatprep.subr.mxu0 0.0
    %382 = vmatpush1.msra.mxu0 %v345
    %383 = vmatprep.subr.mxu0 0.0
    %384 = vmatpush1.msra.mxu0 %v344
    %385 = vmatprep.subr.mxu0 0.0
    %386 = vmatpush1.msra.mxu0 %v343
    %387 = vmatprep.subr.mxu0 0.0
    %388 = vmatpush1.msra.mxu0 %v342
    %389 = vmatprep.subr.mxu0 0.0
    %390 = vmatpush1.msra.mxu0 %v341
    %391 = vmatprep.subr.mxu0 0.0
    %392 = vmatpush2.msra.mxu0 0.0
    %393 = vmatprep.subr.mxu0 0.0
    %394 = vmatpush2.msra.mxu0 0.0
    %395 = vmatprep.subr.mxu0 0.0
    %396 = vmatpush2.msra.mxu0 0.0
    %397 = vmatprep.subr.mxu0 0.0
    %398 = vmatpush2.msra.mxu0 0.0
    %399 = vmatprep.subr.mxu0 0.0
    %400 = vmatpush2.msra.mxu0 0.0
    %401 = vmatprep.subr.mxu0 0.0
    %402 = vmatpush2.msra.mxu0 0.0
    %403 = vmatprep.subr.mxu0 0.0
    %404 = vmatpush2.msra.mxu0 0.0
    %405 = vmatprep.subr.mxu0 0.0
    %406 = vmatpush2.msra.mxu0 0.0
    %407 = vmatprep.subr.mxu0 0.0
    %408 = vmatpush2.msra.mxu0 0.0
    %409 = vmatprep.subr.mxu0 0.0
    %410 = vmatpush2.msra.mxu0 0.0
    %411 = vmatprep.subr.mxu0 0.0
    %412 = vmatpush2.msra.mxu0 0.0
    %413 = vmatprep.subr.mxu0 0.0
    %414 = vmatpush2.msra.mxu0 0.0
    %415 = vmatprep.subr.mxu0 0.0
    %416 = vmatpush2.msra.mxu0 0.0
    %417 = vmatprep.subr.mxu0 0.0
    %418 = vmatpush2.msra.mxu0 0.0
    %419 = vmatprep.subr.mxu0 0.0
    %420 = vmatpush2.msra.mxu0 0.0
    %421 = vmatprep.subr.mxu0 0.0
    %422 = vmatpush2.msra.mxu0 0.0
    %423 = vmatprep.mubr.f32.mxu0 0.0
    %424 = vmatmul.mubr.f32.gmra.mxu0 %v357
    %v425 = vpop.f32.mrf.mxu0
    %v426 = vadd.f32 %v354, %v425
    %v427 = vpop.f32.mrf.mxu0
    %428 = vdwg.mxu0
    %v429 = vmax.f32 %v426, 0.0
    %v430 = vld [vmem:[%s15] sm:$0xff]
    %v431 = vld [vmem:[%s15 + $0x8] sm:$0xff]
    %v432 = vld [vmem:[%s15 + $0x10] sm:$0xff]
    %v433 = vld [vmem:[%s15 + $0x18] sm:$0xff]
    %v434 = vld [vmem:[%s15 + $0x20] sm:$0xff]
    %v435 = vld [vmem:[%s15 + $0x28] sm:$0xff]
    %v436 = vld [vmem:[%s15 + $0x30] sm:$0xff]
    %v437 = vld [vmem:[%s15 + $0x38] sm:$0xff]
    %v438 = vld [vmem:[%s15 + $0x40] sm:$0xff]
    %v439 = vld [vmem:[%s15 + $0x48] sm:$0xff]
    %v440 = vld [vmem:[%s15 + $0x50] sm:$0xff]
    %v441 = vld [vmem:[%s15 + $0x58] sm:$0xff]
    %v442 = vld [vmem:[%s16] sm:$0x1]
    %v444 = vlaneseq
    %v445 = vshrl.u32 %v444, 7
    %v446 = vsub.s32 0, %v445
    %v447 = vrot.slane %v442, %v446
    %vm449 = vcmask 785408
    %v451 = vsel %vm449, %v70, 0
    %453 = vmatprep.subr.mxu0 0.0
    %454 = vmatpush1.msra.mxu0 0.0
    %455 = vmatprep.subr.mxu0 0.0
    %456 = vmatpush1.msra.mxu0 0.0
    %457 = vmatprep.subr.mxu0 0.0
    %458 = vmatpush1.msra.mxu0 0.0
    %459 = vmatprep.subr.mxu0 0.0
    %460 = vmatpush1.msra.mxu0 0.0
    %461 = vmatprep.subr.mxu0 0.0
    %462 = vmatpush1.msra.mxu0 %v441
    %463 = vmatprep.subr.mxu0 0.0
    %464 = vmatpush1.msra.mxu0 %v440
    %465 = vmatprep.subr.mxu0 0.0
    %466 = vmatpush1.msra.mxu0 %v439
    %467 = vmatprep.subr.mxu0 0.0
    %468 = vmatpush1.msra.mxu0 %v438
    %469 = vmatprep.subr.mxu0 0.0
    %470 = vmatpush1.msra.mxu0 %v437
    %471 = vmatprep.subr.mxu0 0.0
    %472 = vmatpush1.msra.mxu0 %v436
    %473 = vmatprep.subr.mxu0 0.0
    %474 = vmatpush1.msra.mxu0 %v435
    %475 = vmatprep.subr.mxu0 0.0
    %476 = vmatpush1.msra.mxu0 %v434
    %477 = vmatprep.subr.mxu0 0.0
    %478 = vmatpush1.msra.mxu0 %v433
    %479 = vmatprep.subr.mxu0 0.0
    %480 = vmatpush1.msra.mxu0 %v432
    %481 = vmatprep.subr.mxu0 0.0
    %482 = vmatpush1.msra.mxu0 %v431
    %483 = vmatprep.subr.mxu0 0.0
    %484 = vmatpush1.msra.mxu0 %v430
    %485 = vmatprep.subr.mxu0 0.0
    %486 = vmatpush2.msra.mxu0 0.0
    %487 = vmatprep.subr.mxu0 0.0
    %488 = vmatpush2.msra.mxu0 0.0
    %489 = vmatprep.subr.mxu0 0.0
    %490 = vmatpush2.msra.mxu0 0.0
    %491 = vmatprep.subr.mxu0 0.0
    %492 = vmatpush2.msra.mxu0 0.0
    %493 = vmatprep.subr.mxu0 0.0
    %494 = vmatpush2.msra.mxu0 0.0
    %495 = vmatprep.subr.mxu0 0.0
    %496 = vmatpush2.msra.mxu0 0.0
    %497 = vmatprep.subr.mxu0 0.0
    %498 = vmatpush2.msra.mxu0 0.0
    %499 = vmatprep.subr.mxu0 0.0
    %500 = vmatpush2.msra.mxu0 0.0
    %501 = vmatprep.subr.mxu0 0.0
    %502 = vmatpush2.msra.mxu0 0.0
    %503 = vmatprep.subr.mxu0 0.0
    %504 = vmatpush2.msra.mxu0 0.0
    %505 = vmatprep.subr.mxu0 0.0
    %506 = vmatpush2.msra.mxu0 0.0
    %507 = vmatprep.subr.mxu0 0.0
    %508 = vmatpush2.msra.mxu0 0.0
    %509 = vmatprep.subr.mxu0 0.0
    %510 = vmatpush2.msra.mxu0 0.0
    %511 = vmatprep.subr.mxu0 0.0
    %512 = vmatpush2.msra.mxu0 0.0
    %513 = vmatprep.subr.mxu0 0.0
    %514 = vmatpush2.msra.mxu0 0.0
    %515 = vmatprep.subr.mxu0 0.0
    %516 = vmatpush2.msra.mxu0 0.0
    %517 = vmatprep.mubr.f32.mxu0 0.0
    %518 = vmatmul.mubr.f32.gmra.mxu0 %v451
    %v519 = vpop.f32.mrf.mxu0
    %v520 = vadd.f32 %v447, %v519
    %v521 = vpop.f32.mrf.mxu0
    %522 = vdwg.mxu0
    %v523 = vmax.f32 %v520, 0.0
    %v524 = vld [vmem:[%s17] sm:$0xff]
    %v525 = vld [vmem:[%s17 + $0x8] sm:$0xff]
    %v526 = vld [vmem:[%s17 + $0x10] sm:$0xff]
    %v527 = vld [vmem:[%s17 + $0x18] sm:$0xff]
    %v528 = vld [vmem:[%s17 + $0x20] sm:$0xff]
    %v529 = vld [vmem:[%s17 + $0x28] sm:$0xff]
    %v530 = vld [vmem:[%s17 + $0x30] sm:$0xff]
    %v531 = vld [vmem:[%s17 + $0x38] sm:$0xff]
    %v532 = vld [vmem:[%s17 + $0x40] sm:$0xff]
    %v533 = vld [vmem:[%s17 + $0x48] sm:$0xff]
    %v534 = vld [vmem:[%s17 + $0x50] sm:$0xff]
    %v535 = vld [vmem:[%s17 + $0x58] sm:$0xff]
    %v536 = vld [vmem:[#allocation2] sm:$0x1]
    %v538 = vlaneseq
    %v539 = vshrl.u32 %v538, 7
    %v540 = vsub.s32 0, %v539
    %v541 = vrot.slane %v536, %v540
    %543 = vmatprep.subr.mxu0 0.0
    %544 = vmatpush1.msra.mxu0 0.0
    %545 = vmatprep.subr.mxu0 0.0
    %546 = vmatpush1.msra.mxu0 0.0
    %547 = vmatprep.subr.mxu0 0.0
    %548 = vmatpush1.msra.mxu0 0.0
    %549 = vmatprep.subr.mxu0 0.0
    %550 = vmatpush1.msra.mxu0 0.0
    %551 = vmatprep.subr.mxu0 0.0
    %552 = vmatpush1.msra.mxu0 %v535
    %553 = vmatprep.subr.mxu0 0.0
    %554 = vmatpush1.msra.mxu0 %v534
    %555 = vmatprep.subr.mxu0 0.0
    %556 = vmatpush1.msra.mxu0 %v533
    %557 = vmatprep.subr.mxu0 0.0
    %558 = vmatpush1.msra.mxu0 %v532
    %559 = vmatprep.subr.mxu0 0.0
    %560 = vmatpush1.msra.mxu0 %v531
    %561 = vmatprep.subr.mxu0 0.0
    %562 = vmatpush1.msra.mxu0 %v530
    %563 = vmatprep.subr.mxu0 0.0
    %564 = vmatpush1.msra.mxu0 %v529
    %565 = vmatprep.subr.mxu0 0.0
    %566 = vmatpush1.msra.mxu0 %v528
    %567 = vmatprep.subr.mxu0 0.0
    %568 = vmatpush1.msra.mxu0 %v527
    %569 = vmatprep.subr.mxu0 0.0
    %570 = vmatpush1.msra.mxu0 %v526
    %571 = vmatprep.subr.mxu0 0.0
    %572 = vmatpush1.msra.mxu0 %v525
    %573 = vmatprep.subr.mxu0 0.0
    %574 = vmatpush1.msra.mxu0 %v524
    %575 = vmatprep.subr.mxu0 0.0
    %576 = vmatpush2.msra.mxu0 0.0
    %577 = vmatprep.subr.mxu0 0.0
    %578 = vmatpush2.msra.mxu0 0.0
    %579 = vmatprep.subr.mxu0 0.0
    %580 = vmatpush2.msra.mxu0 0.0
    %581 = vmatprep.subr.mxu0 0.0
    %582 = vmatpush2.msra.mxu0 0.0
    %583 = vmatprep.subr.mxu0 0.0
    %584 = vmatpush2.msra.mxu0 0.0
    %585 = vmatprep.subr.mxu0 0.0
    %586 = vmatpush2.msra.mxu0 0.0
    %587 = vmatprep.subr.mxu0 0.0
    %588 = vmatpush2.msra.mxu0 0.0
    %589 = vmatprep.subr.mxu0 0.0
    %590 = vmatpush2.msra.mxu0 0.0
    %591 = vmatprep.subr.mxu0 0.0
    %592 = vmatpush2.msra.mxu0 0.0
    %593 = vmatprep.subr.mxu0 0.0
    %594 = vmatpush2.msra.mxu0 0.0
    %595 = vmatprep.subr.mxu0 0.0
    %596 = vmatpush2.msra.mxu0 0.0
    %597 = vmatprep.subr.mxu0 0.0
    %598 = vmatpush2.msra.mxu0 0.0
    %599 = vmatprep.subr.mxu0 0.0
    %600 = vmatpush2.msra.mxu0 0.0
    %601 = vmatprep.subr.mxu0 0.0
    %602 = vmatpush2.msra.mxu0 0.0
    %603 = vmatprep.subr.mxu0 0.0
    %604 = vmatpush2.msra.mxu0 0.0
    %605 = vmatprep.subr.mxu0 0.0
    %606 = vmatpush2.msra.mxu0 0.0
    %607 = vmatprep.mubr.f32.mxu0 0.0
    %608 = vmatmul.mubr.f32.gmra.mxu0 %v451
    %v609 = vpop.f32.mrf.mxu0
    %v610 = vadd.f32 %v541, %v609
    %v611 = vpop.f32.mrf.mxu0
    %612 = vdwg.mxu0
    %v613 = vld [vmem:[%s3] sm:$0x7f]
    %v614 = vlaneseq
    %v615 = vshrl.u32 %v614, 7
    %v616 = vlaneseq
    %v617 = vand.u32 %v616, 127
    %vm618 = vcmp.eq.s32.totalorder %v617, %v615
    %v619 = vadd.s32 %v615, 5
    %vm620 = vcmp.eq.s32.totalorder %v617, %v619
    %vm621 = vmor %vm618, %vm620
    %v622 = vsel %vm621, 1.0, 0.0
    %vm623 = vcmask 39936
    %v625 = vsel %vm623, %v613, 0
    %vm627 = vcmask 1044480
    %v629 = vsel %vm627, %v622, 0
    %631 = vmatprep.subr.mxu0 0.0
    %632 = vmatpush1.msra.mxu0 0.0
    %633 = vmatprep.subr.mxu0 0.0
    %634 = vmatpush1.msra.mxu0 0.0
    %635 = vmatprep.subr.mxu0 0.0
    %636 = vmatpush1.msra.mxu0 0.0
    %637 = vmatprep.subr.mxu0 0.0
    %638 = vmatpush1.msra.mxu0 0.0
    %639 = vmatprep.subr.mxu0 0.0
    %640 = vmatpush1.msra.mxu0 0.0
    %641 = vmatprep.subr.mxu0 0.0
    %642 = vmatpush1.msra.mxu0 0.0
    %643 = vmatprep.subr.mxu0 0.0
    %644 = vmatpush1.msra.mxu0 0.0
    %645 = vmatprep.subr.mxu0 0.0
    %646 = vmatpush1.msra.mxu0 0.0
    %647 = vmatprep.subr.mxu0 0.0
    %648 = vmatpush1.msra.mxu0 0.0
    %649 = vmatprep.subr.mxu0 0.0
    %650 = vmatpush1.msra.mxu0 0.0
    %651 = vmatprep.subr.mxu0 0.0
    %652 = vmatpush1.msra.mxu0 0.0
    %653 = vmatprep.subr.mxu0 0.0
    %654 = vmatpush1.msra.mxu0 0.0
    %655 = vmatprep.subr.mxu0 0.0
    %656 = vmatpush1.msra.mxu0 0.0
    %657 = vmatprep.subr.mxu0 0.0
    %658 = vmatpush1.msra.mxu0 0.0
    %659 = vmatprep.subr.mxu0 0.0
    %660 = vmatpush1.msra.mxu0 0.0
    %661 = vmatprep.subr.mxu0 0.0
    %662 = vmatpush1.msra.mxu0 %v629
    %663 = vmatprep.subr.mxu0 0.0
    %664 = vmatpush2.msra.mxu0 0.0
    %665 = vmatprep.subr.mxu0 0.0
    %666 = vmatpush2.msra.mxu0 0.0
    %667 = vmatprep.subr.mxu0 0.0
    %668 = vmatpush2.msra.mxu0 0.0
    %669 = vmatprep.subr.mxu0 0.0
    %670 = vmatpush2.msra.mxu0 0.0
    %671 = vmatprep.subr.mxu0 0.0
    %672 = vmatpush2.msra.mxu0 0.0
    %673 = vmatprep.subr.mxu0 0.0
    %674 = vmatpush2.msra.mxu0 0.0
    %675 = vmatprep.subr.mxu0 0.0
    %676 = vmatpush2.msra.mxu0 0.0
    %677 = vmatprep.subr.mxu0 0.0
    %678 = vmatpush2.msra.mxu0 0.0
    %679 = vmatprep.subr.mxu0 0.0
    %680 = vmatpush2.msra.mxu0 0.0
    %681 = vmatprep.subr.mxu0 0.0
    %682 = vmatpush2.msra.mxu0 0.0
    %683 = vmatprep.subr.mxu0 0.0
    %684 = vmatpush2.msra.mxu0 0.0
    %685 = vmatprep.subr.mxu0 0.0
    %686 = vmatpush2.msra.mxu0 0.0
    %687 = vmatprep.subr.mxu0 0.0
    %688 = vmatpush2.msra.mxu0 0.0
    %689 = vmatprep.subr.mxu0 0.0
    %690 = vmatpush2.msra.mxu0 0.0
    %691 = vmatprep.subr.mxu0 0.0
    %692 = vmatpush2.msra.mxu0 0.0
    %693 = vmatprep.subr.mxu0 0.0
    %694 = vmatpush2.msra.mxu0 0.0
    %695 = vmatprep.mubr.f32.mxu0 0.0
    %696 = vmatmul.mubr.f32.gmra.mxu0 %v625
    %v697 = vpop.f32.mrf.mxu0
    %v698 = vadd.f32 0.0, %v697
    %v699 = vpop.f32.mrf.mxu0
    %700 = vdwg.mxu0
    %v701 = vmul.f32 %v429, %v698
    %v702 = vsub.f32 1.0, %v698
    %v703 = vmul.f32 %v702, -10.0
    %v704 = vadd.f32 %v701, %v703
    %v705 = vld [vmem:[%s4] sm:$0xff]
    %v706 = vsel %vm618, 1.0, 0.0
    %vm707 = vcmask 48128
    %v709 = vsel %vm707, %v705, 0
    %vm711 = vcmask 1045504
    %v713 = vsel %vm711, %v706, 0
    %715 = vmatprep.subr.mxu0 0.0
    %716 = vmatpush1.msra.mxu0 0.0
    %717 = vmatprep.subr.mxu0 0.0
    %718 = vmatpush1.msra.mxu0 0.0
    %719 = vmatprep.subr.mxu0 0.0
    %720 = vmatpush1.msra.mxu0 0.0
    %721 = vmatprep.subr.mxu0 0.0
    %722 = vmatpush1.msra.mxu0 0.0
    %723 = vmatprep.subr.mxu0 0.0
    %724 = vmatpush1.msra.mxu0 0.0
    %725 = vmatprep.subr.mxu0 0.0
    %726 = vmatpush1.msra.mxu0 0.0
    %727 = vmatprep.subr.mxu0 0.0
    %728 = vmatpush1.msra.mxu0 0.0
    %729 = vmatprep.subr.mxu0 0.0
    %730 = vmatpush1.msra.mxu0 0.0
    %731 = vmatprep.subr.mxu0 0.0
    %732 = vmatpush1.msra.mxu0 0.0
    %733 = vmatprep.subr.mxu0 0.0
    %734 = vmatpush1.msra.mxu0 0.0
    %735 = vmatprep.subr.mxu0 0.0
    %736 = vmatpush1.msra.mxu0 0.0
    %737 = vmatprep.subr.mxu0 0.0
    %738 = vmatpush1.msra.mxu0 0.0
    %739 = vmatprep.subr.mxu0 0.0
    %740 = vmatpush1.msra.mxu0 0.0
    %741 = vmatprep.subr.mxu0 0.0
    %742 = vmatpush1.msra.mxu0 0.0
    %743 = vmatprep.subr.mxu0 0.0
    %744 = vmatpush1.msra.mxu0 0.0
    %745 = vmatprep.subr.mxu0 0.0
    %746 = vmatpush1.msra.mxu0 %v713
    %747 = vmatprep.subr.mxu0 0.0
    %748 = vmatpush2.msra.mxu0 0.0
    %749 = vmatprep.subr.mxu0 0.0
    %750 = vmatpush2.msra.mxu0 0.0
    %751 = vmatprep.subr.mxu0 0.0
    %752 = vmatpush2.msra.mxu0 0.0
    %753 = vmatprep.subr.mxu0 0.0
    %754 = vmatpush2.msra.mxu0 0.0
    %755 = vmatprep.subr.mxu0 0.0
    %756 = vmatpush2.msra.mxu0 0.0
    %757 = vmatprep.subr.mxu0 0.0
    %758 = vmatpush2.msra.mxu0 0.0
    %759 = vmatprep.subr.mxu0 0.0
    %760 = vmatpush2.msra.mxu0 0.0
    %761 = vmatprep.subr.mxu0 0.0
    %762 = vmatpush2.msra.mxu0 0.0
    %763 = vmatprep.subr.mxu0 0.0
    %764 = vmatpush2.msra.mxu0 0.0
    %765 = vmatprep.subr.mxu0 0.0
    %766 = vmatpush2.msra.mxu0 0.0
    %767 = vmatprep.subr.mxu0 0.0
    %768 = vmatpush2.msra.mxu0 0.0
    %769 = vmatprep.subr.mxu0 0.0
    %770 = vmatpush2.msra.mxu0 0.0
    %771 = vmatprep.subr.mxu0 0.0
    %772 = vmatpush2.msra.mxu0 0.0
    %773 = vmatprep.subr.mxu0 0.0
    %774 = vmatpush2.msra.mxu0 0.0
    %775 = vmatprep.subr.mxu0 0.0
    %776 = vmatpush2.msra.mxu0 0.0
    %777 = vmatprep.subr.mxu0 0.0
    %778 = vmatpush2.msra.mxu0 0.0
    %779 = vmatprep.mubr.f32.mxu0 0.0
    %780 = vmatmul.mubr.f32.gmra.mxu0 %v709
    %v781 = vpop.f32.mrf.mxu0
    %v782 = vadd.f32 0.0, %v781
    %v783 = vpop.f32.mrf.mxu0
    %784 = vdwg.mxu0
    %v785 = vadd.s32 %v617, 6
    %vm786 = vcmp.eq.s32.totalorder %v785, %v615
    %v787 = vadd.s32 %v615, 6
    %vm788 = vcmp.eq.s32.totalorder %v785, %v787
    %vm789 = vmor %vm786, %vm788
    %v790 = vsel %vm789, 1.0, 0.0
    %v792 = vsel %vm711, %v790, 0
    %794 = vmatprep.subr.mxu0 0.0
    %795 = vmatpush1.msra.mxu0 0.0
    %796 = vmatprep.subr.mxu0 0.0
    %797 = vmatpush1.msra.mxu0 0.0
    %798 = vmatprep.subr.mxu0 0.0
    %799 = vmatpush1.msra.mxu0 0.0
    %800 = vmatprep.subr.mxu0 0.0
    %801 = vmatpush1.msra.mxu0 0.0
    %802 = vmatprep.subr.mxu0 0.0
    %803 = vmatpush1.msra.mxu0 0.0
    %804 = vmatprep.subr.mxu0 0.0
    %805 = vmatpush1.msra.mxu0 0.0
    %806 = vmatprep.subr.mxu0 0.0
    %807 = vmatpush1.msra.mxu0 0.0
    %808 = vmatprep.subr.mxu0 0.0
    %809 = vmatpush1.msra.mxu0 0.0
    %810 = vmatprep.subr.mxu0 0.0
    %811 = vmatpush1.msra.mxu0 0.0
    %812 = vmatprep.subr.mxu0 0.0
    %813 = vmatpush1.msra.mxu0 0.0
    %814 = vmatprep.subr.mxu0 0.0
    %815 = vmatpush1.msra.mxu0 0.0
    %816 = vmatprep.subr.mxu0 0.0
    %817 = vmatpush1.msra.mxu0 0.0
    %818 = vmatprep.subr.mxu0 0.0
    %819 = vmatpush1.msra.mxu0 0.0
    %820 = vmatprep.subr.mxu0 0.0
    %821 = vmatpush1.msra.mxu0 0.0
    %822 = vmatprep.subr.mxu0 0.0
    %823 = vmatpush1.msra.mxu0 0.0
    %824 = vmatprep.subr.mxu0 0.0
    %825 = vmatpush1.msra.mxu0 %v792
    %826 = vmatprep.subr.mxu0 0.0
    %827 = vmatpush2.msra.mxu0 0.0
    %828 = vmatprep.subr.mxu0 0.0
    %829 = vmatpush2.msra.mxu0 0.0
    %830 = vmatprep.subr.mxu0 0.0
    %831 = vmatpush2.msra.mxu0 0.0
    %832 = vmatprep.subr.mxu0 0.0
    %833 = vmatpush2.msra.mxu0 0.0
    %834 = vmatprep.subr.mxu0 0.0
    %835 = vmatpush2.msra.mxu0 0.0
    %836 = vmatprep.subr.mxu0 0.0
    %837 = vmatpush2.msra.mxu0 0.0
    %838 = vmatprep.subr.mxu0 0.0
    %839 = vmatpush2.msra.mxu0 0.0
    %840 = vmatprep.subr.mxu0 0.0
    %841 = vmatpush2.msra.mxu0 0.0
    %842 = vmatprep.subr.mxu0 0.0
    %843 = vmatpush2.msra.mxu0 0.0
    %844 = vmatprep.subr.mxu0 0.0
    %845 = vmatpush2.msra.mxu0 0.0
    %846 = vmatprep.subr.mxu0 0.0
    %847 = vmatpush2.msra.mxu0 0.0
    %848 = vmatprep.subr.mxu0 0.0
    %849 = vmatpush2.msra.mxu0 0.0
    %850 = vmatprep.subr.mxu0 0.0
    %851 = vmatpush2.msra.mxu0 0.0
    %852 = vmatprep.subr.mxu0 0.0
    %853 = vmatpush2.msra.mxu0 0.0
    %854 = vmatprep.subr.mxu0 0.0
    %855 = vmatpush2.msra.mxu0 0.0
    %856 = vmatprep.subr.mxu0 0.0
    %857 = vmatpush2.msra.mxu0 0.0
    %858 = vmatprep.mubr.f32.mxu0 0.0
    %859 = vmatmul.mubr.f32.gmra.mxu0 %v709
    %v860 = vpop.f32.mrf.mxu0
    %v861 = vadd.f32 0.0, %v860
    %v862 = vpop.f32.mrf.mxu0
    %863 = vdwg.mxu0
    %v864 = vmul.f32 %v338, %v782
    %v865 = vsub.f32 1.0, %v782
    %v866 = vmul.f32 %v865, -10.0
    %v867 = vadd.f32 %v864, %v866
    %v868 = vmul.f32 %v340, %v861
    %v869 = vsub.f32 1.0, %v861
    %v870 = vmul.f32 %v869, -10.0
    %v871 = vadd.f32 %v868, %v870
    %v872 = vld [vmem:[%s6] sm:$0x7f]
    %v873 = vadd.s32 %v615, 2
    %vm874 = vcmp.eq.s32.totalorder %v617, %v873
    %vm875 = vmor %vm618, %vm874
    %v876 = vadd.s32 %v615, 4
    %vm877 = vcmp.eq.s32.totalorder %v617, %v876
    %vm878 = vmor %vm875, %vm877
    %vm879 = vcmp.eq.s32.totalorder %v617, %v787
    %vm880 = vmor %vm878, %vm879
    %v881 = vadd.s32 %v615, 8
    %vm882 = vcmp.eq.s32.totalorder %v617, %v881
    %vm883 = vmor %vm880, %vm882
    %v884 = vsel %vm883, 1.0, 0.0
    %vm885 = vcmask 15360
    %v887 = vsel %vm885, %v872, 0
    %vm889 = vcmask 1041408
    %v891 = vsel %vm889, %v884, 0
    %893 = vmatprep.subr.mxu0 0.0
    %894 = vmatpush1.msra.mxu0 0.0
    %895 = vmatprep.subr.mxu0 0.0
    %896 = vmatpush1.msra.mxu0 0.0
    %897 = vmatprep.subr.mxu0 0.0
    %898 = vmatpush1.msra.mxu0 0.0
    %899 = vmatprep.subr.mxu0 0.0
    %900 = vmatpush1.msra.mxu0 0.0
    %901 = vmatprep.subr.mxu0 0.0
    %902 = vmatpush1.msra.mxu0 0.0
    %903 = vmatprep.subr.mxu0 0.0
    %904 = vmatpush1.msra.mxu0 0.0
    %905 = vmatprep.subr.mxu0 0.0
    %906 = vmatpush1.msra.mxu0 0.0
    %907 = vmatprep.subr.mxu0 0.0
    %908 = vmatpush1.msra.mxu0 0.0
    %909 = vmatprep.subr.mxu0 0.0
    %910 = vmatpush1.msra.mxu0 0.0
    %911 = vmatprep.subr.mxu0 0.0
    %912 = vmatpush1.msra.mxu0 0.0
    %913 = vmatprep.subr.mxu0 0.0
    %914 = vmatpush1.msra.mxu0 0.0
    %915 = vmatprep.subr.mxu0 0.0
    %916 = vmatpush1.msra.mxu0 0.0
    %917 = vmatprep.subr.mxu0 0.0
    %918 = vmatpush1.msra.mxu0 0.0
    %919 = vmatprep.subr.mxu0 0.0
    %920 = vmatpush1.msra.mxu0 0.0
    %921 = vmatprep.subr.mxu0 0.0
    %922 = vmatpush1.msra.mxu0 0.0
    %923 = vmatprep.subr.mxu0 0.0
    %924 = vmatpush1.msra.mxu0 %v891
    %925 = vmatprep.subr.mxu0 0.0
    %926 = vmatpush2.msra.mxu0 0.0
    %927 = vmatprep.subr.mxu0 0.0
    %928 = vmatpush2.msra.mxu0 0.0
    %929 = vmatprep.subr.mxu0 0.0
    %930 = vmatpush2.msra.mxu0 0.0
    %931 = vmatprep.subr.mxu0 0.0
    %932 = vmatpush2.msra.mxu0 0.0
    %933 = vmatprep.subr.mxu0 0.0
    %934 = vmatpush2.msra.mxu0 0.0
    %935 = vmatprep.subr.mxu0 0.0
    %936 = vmatpush2.msra.mxu0 0.0
    %937 = vmatprep.subr.mxu0 0.0
    %938 = vmatpush2.msra.mxu0 0.0
    %939 = vmatprep.subr.mxu0 0.0
    %940 = vmatpush2.msra.mxu0 0.0
    %941 = vmatprep.subr.mxu0 0.0
    %942 = vmatpush2.msra.mxu0 0.0
    %943 = vmatprep.subr.mxu0 0.0
    %944 = vmatpush2.msra.mxu0 0.0
    %945 = vmatprep.subr.mxu0 0.0
    %946 = vmatpush2.msra.mxu0 0.0
    %947 = vmatprep.subr.mxu0 0.0
    %948 = vmatpush2.msra.mxu0 0.0
    %949 = vmatprep.subr.mxu0 0.0
    %950 = vmatpush2.msra.mxu0 0.0
    %951 = vmatprep.subr.mxu0 0.0
    %952 = vmatpush2.msra.mxu0 0.0
    %953 = vmatprep.subr.mxu0 0.0
    %954 = vmatpush2.msra.mxu0 0.0
    %955 = vmatprep.subr.mxu0 0.0
    %956 = vmatpush2.msra.mxu0 0.0
    %957 = vmatprep.mubr.f32.mxu0 0.0
    %958 = vmatmul.mubr.f32.gmra.mxu0 %v887
    %v959 = vpop.f32.mrf.mxu0
    %v960 = vadd.f32 0.0, %v959
    %v961 = vpop.f32.mrf.mxu0
    %962 = vdwg.mxu0
    %v963 = vmul.f32 %v704, %v960
    %v964 = vmul.u32 %v617, 2
    %vm965 = vcmp.ge.s32.totalorder %v615, %v964
    %vm966 = vcmp.ge.s32.totalorder %v881, %v964
    %v967 = vadd.s32 %v964, 2
    %vm968 = vcmp.lt.s32.totalorder %v615, %v967
    %vm969 = vcmp.lt.s32.totalorder %v881, %v967
    %vm970 = vmand %vm965, %vm968
    %vm971 = vmand %vm966, %vm969
    %v972 = vsel %vm970, 1.0, 0.0
    %v973 = vsel %vm971, 1.0, 0.0
    %vm974 = vcmask 80896
    %v976 = vsel %vm974, %v963, 0
    %v979 = vsel %vm889, %v973, 0
    %981 = vmatprep.subr.mxu0 0.0
    %982 = vmatpush1.msra.mxu0 0.0
    %983 = vmatprep.subr.mxu0 0.0
    %984 = vmatpush1.msra.mxu0 0.0
    %985 = vmatprep.subr.mxu0 0.0
    %986 = vmatpush1.msra.mxu0 0.0
    %987 = vmatprep.subr.mxu0 0.0
    %988 = vmatpush1.msra.mxu0 0.0
    %989 = vmatprep.subr.mxu0 0.0
    %990 = vmatpush1.msra.mxu0 0.0
    %991 = vmatprep.subr.mxu0 0.0
    %992 = vmatpush1.msra.mxu0 0.0
    %993 = vmatprep.subr.mxu0 0.0
    %994 = vmatpush1.msra.mxu0 0.0
    %995 = vmatprep.subr.mxu0 0.0
    %996 = vmatpush1.msra.mxu0 0.0
    %997 = vmatprep.subr.mxu0 0.0
    %998 = vmatpush1.msra.mxu0 0.0
    %999 = vmatprep.subr.mxu0 0.0
    %1000 = vmatpush1.msra.mxu0 0.0
    %1001 = vmatprep.subr.mxu0 0.0
    %1002 = vmatpush1.msra.mxu0 0.0
    %1003 = vmatprep.subr.mxu0 0.0
    %1004 = vmatpush1.msra.mxu0 0.0
    %1005 = vmatprep.subr.mxu0 0.0
    %1006 = vmatpush1.msra.mxu0 0.0
    %1007 = vmatprep.subr.mxu0 0.0
    %1008 = vmatpush1.msra.mxu0 0.0
    %1009 = vmatprep.subr.mxu0 0.0
    %1010 = vmatpush1.msra.mxu0 %v979
    %1011 = vmatprep.subr.mxu0 0.0
    %1012 = vmatpush1.msra.mxu0 %v972
    %1013 = vmatprep.subr.mxu0 0.0
    %1014 = vmatpush2.msra.mxu0 0.0
    %1015 = vmatprep.subr.mxu0 0.0
    %1016 = vmatpush2.msra.mxu0 0.0
    %1017 = vmatprep.subr.mxu0 0.0
    %1018 = vmatpush2.msra.mxu0 0.0
    %1019 = vmatprep.subr.mxu0 0.0
    %1020 = vmatpush2.msra.mxu0 0.0
    %1021 = vmatprep.subr.mxu0 0.0
    %1022 = vmatpush2.msra.mxu0 0.0
    %1023 = vmatprep.subr.mxu0 0.0
    %1024 = vmatpush2.msra.mxu0 0.0
    %1025 = vmatprep.subr.mxu0 0.0
    %1026 = vmatpush2.msra.mxu0 0.0
    %1027 = vmatprep.subr.mxu0 0.0
    %1028 = vmatpush2.msra.mxu0 0.0
    %1029 = vmatprep.subr.mxu0 0.0
    %1030 = vmatpush2.msra.mxu0 0.0
    %1031 = vmatprep.subr.mxu0 0.0
    %1032 = vmatpush2.msra.mxu0 0.0
    %1033 = vmatprep.subr.mxu0 0.0
    %1034 = vmatpush2.msra.mxu0 0.0
    %1035 = vmatprep.subr.mxu0 0.0
    %1036 = vmatpush2.msra.mxu0 0.0
    %1037 = vmatprep.subr.mxu0 0.0
    %1038 = vmatpush2.msra.mxu0 0.0
    %1039 = vmatprep.subr.mxu0 0.0
    %1040 = vmatpush2.msra.mxu0 0.0
    %1041 = vmatprep.subr.mxu0 0.0
    %1042 = vmatpush2.msra.mxu0 0.0
    %1043 = vmatprep.subr.mxu0 0.0
    %1044 = vmatpush2.msra.mxu0 0.0
    %1045 = vmatprep.mubr.f32.mxu0 0.0
    %1046 = vmatmul.mubr.f32.gmra.mxu0 %v976
    %v1047 = vpop.f32.mrf.mxu0
    %v1048 = vadd.f32 0.0, %v1047
    %v1049 = vpop.f32.mrf.mxu0
    %1050 = vdwg.mxu0
    %v1051 = vmul.f32 %v1048, 100.0
    %vm1052 = vcmask 38912
    %1053 = vst.msk [vmem:[#allocation3] sm:$0x7f] %vm1052, %v1051
    %v1054 = vld [vmem:[%s7] sm:$0xff]
    %v1055 = vsel %vm878, 1.0, 0.0
    %v1057 = vsel %vm885, %v1054, 0
    %v1060 = vsel %vm889, %v1055, 0
    %1062 = vmatprep.subr.mxu0 0.0
    %1063 = vmatpush1.msra.mxu0 0.0
    %1064 = vmatprep.subr.mxu0 0.0
    %1065 = vmatpush1.msra.mxu0 0.0
    %1066 = vmatprep.subr.mxu0 0.0
    %1067 = vmatpush1.msra.mxu0 0.0
    %1068 = vmatprep.subr.mxu0 0.0
    %1069 = vmatpush1.msra.mxu0 0.0
    %1070 = vmatprep.subr.mxu0 0.0
    %1071 = vmatpush1.msra.mxu0 0.0
    %1072 = vmatprep.subr.mxu0 0.0
    %1073 = vmatpush1.msra.mxu0 0.0
    %1074 = vmatprep.subr.mxu0 0.0
    %1075 = vmatpush1.msra.mxu0 0.0
    %1076 = vmatprep.subr.mxu0 0.0
    %1077 = vmatpush1.msra.mxu0 0.0
    %1078 = vmatprep.subr.mxu0 0.0
    %1079 = vmatpush1.msra.mxu0 0.0
    %1080 = vmatprep.subr.mxu0 0.0
    %1081 = vmatpush1.msra.mxu0 0.0
    %1082 = vmatprep.subr.mxu0 0.0
    %1083 = vmatpush1.msra.mxu0 0.0
    %1084 = vmatprep.subr.mxu0 0.0
    %1085 = vmatpush1.msra.mxu0 0.0
    %1086 = vmatprep.subr.mxu0 0.0
    %1087 = vmatpush1.msra.mxu0 0.0
    %1088 = vmatprep.subr.mxu0 0.0
    %1089 = vmatpush1.msra.mxu0 0.0
    %1090 = vmatprep.subr.mxu0 0.0
    %1091 = vmatpush1.msra.mxu0 0.0
    %1092 = vmatprep.subr.mxu0 0.0
    %1093 = vmatpush1.msra.mxu0 %v1060
    %1094 = vmatprep.subr.mxu0 0.0
    %1095 = vmatpush2.msra.mxu0 0.0
    %1096 = vmatprep.subr.mxu0 0.0
    %1097 = vmatpush2.msra.mxu0 0.0
    %1098 = vmatprep.subr.mxu0 0.0
    %1099 = vmatpush2.msra.mxu0 0.0
    %1100 = vmatprep.subr.mxu0 0.0
    %1101 = vmatpush2.msra.mxu0 0.0
    %1102 = vmatprep.subr.mxu0 0.0
    %1103 = vmatpush2.msra.mxu0 0.0
    %1104 = vmatprep.subr.mxu0 0.0
    %1105 = vmatpush2.msra.mxu0 0.0
    %1106 = vmatprep.subr.mxu0 0.0
    %1107 = vmatpush2.msra.mxu0 0.0
    %1108 = vmatprep.subr.mxu0 0.0
    %1109 = vmatpush2.msra.mxu0 0.0
    %1110 = vmatprep.subr.mxu0 0.0
    %1111 = vmatpush2.msra.mxu0 0.0
    %1112 = vmatprep.subr.mxu0 0.0
    %1113 = vmatpush2.msra.mxu0 0.0
    %1114 = vmatprep.subr.mxu0 0.0
    %1115 = vmatpush2.msra.mxu0 0.0
    %1116 = vmatprep.subr.mxu0 0.0
    %1117 = vmatpush2.msra.mxu0 0.0
    %1118 = vmatprep.subr.mxu0 0.0
    %1119 = vmatpush2.msra.mxu0 0.0
    %1120 = vmatprep.subr.mxu0 0.0
    %1121 = vmatpush2.msra.mxu0 0.0
    %1122 = vmatprep.subr.mxu0 0.0
    %1123 = vmatpush2.msra.mxu0 0.0
    %1124 = vmatprep.subr.mxu0 0.0
    %1125 = vmatpush2.msra.mxu0 0.0
    %1126 = vmatprep.mubr.f32.mxu0 0.0
    %1127 = vmatmul.mubr.f32.gmra.mxu0 %v1057
    %v1128 = vpop.f32.mrf.mxu0
    %v1129 = vadd.f32 0.0, %v1128
    %v1130 = vpop.f32.mrf.mxu0
    %1131 = vdwg.mxu0
    %v1132 = vmul.f32 %v867, %v1129
    %v1133 = vmul.f32 %v871, %v1129
    %v1134 = vsub.s32 %v617, 3
    %v1135 = vmul.u32 %v1134, 2
    %vm1136 = vcmp.ge.s32.totalorder %v615, %v1135
    %v1137 = vadd.s32 %v1135, 2
    %vm1138 = vcmp.lt.s32.totalorder %v615, %v1137
    %vm1139 = vmand %vm1136, %vm1138
    %v1140 = vsel %vm1139, 1.0, 0.0
    %v1142 = vsel %vm707, %v1133, 0
    %v1145 = vsel %vm711, %v1140, 0
    %1147 = vmatprep.subr.mxu0 0.0
    %1148 = vmatpush1.msra.mxu0 0.0
    %1149 = vmatprep.subr.mxu0 0.0
    %1150 = vmatpush1.msra.mxu0 0.0
    %1151 = vmatprep.subr.mxu0 0.0
    %1152 = vmatpush1.msra.mxu0 0.0
    %1153 = vmatprep.subr.mxu0 0.0
    %1154 = vmatpush1.msra.mxu0 0.0
    %1155 = vmatprep.subr.mxu0 0.0
    %1156 = vmatpush1.msra.mxu0 0.0
    %1157 = vmatprep.subr.mxu0 0.0
    %1158 = vmatpush1.msra.mxu0 0.0
    %1159 = vmatprep.subr.mxu0 0.0
    %1160 = vmatpush1.msra.mxu0 0.0
    %1161 = vmatprep.subr.mxu0 0.0
    %1162 = vmatpush1.msra.mxu0 0.0
    %1163 = vmatprep.subr.mxu0 0.0
    %1164 = vmatpush1.msra.mxu0 0.0
    %1165 = vmatprep.subr.mxu0 0.0
    %1166 = vmatpush1.msra.mxu0 0.0
    %1167 = vmatprep.subr.mxu0 0.0
    %1168 = vmatpush1.msra.mxu0 0.0
    %1169 = vmatprep.subr.mxu0 0.0
    %1170 = vmatpush1.msra.mxu0 0.0
    %1171 = vmatprep.subr.mxu0 0.0
    %1172 = vmatpush1.msra.mxu0 0.0
    %1173 = vmatprep.subr.mxu0 0.0
    %1174 = vmatpush1.msra.mxu0 0.0
    %1175 = vmatprep.subr.mxu0 0.0
    %1176 = vmatpush1.msra.mxu0 0.0
    %1177 = vmatprep.subr.mxu0 0.0
    %1178 = vmatpush1.msra.mxu0 %v1145
    %1179 = vmatprep.subr.mxu0 0.0
    %1180 = vmatpush2.msra.mxu0 0.0
    %1181 = vmatprep.subr.mxu0 0.0
    %1182 = vmatpush2.msra.mxu0 0.0
    %1183 = vmatprep.subr.mxu0 0.0
    %1184 = vmatpush2.msra.mxu0 0.0
    %1185 = vmatprep.subr.mxu0 0.0
    %1186 = vmatpush2.msra.mxu0 0.0
    %1187 = vmatprep.subr.mxu0 0.0
    %1188 = vmatpush2.msra.mxu0 0.0
    %1189 = vmatprep.subr.mxu0 0.0
    %1190 = vmatpush2.msra.mxu0 0.0
    %1191 = vmatprep.subr.mxu0 0.0
    %1192 = vmatpush2.msra.mxu0 0.0
    %1193 = vmatprep.subr.mxu0 0.0
    %1194 = vmatpush2.msra.mxu0 0.0
    %1195 = vmatprep.subr.mxu0 0.0
    %1196 = vmatpush2.msra.mxu0 0.0
    %1197 = vmatprep.subr.mxu0 0.0
    %1198 = vmatpush2.msra.mxu0 0.0
    %1199 = vmatprep.subr.mxu0 0.0
    %1200 = vmatpush2.msra.mxu0 0.0
    %1201 = vmatprep.subr.mxu0 0.0
    %1202 = vmatpush2.msra.mxu0 0.0
    %1203 = vmatprep.subr.mxu0 0.0
    %1204 = vmatpush2.msra.mxu0 0.0
    %1205 = vmatprep.subr.mxu0 0.0
    %1206 = vmatpush2.msra.mxu0 0.0
    %1207 = vmatprep.subr.mxu0 0.0
    %1208 = vmatpush2.msra.mxu0 0.0
    %1209 = vmatprep.subr.mxu0 0.0
    %1210 = vmatpush2.msra.mxu0 0.0
    %1211 = vmatprep.mubr.f32.mxu0 0.0
    %1212 = vmatmul.mubr.f32.gmra.mxu0 %v1142
    %v1213 = vpop.f32.mrf.mxu0
    %v1214 = vadd.f32 0.0, %v1213
    %v1215 = vpop.f32.mrf.mxu0
    %1216 = vdwg.mxu0
    %v1218 = vsel %vm707, %v1132, 0
    %v1221 = vsel %vm711, %v972, 0
    %1223 = vmatprep.subr.mxu0 0.0
    %1224 = vmatpush1.msra.mxu0 0.0
    %1225 = vmatprep.subr.mxu0 0.0
    %1226 = vmatpush1.msra.mxu0 0.0
    %1227 = vmatprep.subr.mxu0 0.0
    %1228 = vmatpush1.msra.mxu0 0.0
    %1229 = vmatprep.subr.mxu0 0.0
    %1230 = vmatpush1.msra.mxu0 0.0
    %1231 = vmatprep.subr.mxu0 0.0
    %1232 = vmatpush1.msra.mxu0 0.0
    %1233 = vmatprep.subr.mxu0 0.0
    %1234 = vmatpush1.msra.mxu0 0.0
    %1235 = vmatprep.subr.mxu0 0.0
    %1236 = vmatpush1.msra.mxu0 0.0
    %1237 = vmatprep.subr.mxu0 0.0
    %1238 = vmatpush1.msra.mxu0 0.0
    %1239 = vmatprep.subr.mxu0 0.0
    %1240 = vmatpush1.msra.mxu0 0.0
    %1241 = vmatprep.subr.mxu0 0.0
    %1242 = vmatpush1.msra.mxu0 0.0
    %1243 = vmatprep.subr.mxu0 0.0
    %1244 = vmatpush1.msra.mxu0 0.0
    %1245 = vmatprep.subr.mxu0 0.0
    %1246 = vmatpush1.msra.mxu0 0.0
    %1247 = vmatprep.subr.mxu0 0.0
    %1248 = vmatpush1.msra.mxu0 0.0
    %1249 = vmatprep.subr.mxu0 0.0
    %1250 = vmatpush1.msra.mxu0 0.0
    %1251 = vmatprep.subr.mxu0 0.0
    %1252 = vmatpush1.msra.mxu0 0.0
    %1253 = vmatprep.subr.mxu0 0.0
    %1254 = vmatpush1.msra.mxu0 %v1221
    %1255 = vmatprep.subr.mxu0 0.0
    %1256 = vmatpush2.msra.mxu0 0.0
    %1257 = vmatprep.subr.mxu0 0.0
    %1258 = vmatpush2.msra.mxu0 0.0
    %1259 = vmatprep.subr.mxu0 0.0
    %1260 = vmatpush2.msra.mxu0 0.0
    %1261 = vmatprep.subr.mxu0 0.0
    %1262 = vmatpush2.msra.mxu0 0.0
    %1263 = vmatprep.subr.mxu0 0.0
    %1264 = vmatpush2.msra.mxu0 0.0
    %1265 = vmatprep.subr.mxu0 0.0
    %1266 = vmatpush2.msra.mxu0 0.0
    %1267 = vmatprep.subr.mxu0 0.0
    %1268 = vmatpush2.msra.mxu0 0.0
    %1269 = vmatprep.subr.mxu0 0.0
    %1270 = vmatpush2.msra.mxu0 0.0
    %1271 = vmatprep.subr.mxu0 0.0
    %1272 = vmatpush2.msra.mxu0 0.0
    %1273 = vmatprep.subr.mxu0 0.0
    %1274 = vmatpush2.msra.mxu0 0.0
    %1275 = vmatprep.subr.mxu0 0.0
    %1276 = vmatpush2.msra.mxu0 0.0
    %1277 = vmatprep.subr.mxu0 0.0
    %1278 = vmatpush2.msra.mxu0 0.0
    %1279 = vmatprep.subr.mxu0 0.0
    %1280 = vmatpush2.msra.mxu0 0.0
    %1281 = vmatprep.subr.mxu0 0.0
    %1282 = vmatpush2.msra.mxu0 0.0
    %1283 = vmatprep.subr.mxu0 0.0
    %1284 = vmatpush2.msra.mxu0 0.0
    %1285 = vmatprep.subr.mxu0 0.0
    %1286 = vmatpush2.msra.mxu0 0.0
    %1287 = vmatprep.mubr.f32.mxu0 0.0
    %1288 = vmatmul.mubr.f32.gmra.mxu0 %v1218
    %v1289 = vpop.f32.mrf.mxu0
    %v1290 = vadd.f32 %v1214, %v1289
    %v1291 = vpop.f32.mrf.mxu0
    %1292 = vdwg.mxu0
    %v1293 = vmul.f32 %v1290, 100.0
    %1294 = vst.msk [vmem:[#allocation5] sm:$0xff] %vm707, %v1293
    %v1295 = vld [vmem:[%s5] sm:$0x3]
    %v1296 = vmul.f32 %v523, %v1295
    %vm1297 = vcmask 9216
    %v1298 = vsel %vm1297, %v1296, 0.0
    %1299 = vadd.xlane.f32.xlu0 %v1298
    %v1300 = vpop.xlane.xlu0 %1299
    %v1301 = vmul.f32 %v1300, 100.0
    %vm1302 = vcmask 1024
    %1303 = vst.msk [vmem:[%s19] sm:$0x3] %vm1302, %v1301
    %1305 = vrot.lane.b32.xlu0 %v610, 1
    %v1306 = vpop.permute.xlu0 %1305
    %vm1308 = vcmask 9224
    %1309 = vst.msk [vmem:[%s19] sm:$0x3] %vm1308, %v1306
    // Predicated region
    $region78: #{frag_envelope_ql_forward.23} parent=1 // pred_check
      _
    $region79: #{frag_envelope_ql_forward.23} parent=1 // pred_check_branch
      %1311 = sbr.rel (0) target = $region81
    $region80: #{frag_envelope_ql_forward.23} parent=1 // pred_region
      _
    $region81: #{frag_envelope_ql_forward.23} parent=1 // pred_fallthru
      _
    // Predicated region
    $region82: #{frag_envelope_ql_forward.23} parent=1 // pred_check
      _
    $region83: #{frag_envelope_ql_forward.23} parent=1 // pred_check_branch
      %1313 = sbr.rel (0) target = $region85
    $region84: #{frag_envelope_ql_forward.23} parent=1 // pred_region
      %s1315 = ssub.s32 128, 128
      %1316 = vsyncadd [#allocation4], %s1315
      %s1318 = sshll.u32 [#allocation3], 4
      %s1319 = int_to_ptr.vmem [resolvable:$true] %s1318
      %1321 = dma.vmem_to_hbm [thread:$0]  %s1319, 128, %s20, [#allocation4]
    $region85: #{frag_envelope_ql_forward.23} parent=1 // pred_fallthru
      _
    // Predicated region
    $region86: #{frag_envelope_ql_forward.23} parent=1 // pred_check
      _
    $region87: #{frag_envelope_ql_forward.23} parent=1 // pred_check_branch
      %1323 = sbr.rel (0) target = $region89
    $region88: #{frag_envelope_ql_forward.23} parent=1 // pred_region
      %s1325 = ssub.s32 128, 128
      %1326 = vsyncadd [#allocation6], %s1325
      %s1328 = sshll.u32 [#allocation5], 4
      %s1329 = int_to_ptr.vmem [resolvable:$true] %s1328
      %1331 = dma.vmem_to_hbm [thread:$0]  %s1329, 128, %s21, [#allocation6]
    $region89: #{frag_envelope_ql_forward.23} parent=1 // pred_fallthru
      _
    // Predicated region
    $region90: #{frag_envelope_ql_forward.23} parent=1 // pred_check
      _
    $region91: #{frag_envelope_ql_forward.23} parent=1 // pred_check_branch
      %1333 = sbr.rel (0) target = $region93
    $region92: #{frag_envelope_ql_forward.23} parent=1 // pred_region
      _
    $region93: #{frag_envelope_ql_forward.23} parent=1 // pred_fallthru
      _
    // Predicated region
    $region94: #{frag_envelope_ql_forward.23} parent=1 // pred_check
      _
    $region95: #{frag_envelope_ql_forward.23} parent=1 // pred_check_branch
      %1335 = sbr.rel (0) target = $region97
    $region96: #{frag_envelope_ql_forward.23} parent=1 // pred_region
      %1336 = dma.done [#allocation4], 128
    $region97: #{frag_envelope_ql_forward.23} parent=1 // pred_fallthru
      _
    // Predicated region
    $region98: #{frag_envelope_ql_forward.23} parent=1 // pred_check
      _
    $region99: #{frag_envelope_ql_forward.23} parent=1 // pred_check_branch
      %1338 = sbr.rel (0) target = $region101
    $region100: #{frag_envelope_ql_forward.23} parent=1 // pred_region
      %1339 = dma.done [#allocation6], 128
    $region101: #{frag_envelope_ql_forward.23} parent=1 // pred_fallthru
      _
    %1340 = vsyncpa [#allocation4], 1
    %1341 = vsyncpa [#allocation6], 1

</llo_original>
